<compile_context>
chip_gen: v7x
topology: tpu7x:2x2x1
jax: 0.10.0
libtpu: 0.0.40
codegen_flags: <defaults>
</compile_context>

<pallas_src>
import jax
import jax.numpy as jnp
from jax.experimental import pallas as pl
from jax.experimental.pallas import tpu as pltpu


TAGS_PAD = 128  # lane-dense padded tagset width for the output store

_VMEM = pl.BlockSpec(memory_space=pltpu.MemorySpace.VMEM)


# ----------------------------------------------------------------------------
# Fused Pallas kernel (all GRU layers + hidden2tag)
# ----------------------------------------------------------------------------
def make_birnn_kernel(num_layers, T, Bp, Hd):
    """Builds the fused kernel for fixed (num_layers, T, Bp, Hd).  Bp % 8 == 0.

    Kernel ref layout (time-major flat rows: row = t*Bp + b):
      inputs : x_flat    (T*Bp, E_in) f32
               mask_comb (T*Bp, 2*Hd) f32  -- at row block i: cols[:Hd] = valid
                         mask for fwd time i, cols[Hd:] = valid mask for bwd
                         time T-1-i (both already broadcast over Hd lanes)
               per layer l: wi (in_dim, 6*Hd), bi (1, 6*Hd)   [gate-major cols]
                            wh (2*Hd, 6*Hd) block-diag fused hidden weights
                            bhn (1, 2*Hd)   hidden bias of the n gate only
               w_tag (2*Hd, TAGS_PAD), b_tag (1, TAGS_PAD)
      output : logits_flat (T*Bp, TAGS_PAD)
      scratch: act (T*Bp, 2*Hd) f32 inter-layer activation (stays in VMEM)
    """
    H = 2 * Hd
    n_in = 2 + 4 * num_layers + 2

    def kernel(*refs):
        x_ref = refs[0]
        mask_ref = refs[1]
        w_tag_ref = refs[n_in - 2]
        b_tag_ref = refs[n_in - 1]
        o_ref = refs[n_in]
        act_ref = refs[n_in + 1]

        # Gate-major combined-layout column selectors, built once (cheap VPU
        # work, completely off the recurrence critical path).
        col6 = jax.lax.broadcasted_iota(jnp.int32, (Bp, 3 * H), 1)
        fwd6 = (col6 % H) < Hd            # True on fwd columns of each gate
        col2 = jax.lax.broadcasted_iota(jnp.int32, (Bp, H), 1)
        fwd2 = col2 < Hd                  # True on the fwd half of [h_f|h_b]

        mask = mask_ref[...]              # (T*Bp, H), loaded once
        x_in = x_ref[...]                 # layer-0 input

        for layer in range(num_layers):
            wi_ref, bi_ref, wh_ref, bhn_ref = refs[2 + 4 * layer: 6 + 4 * layer]

            # Hoisted input projection: one wide MXU matmul for every timestep
            # and both directions.  bh_r / bh_z are already folded into bi.
            gx = jnp.dot(x_in, wi_ref[...],
                         preferred_element_type=jnp.float32) + bi_ref[...]

            wh = wh_ref[...]                                   # (H, 3H) block-diag
            bhn = jnp.broadcast_to(bhn_ref[...], (Bp, H))      # hoisted broadcast

            h = jnp.zeros((Bp, H), jnp.float32)                # [h_f | h_b]
            ys = [None] * T

            # Fully-unrolled time loop (T is small & static); forward step i
            # and backward step T-1-i advance together with ONE recurrent dot.
            for i in range(T):
                rf = slice(i * Bp, (i + 1) * Bp)
                rb = slice((T - 1 - i) * Bp, (T - i) * Bp)

                gh = jnp.dot(h, wh, preferred_element_type=jnp.float32)
                # fwd gate columns come from time i, bwd from time T-1-i.
                g = jnp.where(fwd6, gx[rf], gx[rb])            # (Bp, 3H)

                rz = jax.nn.sigmoid(g[:, :2 * H] + gh[:, :2 * H])
                r = rz[:, :H]
                z = rz[:, H:]
                # bh_n is added BEFORE the r-multiply (PyTorch GRU).
                n = jnp.tanh(g[:, 2 * H:] + r * (gh[:, 2 * H:] + bhn))
                h_new = n + z * (h - n)                        # (1-z)*n + z*h

                m = mask[rf]                                   # (Bp, H)
                ys[i] = m * h_new                              # padded rows emit 0
                h = jnp.where(m > 0.0, h_new, h)               # freeze past length

            # One aligned, full-width row-block store per timestep, after the
            # loop (off the serial chain): row block t = [y_f(t) | y_b(t)].
            for t in range(T):
                act_ref[t * Bp:(t + 1) * Bp, :] = jnp.where(
                    fwd2, ys[t], ys[T - 1 - t])
            x_in = act_ref[...]
            # TODO(synk): inter-layer dropout is training-only; eval forward omits it.

        # hidden2tag on the whole slab: one lane-dense (T*Bp, H) @ (H, 128)
        # matmul and a single unmasked output store.
        logits = jnp.dot(x_in, w_tag_ref[...],
                         preferred_element_type=jnp.float32) + b_tag_ref[...]
        o_ref[...] = logits

    return kernel


# ----------------------------------------------------------------------------
# Parameter packing for the kernel (gate-major fused / block-diag layouts)
# ----------------------------------------------------------------------------
def _gate_major(a_f, a_b, Hd):
    """Interleave per-direction [r|z|n] blocks into [r_f|r_b|z_f|z_b|n_f|n_b]."""
    return jnp.concatenate(
        [a_f[..., 0:Hd], a_b[..., 0:Hd],
         a_f[..., Hd:2 * Hd], a_b[..., Hd:2 * Hd],
         a_f[..., 2 * Hd:3 * Hd], a_b[..., 2 * Hd:3 * Hd]], axis=-1)


def pack_kernel_params(params, tags_pad=TAGS_PAD):
    Hd = params["gru_layers"][0]["wh_f"].shape[0]
    H = 2 * Hd
    packed = []
    for lp in params["gru_layers"]:
        wi = _gate_major(lp["wi_f"], lp["wi_b"], Hd)                  # (in, 6Hd)
        # Fold b_hr / b_hz into the input-side bias (exact); b_hn must stay
        # with gh because it sits under the r-multiply.
        zero_n = jnp.zeros((Hd,), jnp.float32)
        bi_f = lp["bi_f"] + jnp.concatenate([lp["bh_f"][:2 * Hd], zero_n])
        bi_b = lp["bi_b"] + jnp.concatenate([lp["bh_b"][:2 * Hd], zero_n])
        bi = _gate_major(bi_f, bi_b, Hd)[None, :]                     # (1, 6Hd)
        # Block-diagonal fused hidden weight: rows[:Hd]=h_f -> fwd gate cols,
        # rows[Hd:]=h_b -> bwd gate cols.
        top = _gate_major(lp["wh_f"], jnp.zeros_like(lp["wh_f"]), Hd)
        bot = _gate_major(jnp.zeros_like(lp["wh_b"]), lp["wh_b"], Hd)
        wh = jnp.concatenate([top, bot], axis=0)                      # (2Hd, 6Hd)
        bhn = jnp.concatenate([lp["bh_f"][2 * Hd:],
                               lp["bh_b"][2 * Hd:]])[None, :]         # (1, 2Hd)
        packed.append(dict(wi=wi, bi=bi, wh=wh, bhn=bhn))

    tags = params["w_tag"].shape[1]
    w_tag_pad = jnp.zeros((H, tags_pad), jnp.float32).at[:, :tags].set(params["w_tag"])
    b_tag_pad = jnp.zeros((1, tags_pad), jnp.float32).at[0, :tags].set(params["b_tag"])
    return packed, w_tag_pad, b_tag_pad


# ----------------------------------------------------------------------------
# Wrapper
# ----------------------------------------------------------------------------
def birnn_crf_forward(token_ids, lengths, params):
    """Returns logits: (B, T, tagset_size) -- the (logits,) output of the module."""
    B, T = token_ids.shape
    E = params["emb"].shape[1]
    num_layers = len(params["gru_layers"])
    Hd = params["gru_layers"][0]["wh_f"].shape[0]
    H = 2 * Hd
    tags = params["w_tag"].shape[1]

    packed, w_tag_pad, b_tag_pad = pack_kernel_params(params)
    tags_pad = w_tag_pad.shape[1]

    # Pad batch to the f32 sublane tile (8) so every per-step row block in the
    # kernel is sublane-aligned; padded entries have length 0 (mask = 0).
    Bp = max(8, ((B + 7) // 8) * 8)

    # Embedding lookup + time-major flattening (row = t*Bp + b).
    emb = jnp.take(params["emb"], token_ids, axis=0).astype(jnp.float32)   # (B,T,E)
    x = jnp.transpose(emb, (1, 0, 2))                                      # (T,B,E)
    x = jnp.pad(x, ((0, 0), (0, Bp - B), (0, 0)))                          # (T,Bp,E)
    x_flat = x.reshape(T * Bp, E)

    # Combined validity mask, precomputed once: row block i carries the fwd
    # mask for time i (cols :Hd) and the bwd mask for time T-1-i (cols Hd:).
    len_p = jnp.pad(lengths.astype(jnp.int32), (0, Bp - B))
    mask_tb = (jnp.arange(T, dtype=jnp.int32)[:, None]
               < len_p[None, :]).astype(jnp.float32)                       # (T,Bp)
    m_f = jnp.repeat(mask_tb[:, :, None], Hd, axis=2)
    m_b = jnp.repeat(mask_tb[::-1, :, None], Hd, axis=2)
    mask_comb = jnp.concatenate([m_f, m_b], axis=2).reshape(T * Bp, H)

    args = [x_flat, mask_comb]
    for lp in packed:
        args += [lp["wi"], lp["bi"], lp["wh"], lp["bhn"]]
    args += [w_tag_pad, b_tag_pad]

    kernel = make_birnn_kernel(num_layers, T, Bp, Hd)
    logits_flat = pl.pallas_call(
        kernel,
        out_shape=jax.ShapeDtypeStruct((T * Bp, tags_pad), jnp.float32),
        in_specs=[_VMEM] * len(args),
        out_specs=_VMEM,
        scratch_shapes=[pltpu.VMEM((T * Bp, H), jnp.float32)],
    )(*args)

    logits = jnp.transpose(logits_flat.reshape(T, Bp, tags_pad), (1, 0, 2))
    return logits[:B, :, :tags]


# ----------------------------------------------------------------------------
# Pure-JAX reference (canonical per-direction GRU; for correctness check)
# ----------------------------------------------------------------------------
def birnn_crf_reference(token_ids, lengths, params):
    B, T = token_ids.shape
    Hd = params["gru_layers"][0]["wh_f"].shape[0]
    x = jnp.take(params["emb"], token_ids, axis=0).astype(jnp.float32)      # (B,T,E)
    mask = (jnp.arange(T)[None, :] < lengths[:, None]).astype(jnp.float32)  # (B,T)

    def run_dir(x_lay, wi, bi, wh, bh, reverse):
        Bv, Tv, in_dim = x_lay.shape
        gx = (x_lay.reshape(Bv * Tv, in_dim) @ wi + bi).reshape(Bv, Tv, 3 * Hd)
        h = jnp.zeros((Bv, Hd), jnp.float32)
        ys = [None] * Tv
        order = range(Tv - 1, -1, -1) if reverse else range(Tv)
        for t in order:
            g = gx[:, t, :]
            gh = h @ wh + bh
            r = jax.nn.sigmoid(g[:, :Hd] + gh[:, :Hd])
            z = jax.nn.sigmoid(g[:, Hd:2 * Hd] + gh[:, Hd:2 * Hd])
            n = jnp.tanh(g[:, 2 * Hd:] + r * gh[:, 2 * Hd:])
            h_new = (1.0 - z) * n + z * h
            m = mask[:, t][:, None]
            h = m * h_new + (1.0 - m) * h
            ys[t] = m * h
        return jnp.stack(ys, axis=1)                   # (B, T, Hd)

    for lp in params["gru_layers"]:
        yf = run_dir(x, lp["wi_f"], lp["bi_f"], lp["wh_f"], lp["bh_f"], False)
        yb = run_dir(x, lp["wi_b"], lp["bi_b"], lp["wh_b"], lp["bh_b"], True)
        x = jnp.concatenate([yf, yb], axis=-1)
    H = x.shape[-1]
    logits = x.reshape(B * T, H) @ params["w_tag"] + params["b_tag"]
    return logits.reshape(B, T, -1)


# ----------------------------------------------------------------------------
# Deterministic parameter construction (canonical per-direction layout)
# ----------------------------------------------------------------------------
def make_params(key, vocab, E, H, num_layers, tagset, pad_idx):
    Hd = H // 2
    k_emb, k_gru, k_lin = jax.random.split(key, 3)

    emb = 0.1 * jax.random.normal(k_emb, (vocab, E), jnp.float32)
    emb = emb.at[pad_idx].set(0.0)                 # nn.Embedding padding_idx row

    layers = []
    kk = k_gru
    s = 1.0 / jnp.sqrt(Hd)
    for layer in range(num_layers):
        in_dim = E if layer == 0 else H
        kk, *ks = jax.random.split(kk, 9)
        u = lambda k, shape: jax.random.uniform(k, shape, jnp.float32, -s, s)
        layers.append(dict(
            # per-direction weights, gate order [r|z|n] (PyTorch GRU, transposed)
            wi_f=u(ks[0], (in_dim, 3 * Hd)), bi_f=u(ks[1], (3 * Hd,)),
            wh_f=u(ks[2], (Hd, 3 * Hd)),     bh_f=u(ks[3], (3 * Hd,)),
            wi_b=u(ks[4], (in_dim, 3 * Hd)), bi_b=u(ks[5], (3 * Hd,)),
            wh_b=u(ks[6], (Hd, 3 * Hd)),     bh_b=u(ks[7], (3 * Hd,)),
        ))

    k1, k2 = jax.random.split(k_lin)
    s2 = 1.0 / jnp.sqrt(H)
    w_tag = jax.random.uniform(k1, (H, tagset), jnp.float32, -s2, s2)   # Linear.weight.T
    b_tag = jax.random.uniform(k2, (tagset,), jnp.float32, -s2, s2)
    return dict(emb=emb, gru_layers=layers, w_tag=w_tag, b_tag=b_tag)


# ----------------------------------------------------------------------------
if __name__ == "__main__":
    B, T = 2, 8
    VOCAB, E, H = 50, 32, 32          # embedded_size=32, hidden_size=32
    NUM_LAYERS = 2
    TAGSET = 5                        # len(tag_to_ix)
    PAD_IDX = 0

    key = jax.random.PRNGKey(0)
    k_par, k_ids = jax.random.split(key)
    params = make_params(k_par, VOCAB, E, H, NUM_LAYERS, TAGSET, PAD_IDX)

    lengths = jnp.array([8, 5], dtype=jnp.int32)
    ids = jax.random.randint(k_ids, (B, T), 1, VOCAB, dtype=jnp.int32)
    pos = jnp.arange(T, dtype=jnp.int32)[None, :]
    token_ids = jnp.where(pos < lengths[:, None], ids, PAD_IDX)       # pad tail

    logits = birnn_crf_forward(token_ids, lengths, params)
    jax.block_until_ready(logits)

    ref = birnn_crf_reference(token_ids, lengths, params)
    assert logits.shape == (B, T, TAGSET), logits.shape
    err = float(jnp.max(jnp.abs(logits - ref)))
    assert err < 1e-4, err
    print("KERNEL_OK")
</pallas_src>

<mosaic_0001>
module attributes {stable_mosaic.version = 11 : i64} {
  func.func @kernel(%arg0: memref<64x32xf32, #tpu.memory_space<vmem>>, %arg1: memref<64x32xf32, #tpu.memory_space<vmem>>, %arg2: memref<32x96xf32, #tpu.memory_space<vmem>>, %arg3: memref<1x96xf32, #tpu.memory_space<vmem>>, %arg4: memref<32x96xf32, #tpu.memory_space<vmem>>, %arg5: memref<1x32xf32, #tpu.memory_space<vmem>>, %arg6: memref<32x96xf32, #tpu.memory_space<vmem>>, %arg7: memref<1x96xf32, #tpu.memory_space<vmem>>, %arg8: memref<32x96xf32, #tpu.memory_space<vmem>>, %arg9: memref<1x32xf32, #tpu.memory_space<vmem>>, %arg10: memref<32x128xf32, #tpu.memory_space<vmem>>, %arg11: memref<1x128xf32, #tpu.memory_space<vmem>>, %arg12: memref<64x128xf32, #tpu.memory_space<vmem>>, %arg13: memref<64x32xf32, #tpu.memory_space<vmem>>) attributes {dimension_semantics = [], scalar_prefetch = 0 : i64, scratch_operands = 1 : i64, tpu.core_type = #tpu.core_type<tc>} {
    %0 = tpu.iota {dimensions = array<i32: 1>} : vector<8x96xi32>
    %c32_i32 = arith.constant 32 : i32
    %c0_i32 = arith.constant 0 : i32
    %1 = arith.cmpi eq, %c32_i32, %c0_i32 : i32
    %c1_i32 = arith.constant 1 : i32
    %2 = arith.select %1, %c1_i32, %c32_i32 : i32
    %3 = vector.broadcast %2 : i32 to vector<8x96xi32>
    %4 = arith.remsi %0, %3 : vector<8x96xi32>
    %c0_i32_0 = arith.constant 0 : i32
    %5 = vector.broadcast %c0_i32_0 : i32 to vector<8x96xi32>
    %6 = arith.cmpi ne, %4, %5 : vector<8x96xi32>
    %c0_i32_1 = arith.constant 0 : i32
    %7 = vector.broadcast %c0_i32_1 : i32 to vector<8x96xi32>
    %8 = arith.cmpi slt, %4, %7 : vector<8x96xi32>
    %c0_i32_2 = arith.constant 0 : i32
    %9 = arith.cmpi slt, %2, %c0_i32_2 : i32
    %10 = vector.broadcast %9 : i1 to vector<8x96xi1>
    %11 = vector.broadcast %10 : vector<8x96xi1> to vector<8x96xi1>
    %12 = arith.xori %8, %11 : vector<8x96xi1>
    %13 = arith.andi %12, %6 : vector<8x96xi1>
    %14 = vector.broadcast %2 : i32 to vector<8x96xi32>
    %15 = arith.addi %4, %14 : vector<8x96xi32>
    %16 = arith.select %13, %15, %4 : vector<8x96xi1>, vector<8x96xi32>
    %c16_i32 = arith.constant 16 : i32
    %17 = vector.broadcast %c16_i32 : i32 to vector<8x96xi32>
    %18 = arith.cmpi slt, %16, %17 : vector<8x96xi32>
    %19 = tpu.iota {dimensions = array<i32: 1>} : vector<8x32xi32>
    %c16_i32_3 = arith.constant 16 : i32
    %20 = vector.broadcast %c16_i32_3 : i32 to vector<8x32xi32>
    %21 = arith.cmpi slt, %19, %20 : vector<8x32xi32>
    %c0 = arith.constant 0 : index
    %c0_4 = arith.constant 0 : index
    %22 = vector.load %arg1[%c0, %c0_4] : memref<64x32xf32, #tpu.memory_space<vmem>>, vector<64x32xf32>
    %c0_5 = arith.constant 0 : index
    %c0_6 = arith.constant 0 : index
    %23 = vector.load %arg0[%c0_5, %c0_6] : memref<64x32xf32, #tpu.memory_space<vmem>>, vector<64x32xf32>
    %c0_7 = arith.constant 0 : index
    %c0_8 = arith.constant 0 : index
    %24 = vector.load %arg2[%c0_7, %c0_8] : memref<32x96xf32, #tpu.memory_space<vmem>>, vector<32x96xf32>
    %cst = arith.constant dense<0.000000e+00> : vector<64x96xf32>
    %25 = tpu.matmul %23, %24, %cst {dimension_numbers = #tpu.dot_dimension_numbers<[1], [0], [0], [1], [0, 0, 1, 1], [], []>} : vector<64x32xf32>, vector<32x96xf32>, vector<64x96xf32> -> vector<64x96xf32>
    %c0_9 = arith.constant 0 : index
    %c0_10 = arith.constant 0 : index
    %26 = vector.load %arg3[%c0_9, %c0_10] : memref<1x96xf32, #tpu.memory_space<vmem>>, vector<1x96xf32>
    %27 = vector.broadcast %26 : vector<1x96xf32> to vector<64x96xf32>
    %28 = arith.addf %25, %27 : vector<64x96xf32>
    %c0_11 = arith.constant 0 : index
    %c0_12 = arith.constant 0 : index
    %29 = vector.load %arg4[%c0_11, %c0_12] : memref<32x96xf32, #tpu.memory_space<vmem>>, vector<32x96xf32>
    %c0_13 = arith.constant 0 : index
    %c0_14 = arith.constant 0 : index
    %30 = vector.load %arg5[%c0_13, %c0_14] : memref<1x32xf32, #tpu.memory_space<vmem>>, vector<1x32xf32>
    %31 = vector.shape_cast %30 : vector<1x32xf32> to vector<1x32xf32>
    %32 = vector.broadcast %31 : vector<1x32xf32> to vector<8x32xf32>
    %cst_15 = arith.constant 0.000000e+00 : f32
    %33 = vector.broadcast %cst_15 : f32 to vector<8x32xf32>
    %cst_16 = arith.constant dense<0.000000e+00> : vector<8x96xf32>
    %34 = tpu.matmul %33, %29, %cst_16 {dimension_numbers = #tpu.dot_dimension_numbers<[1], [0], [0], [1], [0, 0, 1, 1], [], []>} : vector<8x32xf32>, vector<32x96xf32>, vector<8x96xf32> -> vector<8x96xf32>
    %35 = vector.extract_strided_slice %28 {offsets = [0, 0], sizes = [8, 96], strides = [1, 1]} : vector<64x96xf32> to vector<8x96xf32>
    %36 = vector.extract_strided_slice %28 {offsets = [56, 0], sizes = [8, 96], strides = [1, 1]} : vector<64x96xf32> to vector<8x96xf32>
    %37 = arith.select %18, %35, %36 : vector<8x96xi1>, vector<8x96xf32>
    %38 = vector.extract_strided_slice %37 {offsets = [0, 0], sizes = [8, 64], strides = [1, 1]} : vector<8x96xf32> to vector<8x64xf32>
    %39 = vector.extract_strided_slice %34 {offsets = [0, 0], sizes = [8, 64], strides = [1, 1]} : vector<8x96xf32> to vector<8x64xf32>
    %40 = arith.addf %38, %39 : vector<8x64xf32>
    %41 = arith.negf %40 : vector<8x64xf32>
    %42 = math.exp %41 : vector<8x64xf32>
    %cst_17 = arith.constant 1.000000e+00 : f32
    %43 = vector.broadcast %cst_17 : f32 to vector<8x64xf32>
    %44 = arith.addf %43, %42 : vector<8x64xf32>
    %45 = arith.divf %43, %44 : vector<8x64xf32>
    %46 = vector.extract_strided_slice %45 {offsets = [0, 0], sizes = [8, 32], strides = [1, 1]} : vector<8x64xf32> to vector<8x32xf32>
    %47 = vector.extract_strided_slice %45 {offsets = [0, 32], sizes = [8, 32], strides = [1, 1]} : vector<8x64xf32> to vector<8x32xf32>
    %48 = vector.extract_strided_slice %37 {offsets = [0, 64], sizes = [8, 32], strides = [1, 1]} : vector<8x96xf32> to vector<8x32xf32>
    %49 = vector.extract_strided_slice %34 {offsets = [0, 64], sizes = [8, 32], strides = [1, 1]} : vector<8x96xf32> to vector<8x32xf32>
    %50 = arith.addf %49, %32 : vector<8x32xf32>
    %51 = arith.mulf %46, %50 : vector<8x32xf32>
    %52 = arith.addf %48, %51 : vector<8x32xf32>
    %53 = math.tanh %52 : vector<8x32xf32>
    %54 = arith.subf %33, %53 : vector<8x32xf32>
    %55 = arith.mulf %47, %54 : vector<8x32xf32>
    %56 = arith.addf %53, %55 : vector<8x32xf32>
    %57 = vector.extract_strided_slice %22 {offsets = [0, 0], sizes = [8, 32], strides = [1, 1]} : vector<64x32xf32> to vector<8x32xf32>
    %58 = arith.mulf %57, %56 : vector<8x32xf32>
    %cst_18 = arith.constant 0.000000e+00 : f32
    %59 = vector.broadcast %cst_18 : f32 to vector<8x32xf32>
    %60 = arith.cmpf ogt, %57, %59 : vector<8x32xf32>
    %61 = arith.select %60, %56, %33 : vector<8x32xi1>, vector<8x32xf32>
    %cst_19 = arith.constant dense<0.000000e+00> : vector<8x96xf32>
    %62 = tpu.matmul %61, %29, %cst_19 {dimension_numbers = #tpu.dot_dimension_numbers<[1], [0], [0], [1], [0, 0, 1, 1], [], []>} : vector<8x32xf32>, vector<32x96xf32>, vector<8x96xf32> -> vector<8x96xf32>
    %63 = vector.extract_strided_slice %28 {offsets = [8, 0], sizes = [8, 96], strides = [1, 1]} : vector<64x96xf32> to vector<8x96xf32>
    %64 = vector.extract_strided_slice %28 {offsets = [48, 0], sizes = [8, 96], strides = [1, 1]} : vector<64x96xf32> to vector<8x96xf32>
    %65 = arith.select %18, %63, %64 : vector<8x96xi1>, vector<8x96xf32>
    %66 = vector.extract_strided_slice %65 {offsets = [0, 0], sizes = [8, 64], strides = [1, 1]} : vector<8x96xf32> to vector<8x64xf32>
    %67 = vector.extract_strided_slice %62 {offsets = [0, 0], sizes = [8, 64], strides = [1, 1]} : vector<8x96xf32> to vector<8x64xf32>
    %68 = arith.addf %66, %67 : vector<8x64xf32>
    %69 = arith.negf %68 : vector<8x64xf32>
    %70 = math.exp %69 : vector<8x64xf32>
    %cst_20 = arith.constant 1.000000e+00 : f32
    %71 = vector.broadcast %cst_20 : f32 to vector<8x64xf32>
    %72 = arith.addf %71, %70 : vector<8x64xf32>
    %73 = arith.divf %71, %72 : vector<8x64xf32>
    %74 = vector.extract_strided_slice %73 {offsets = [0, 0], sizes = [8, 32], strides = [1, 1]} : vector<8x64xf32> to vector<8x32xf32>
    %75 = vector.extract_strided_slice %73 {offsets = [0, 32], sizes = [8, 32], strides = [1, 1]} : vector<8x64xf32> to vector<8x32xf32>
    %76 = vector.extract_strided_slice %65 {offsets = [0, 64], sizes = [8, 32], strides = [1, 1]} : vector<8x96xf32> to vector<8x32xf32>
    %77 = vector.extract_strided_slice %62 {offsets = [0, 64], sizes = [8, 32], strides = [1, 1]} : vector<8x96xf32> to vector<8x32xf32>
    %78 = arith.addf %77, %32 : vector<8x32xf32>
    %79 = arith.mulf %74, %78 : vector<8x32xf32>
    %80 = arith.addf %76, %79 : vector<8x32xf32>
    %81 = math.tanh %80 : vector<8x32xf32>
    %82 = arith.subf %61, %81 : vector<8x32xf32>
    %83 = arith.mulf %75, %82 : vector<8x32xf32>
    %84 = arith.addf %81, %83 : vector<8x32xf32>
    %85 = vector.extract_strided_slice %22 {offsets = [8, 0], sizes = [8, 32], strides = [1, 1]} : vector<64x32xf32> to vector<8x32xf32>
    %86 = arith.mulf %85, %84 : vector<8x32xf32>
    %cst_21 = arith.constant 0.000000e+00 : f32
    %87 = vector.broadcast %cst_21 : f32 to vector<8x32xf32>
    %88 = arith.cmpf ogt, %85, %87 : vector<8x32xf32>
    %89 = arith.select %88, %84, %61 : vector<8x32xi1>, vector<8x32xf32>
    %cst_22 = arith.constant dense<0.000000e+00> : vector<8x96xf32>
    %90 = tpu.matmul %89, %29, %cst_22 {dimension_numbers = #tpu.dot_dimension_numbers<[1], [0], [0], [1], [0, 0, 1, 1], [], []>} : vector<8x32xf32>, vector<32x96xf32>, vector<8x96xf32> -> vector<8x96xf32>
    %91 = vector.extract_strided_slice %28 {offsets = [16, 0], sizes = [8, 96], strides = [1, 1]} : vector<64x96xf32> to vector<8x96xf32>
    %92 = vector.extract_strided_slice %28 {offsets = [40, 0], sizes = [8, 96], strides = [1, 1]} : vector<64x96xf32> to vector<8x96xf32>
    %93 = arith.select %18, %91, %92 : vector<8x96xi1>, vector<8x96xf32>
    %94 = vector.extract_strided_slice %93 {offsets = [0, 0], sizes = [8, 64], strides = [1, 1]} : vector<8x96xf32> to vector<8x64xf32>
    %95 = vector.extract_strided_slice %90 {offsets = [0, 0], sizes = [8, 64], strides = [1, 1]} : vector<8x96xf32> to vector<8x64xf32>
    %96 = arith.addf %94, %95 : vector<8x64xf32>
    %97 = arith.negf %96 : vector<8x64xf32>
    %98 = math.exp %97 : vector<8x64xf32>
    %cst_23 = arith.constant 1.000000e+00 : f32
    %99 = vector.broadcast %cst_23 : f32 to vector<8x64xf32>
    %100 = arith.addf %99, %98 : vector<8x64xf32>
    %101 = arith.divf %99, %100 : vector<8x64xf32>
    %102 = vector.extract_strided_slice %101 {offsets = [0, 0], sizes = [8, 32], strides = [1, 1]} : vector<8x64xf32> to vector<8x32xf32>
    %103 = vector.extract_strided_slice %101 {offsets = [0, 32], sizes = [8, 32], strides = [1, 1]} : vector<8x64xf32> to vector<8x32xf32>
    %104 = vector.extract_strided_slice %93 {offsets = [0, 64], sizes = [8, 32], strides = [1, 1]} : vector<8x96xf32> to vector<8x32xf32>
    %105 = vector.extract_strided_slice %90 {offsets = [0, 64], sizes = [8, 32], strides = [1, 1]} : vector<8x96xf32> to vector<8x32xf32>
    %106 = arith.addf %105, %32 : vector<8x32xf32>
    %107 = arith.mulf %102, %106 : vector<8x32xf32>
    %108 = arith.addf %104, %107 : vector<8x32xf32>
    %109 = math.tanh %108 : vector<8x32xf32>
    %110 = arith.subf %89, %109 : vector<8x32xf32>
    %111 = arith.mulf %103, %110 : vector<8x32xf32>
    %112 = arith.addf %109, %111 : vector<8x32xf32>
    %113 = vector.extract_strided_slice %22 {offsets = [16, 0], sizes = [8, 32], strides = [1, 1]} : vector<64x32xf32> to vector<8x32xf32>
    %114 = arith.mulf %113, %112 : vector<8x32xf32>
    %cst_24 = arith.constant 0.000000e+00 : f32
    %115 = vector.broadcast %cst_24 : f32 to vector<8x32xf32>
    %116 = arith.cmpf ogt, %113, %115 : vector<8x32xf32>
    %117 = arith.select %116, %112, %89 : vector<8x32xi1>, vector<8x32xf32>
    %cst_25 = arith.constant dense<0.000000e+00> : vector<8x96xf32>
    %118 = tpu.matmul %117, %29, %cst_25 {dimension_numbers = #tpu.dot_dimension_numbers<[1], [0], [0], [1], [0, 0, 1, 1], [], []>} : vector<8x32xf32>, vector<32x96xf32>, vector<8x96xf32> -> vector<8x96xf32>
    %119 = vector.extract_strided_slice %28 {offsets = [24, 0], sizes = [8, 96], strides = [1, 1]} : vector<64x96xf32> to vector<8x96xf32>
    %120 = vector.extract_strided_slice %28 {offsets = [32, 0], sizes = [8, 96], strides = [1, 1]} : vector<64x96xf32> to vector<8x96xf32>
    %121 = arith.select %18, %119, %120 : vector<8x96xi1>, vector<8x96xf32>
    %122 = vector.extract_strided_slice %121 {offsets = [0, 0], sizes = [8, 64], strides = [1, 1]} : vector<8x96xf32> to vector<8x64xf32>
    %123 = vector.extract_strided_slice %118 {offsets = [0, 0], sizes = [8, 64], strides = [1, 1]} : vector<8x96xf32> to vector<8x64xf32>
    %124 = arith.addf %122, %123 : vector<8x64xf32>
    %125 = arith.negf %124 : vector<8x64xf32>
    %126 = math.exp %125 : vector<8x64xf32>
    %cst_26 = arith.constant 1.000000e+00 : f32
    %127 = vector.broadcast %cst_26 : f32 to vector<8x64xf32>
    %128 = arith.addf %127, %126 : vector<8x64xf32>
    %129 = arith.divf %127, %128 : vector<8x64xf32>
    %130 = vector.extract_strided_slice %129 {offsets = [0, 0], sizes = [8, 32], strides = [1, 1]} : vector<8x64xf32> to vector<8x32xf32>
    %131 = vector.extract_strided_slice %129 {offsets = [0, 32], sizes = [8, 32], strides = [1, 1]} : vector<8x64xf32> to vector<8x32xf32>
    %132 = vector.extract_strided_slice %121 {offsets = [0, 64], sizes = [8, 32], strides = [1, 1]} : vector<8x96xf32> to vector<8x32xf32>
    %133 = vector.extract_strided_slice %118 {offsets = [0, 64], sizes = [8, 32], strides = [1, 1]} : vector<8x96xf32> to vector<8x32xf32>
    %134 = arith.addf %133, %32 : vector<8x32xf32>
    %135 = arith.mulf %130, %134 : vector<8x32xf32>
    %136 = arith.addf %132, %135 : vector<8x32xf32>
    %137 = math.tanh %136 : vector<8x32xf32>
    %138 = arith.subf %117, %137 : vector<8x32xf32>
    %139 = arith.mulf %131, %138 : vector<8x32xf32>
    %140 = arith.addf %137, %139 : vector<8x32xf32>
    %141 = vector.extract_strided_slice %22 {offsets = [24, 0], sizes = [8, 32], strides = [1, 1]} : vector<64x32xf32> to vector<8x32xf32>
    %142 = arith.mulf %141, %140 : vector<8x32xf32>
    %cst_27 = arith.constant 0.000000e+00 : f32
    %143 = vector.broadcast %cst_27 : f32 to vector<8x32xf32>
    %144 = arith.cmpf ogt, %141, %143 : vector<8x32xf32>
    %145 = arith.select %144, %140, %117 : vector<8x32xi1>, vector<8x32xf32>
    %cst_28 = arith.constant dense<0.000000e+00> : vector<8x96xf32>
    %146 = tpu.matmul %145, %29, %cst_28 {dimension_numbers = #tpu.dot_dimension_numbers<[1], [0], [0], [1], [0, 0, 1, 1], [], []>} : vector<8x32xf32>, vector<32x96xf32>, vector<8x96xf32> -> vector<8x96xf32>
    %147 = vector.extract_strided_slice %28 {offsets = [32, 0], sizes = [8, 96], strides = [1, 1]} : vector<64x96xf32> to vector<8x96xf32>
    %148 = vector.extract_strided_slice %28 {offsets = [24, 0], sizes = [8, 96], strides = [1, 1]} : vector<64x96xf32> to vector<8x96xf32>
    %149 = arith.select %18, %147, %148 : vector<8x96xi1>, vector<8x96xf32>
    %150 = vector.extract_strided_slice %149 {offsets = [0, 0], sizes = [8, 64], strides = [1, 1]} : vector<8x96xf32> to vector<8x64xf32>
    %151 = vector.extract_strided_slice %146 {offsets = [0, 0], sizes = [8, 64], strides = [1, 1]} : vector<8x96xf32> to vector<8x64xf32>
    %152 = arith.addf %150, %151 : vector<8x64xf32>
    %153 = arith.negf %152 : vector<8x64xf32>
    %154 = math.exp %153 : vector<8x64xf32>
    %cst_29 = arith.constant 1.000000e+00 : f32
    %155 = vector.broadcast %cst_29 : f32 to vector<8x64xf32>
    %156 = arith.addf %155, %154 : vector<8x64xf32>
    %157 = arith.divf %155, %156 : vector<8x64xf32>
    %158 = vector.extract_strided_slice %157 {offsets = [0, 0], sizes = [8, 32], strides = [1, 1]} : vector<8x64xf32> to vector<8x32xf32>
    %159 = vector.extract_strided_slice %157 {offsets = [0, 32], sizes = [8, 32], strides = [1, 1]} : vector<8x64xf32> to vector<8x32xf32>
    %160 = vector.extract_strided_slice %149 {offsets = [0, 64], sizes = [8, 32], strides = [1, 1]} : vector<8x96xf32> to vector<8x32xf32>
    %161 = vector.extract_strided_slice %146 {offsets = [0, 64], sizes = [8, 32], strides = [1, 1]} : vector<8x96xf32> to vector<8x32xf32>
    %162 = arith.addf %161, %32 : vector<8x32xf32>
    %163 = arith.mulf %158, %162 : vector<8x32xf32>
    %164 = arith.addf %160, %163 : vector<8x32xf32>
    %165 = math.tanh %164 : vector<8x32xf32>
    %166 = arith.subf %145, %165 : vector<8x32xf32>
    %167 = arith.mulf %159, %166 : vector<8x32xf32>
    %168 = arith.addf %165, %167 : vector<8x32xf32>
    %169 = vector.extract_strided_slice %22 {offsets = [32, 0], sizes = [8, 32], strides = [1, 1]} : vector<64x32xf32> to vector<8x32xf32>
    %170 = arith.mulf %169, %168 : vector<8x32xf32>
    %cst_30 = arith.constant 0.000000e+00 : f32
    %171 = vector.broadcast %cst_30 : f32 to vector<8x32xf32>
    %172 = arith.cmpf ogt, %169, %171 : vector<8x32xf32>
    %173 = arith.select %172, %168, %145 : vector<8x32xi1>, vector<8x32xf32>
    %cst_31 = arith.constant dense<0.000000e+00> : vector<8x96xf32>
    %174 = tpu.matmul %173, %29, %cst_31 {dimension_numbers = #tpu.dot_dimension_numbers<[1], [0], [0], [1], [0, 0, 1, 1], [], []>} : vector<8x32xf32>, vector<32x96xf32>, vector<8x96xf32> -> vector<8x96xf32>
    %175 = vector.extract_strided_slice %28 {offsets = [40, 0], sizes = [8, 96], strides = [1, 1]} : vector<64x96xf32> to vector<8x96xf32>
    %176 = vector.extract_strided_slice %28 {offsets = [16, 0], sizes = [8, 96], strides = [1, 1]} : vector<64x96xf32> to vector<8x96xf32>
    %177 = arith.select %18, %175, %176 : vector<8x96xi1>, vector<8x96xf32>
    %178 = vector.extract_strided_slice %177 {offsets = [0, 0], sizes = [8, 64], strides = [1, 1]} : vector<8x96xf32> to vector<8x64xf32>
    %179 = vector.extract_strided_slice %174 {offsets = [0, 0], sizes = [8, 64], strides = [1, 1]} : vector<8x96xf32> to vector<8x64xf32>
    %180 = arith.addf %178, %179 : vector<8x64xf32>
    %181 = arith.negf %180 : vector<8x64xf32>
    %182 = math.exp %181 : vector<8x64xf32>
    %cst_32 = arith.constant 1.000000e+00 : f32
    %183 = vector.broadcast %cst_32 : f32 to vector<8x64xf32>
    %184 = arith.addf %183, %182 : vector<8x64xf32>
    %185 = arith.divf %183, %184 : vector<8x64xf32>
    %186 = vector.extract_strided_slice %185 {offsets = [0, 0], sizes = [8, 32], strides = [1, 1]} : vector<8x64xf32> to vector<8x32xf32>
    %187 = vector.extract_strided_slice %185 {offsets = [0, 32], sizes = [8, 32], strides = [1, 1]} : vector<8x64xf32> to vector<8x32xf32>
    %188 = vector.extract_strided_slice %177 {offsets = [0, 64], sizes = [8, 32], strides = [1, 1]} : vector<8x96xf32> to vector<8x32xf32>
    %189 = vector.extract_strided_slice %174 {offsets = [0, 64], sizes = [8, 32], strides = [1, 1]} : vector<8x96xf32> to vector<8x32xf32>
    %190 = arith.addf %189, %32 : vector<8x32xf32>
    %191 = arith.mulf %186, %190 : vector<8x32xf32>
    %192 = arith.addf %188, %191 : vector<8x32xf32>
    %193 = math.tanh %192 : vector<8x32xf32>
    %194 = arith.subf %173, %193 : vector<8x32xf32>
    %195 = arith.mulf %187, %194 : vector<8x32xf32>
    %196 = arith.addf %193, %195 : vector<8x32xf32>
    %197 = vector.extract_strided_slice %22 {offsets = [40, 0], sizes = [8, 32], strides = [1, 1]} : vector<64x32xf32> to vector<8x32xf32>
    %198 = arith.mulf %197, %196 : vector<8x32xf32>
    %cst_33 = arith.constant 0.000000e+00 : f32
    %199 = vector.broadcast %cst_33 : f32 to vector<8x32xf32>
    %200 = arith.cmpf ogt, %197, %199 : vector<8x32xf32>
    %201 = arith.select %200, %196, %173 : vector<8x32xi1>, vector<8x32xf32>
    %cst_34 = arith.constant dense<0.000000e+00> : vector<8x96xf32>
    %202 = tpu.matmul %201, %29, %cst_34 {dimension_numbers = #tpu.dot_dimension_numbers<[1], [0], [0], [1], [0, 0, 1, 1], [], []>} : vector<8x32xf32>, vector<32x96xf32>, vector<8x96xf32> -> vector<8x96xf32>
    %203 = vector.extract_strided_slice %28 {offsets = [48, 0], sizes = [8, 96], strides = [1, 1]} : vector<64x96xf32> to vector<8x96xf32>
    %204 = vector.extract_strided_slice %28 {offsets = [8, 0], sizes = [8, 96], strides = [1, 1]} : vector<64x96xf32> to vector<8x96xf32>
    %205 = arith.select %18, %203, %204 : vector<8x96xi1>, vector<8x96xf32>
    %206 = vector.extract_strided_slice %205 {offsets = [0, 0], sizes = [8, 64], strides = [1, 1]} : vector<8x96xf32> to vector<8x64xf32>
    %207 = vector.extract_strided_slice %202 {offsets = [0, 0], sizes = [8, 64], strides = [1, 1]} : vector<8x96xf32> to vector<8x64xf32>
    %208 = arith.addf %206, %207 : vector<8x64xf32>
    %209 = arith.negf %208 : vector<8x64xf32>
    %210 = math.exp %209 : vector<8x64xf32>
    %cst_35 = arith.constant 1.000000e+00 : f32
    %211 = vector.broadcast %cst_35 : f32 to vector<8x64xf32>
    %212 = arith.addf %211, %210 : vector<8x64xf32>
    %213 = arith.divf %211, %212 : vector<8x64xf32>
    %214 = vector.extract_strided_slice %213 {offsets = [0, 0], sizes = [8, 32], strides = [1, 1]} : vector<8x64xf32> to vector<8x32xf32>
    %215 = vector.extract_strided_slice %213 {offsets = [0, 32], sizes = [8, 32], strides = [1, 1]} : vector<8x64xf32> to vector<8x32xf32>
    %216 = vector.extract_strided_slice %205 {offsets = [0, 64], sizes = [8, 32], strides = [1, 1]} : vector<8x96xf32> to vector<8x32xf32>
    %217 = vector.extract_strided_slice %202 {offsets = [0, 64], sizes = [8, 32], strides = [1, 1]} : vector<8x96xf32> to vector<8x32xf32>
    %218 = arith.addf %217, %32 : vector<8x32xf32>
    %219 = arith.mulf %214, %218 : vector<8x32xf32>
    %220 = arith.addf %216, %219 : vector<8x32xf32>
    %221 = math.tanh %220 : vector<8x32xf32>
    %222 = arith.subf %201, %221 : vector<8x32xf32>
    %223 = arith.mulf %215, %222 : vector<8x32xf32>
    %224 = arith.addf %221, %223 : vector<8x32xf32>
    %225 = vector.extract_strided_slice %22 {offsets = [48, 0], sizes = [8, 32], strides = [1, 1]} : vector<64x32xf32> to vector<8x32xf32>
    %226 = arith.mulf %225, %224 : vector<8x32xf32>
    %cst_36 = arith.constant 0.000000e+00 : f32
    %227 = vector.broadcast %cst_36 : f32 to vector<8x32xf32>
    %228 = arith.cmpf ogt, %225, %227 : vector<8x32xf32>
    %229 = arith.select %228, %224, %201 : vector<8x32xi1>, vector<8x32xf32>
    %cst_37 = arith.constant dense<0.000000e+00> : vector<8x96xf32>
    %230 = tpu.matmul %229, %29, %cst_37 {dimension_numbers = #tpu.dot_dimension_numbers<[1], [0], [0], [1], [0, 0, 1, 1], [], []>} : vector<8x32xf32>, vector<32x96xf32>, vector<8x96xf32> -> vector<8x96xf32>
    %231 = vector.extract_strided_slice %28 {offsets = [56, 0], sizes = [8, 96], strides = [1, 1]} : vector<64x96xf32> to vector<8x96xf32>
    %232 = vector.extract_strided_slice %28 {offsets = [0, 0], sizes = [8, 96], strides = [1, 1]} : vector<64x96xf32> to vector<8x96xf32>
    %233 = arith.select %18, %231, %232 : vector<8x96xi1>, vector<8x96xf32>
    %234 = vector.extract_strided_slice %233 {offsets = [0, 0], sizes = [8, 64], strides = [1, 1]} : vector<8x96xf32> to vector<8x64xf32>
    %235 = vector.extract_strided_slice %230 {offsets = [0, 0], sizes = [8, 64], strides = [1, 1]} : vector<8x96xf32> to vector<8x64xf32>
    %236 = arith.addf %234, %235 : vector<8x64xf32>
    %237 = arith.negf %236 : vector<8x64xf32>
    %238 = math.exp %237 : vector<8x64xf32>
    %cst_38 = arith.constant 1.000000e+00 : f32
    %239 = vector.broadcast %cst_38 : f32 to vector<8x64xf32>
    %240 = arith.addf %239, %238 : vector<8x64xf32>
    %241 = arith.divf %239, %240 : vector<8x64xf32>
    %242 = vector.extract_strided_slice %241 {offsets = [0, 0], sizes = [8, 32], strides = [1, 1]} : vector<8x64xf32> to vector<8x32xf32>
    %243 = vector.extract_strided_slice %241 {offsets = [0, 32], sizes = [8, 32], strides = [1, 1]} : vector<8x64xf32> to vector<8x32xf32>
    %244 = vector.extract_strided_slice %233 {offsets = [0, 64], sizes = [8, 32], strides = [1, 1]} : vector<8x96xf32> to vector<8x32xf32>
    %245 = vector.extract_strided_slice %230 {offsets = [0, 64], sizes = [8, 32], strides = [1, 1]} : vector<8x96xf32> to vector<8x32xf32>
    %246 = arith.addf %245, %32 : vector<8x32xf32>
    %247 = arith.mulf %242, %246 : vector<8x32xf32>
    %248 = arith.addf %244, %247 : vector<8x32xf32>
    %249 = math.tanh %248 : vector<8x32xf32>
    %250 = arith.subf %229, %249 : vector<8x32xf32>
    %251 = arith.mulf %243, %250 : vector<8x32xf32>
    %252 = arith.addf %249, %251 : vector<8x32xf32>
    %253 = vector.extract_strided_slice %22 {offsets = [56, 0], sizes = [8, 32], strides = [1, 1]} : vector<64x32xf32> to vector<8x32xf32>
    %254 = arith.mulf %253, %252 : vector<8x32xf32>
    %255 = arith.select %21, %58, %254 : vector<8x32xi1>, vector<8x32xf32>
    %c0_39 = arith.constant 0 : index
    %c0_40 = arith.constant 0 : index
    %256 = vector.load %arg13[%c0_39, %c0_40] : memref<64x32xf32, #tpu.memory_space<vmem>>, vector<8x32xf32>
    tpu.vector_store %arg13[%c0_39, %c0_40], %255 {strides = array<i32>} : memref<64x32xf32, #tpu.memory_space<vmem>>, vector<8x32xf32>,
    %257 = arith.select %21, %86, %226 : vector<8x32xi1>, vector<8x32xf32>
    %c8 = arith.constant 8 : index
    %c0_41 = arith.constant 0 : index
    %258 = vector.load %arg13[%c8, %c0_41] : memref<64x32xf32, #tpu.memory_space<vmem>>, vector<8x32xf32>
    tpu.vector_store %arg13[%c8, %c0_41], %257 {strides = array<i32>} : memref<64x32xf32, #tpu.memory_space<vmem>>, vector<8x32xf32>,
    %259 = arith.select %21, %114, %198 : vector<8x32xi1>, vector<8x32xf32>
    %c16 = arith.constant 16 : index
    %c0_42 = arith.constant 0 : index
    %260 = vector.load %arg13[%c16, %c0_42] : memref<64x32xf32, #tpu.memory_space<vmem>>, vector<8x32xf32>
    tpu.vector_store %arg13[%c16, %c0_42], %259 {strides = array<i32>} : memref<64x32xf32, #tpu.memory_space<vmem>>, vector<8x32xf32>,
    %261 = arith.select %21, %142, %170 : vector<8x32xi1>, vector<8x32xf32>
    %c24 = arith.constant 24 : index
    %c0_43 = arith.constant 0 : index
    %262 = vector.load %arg13[%c24, %c0_43] : memref<64x32xf32, #tpu.memory_space<vmem>>, vector<8x32xf32>
    tpu.vector_store %arg13[%c24, %c0_43], %261 {strides = array<i32>} : memref<64x32xf32, #tpu.memory_space<vmem>>, vector<8x32xf32>,
    %263 = arith.select %21, %170, %142 : vector<8x32xi1>, vector<8x32xf32>
    %c32 = arith.constant 32 : index
    %c0_44 = arith.constant 0 : index
    %264 = vector.load %arg13[%c32, %c0_44] : memref<64x32xf32, #tpu.memory_space<vmem>>, vector<8x32xf32>
    tpu.vector_store %arg13[%c32, %c0_44], %263 {strides = array<i32>} : memref<64x32xf32, #tpu.memory_space<vmem>>, vector<8x32xf32>,
    %265 = arith.select %21, %198, %114 : vector<8x32xi1>, vector<8x32xf32>
    %c40 = arith.constant 40 : index
    %c0_45 = arith.constant 0 : index
    %266 = vector.load %arg13[%c40, %c0_45] : memref<64x32xf32, #tpu.memory_space<vmem>>, vector<8x32xf32>
    tpu.vector_store %arg13[%c40, %c0_45], %265 {strides = array<i32>} : memref<64x32xf32, #tpu.memory_space<vmem>>, vector<8x32xf32>,
    %267 = arith.select %21, %226, %86 : vector<8x32xi1>, vector<8x32xf32>
    %c48 = arith.constant 48 : index
    %c0_46 = arith.constant 0 : index
    %268 = vector.load %arg13[%c48, %c0_46] : memref<64x32xf32, #tpu.memory_space<vmem>>, vector<8x32xf32>
    tpu.vector_store %arg13[%c48, %c0_46], %267 {strides = array<i32>} : memref<64x32xf32, #tpu.memory_space<vmem>>, vector<8x32xf32>,
    %269 = arith.select %21, %254, %58 : vector<8x32xi1>, vector<8x32xf32>
    %c56 = arith.constant 56 : index
    %c0_47 = arith.constant 0 : index
    %270 = vector.load %arg13[%c56, %c0_47] : memref<64x32xf32, #tpu.memory_space<vmem>>, vector<8x32xf32>
    tpu.vector_store %arg13[%c56, %c0_47], %269 {strides = array<i32>} : memref<64x32xf32, #tpu.memory_space<vmem>>, vector<8x32xf32>,
    %c0_48 = arith.constant 0 : index
    %c0_49 = arith.constant 0 : index
    %271 = vector.load %arg13[%c0_48, %c0_49] : memref<64x32xf32, #tpu.memory_space<vmem>>, vector<64x32xf32>
    %c0_50 = arith.constant 0 : index
    %c0_51 = arith.constant 0 : index
    %272 = vector.load %arg6[%c0_50, %c0_51] : memref<32x96xf32, #tpu.memory_space<vmem>>, vector<32x96xf32>
    %cst_52 = arith.constant dense<0.000000e+00> : vector<64x96xf32>
    %273 = tpu.matmul %271, %272, %cst_52 {dimension_numbers = #tpu.dot_dimension_numbers<[1], [0], [0], [1], [0, 0, 1, 1], [], []>} : vector<64x32xf32>, vector<32x96xf32>, vector<64x96xf32> -> vector<64x96xf32>
    %c0_53 = arith.constant 0 : index
    %c0_54 = arith.constant 0 : index
    %274 = vector.load %arg7[%c0_53, %c0_54] : memref<1x96xf32, #tpu.memory_space<vmem>>, vector<1x96xf32>
    %275 = vector.broadcast %274 : vector<1x96xf32> to vector<64x96xf32>
    %276 = arith.addf %273, %275 : vector<64x96xf32>
    %c0_55 = arith.constant 0 : index
    %c0_56 = arith.constant 0 : index
    %277 = vector.load %arg8[%c0_55, %c0_56] : memref<32x96xf32, #tpu.memory_space<vmem>>, vector<32x96xf32>
    %c0_57 = arith.constant 0 : index
    %c0_58 = arith.constant 0 : index
    %278 = vector.load %arg9[%c0_57, %c0_58] : memref<1x32xf32, #tpu.memory_space<vmem>>, vector<1x32xf32>
    %279 = vector.shape_cast %278 : vector<1x32xf32> to vector<1x32xf32>
    %280 = vector.broadcast %279 : vector<1x32xf32> to vector<8x32xf32>
    %cst_59 = arith.constant 0.000000e+00 : f32
    %281 = vector.broadcast %cst_59 : f32 to vector<8x32xf32>
    %cst_60 = arith.constant dense<0.000000e+00> : vector<8x96xf32>
    %282 = tpu.matmul %281, %277, %cst_60 {dimension_numbers = #tpu.dot_dimension_numbers<[1], [0], [0], [1], [0, 0, 1, 1], [], []>} : vector<8x32xf32>, vector<32x96xf32>, vector<8x96xf32> -> vector<8x96xf32>
    %283 = vector.extract_strided_slice %276 {offsets = [0, 0], sizes = [8, 96], strides = [1, 1]} : vector<64x96xf32> to vector<8x96xf32>
    %284 = vector.extract_strided_slice %276 {offsets = [56, 0], sizes = [8, 96], strides = [1, 1]} : vector<64x96xf32> to vector<8x96xf32>
    %285 = arith.select %18, %283, %284 : vector<8x96xi1>, vector<8x96xf32>
    %286 = vector.extract_strided_slice %285 {offsets = [0, 0], sizes = [8, 64], strides = [1, 1]} : vector<8x96xf32> to vector<8x64xf32>
    %287 = vector.extract_strided_slice %282 {offsets = [0, 0], sizes = [8, 64], strides = [1, 1]} : vector<8x96xf32> to vector<8x64xf32>
    %288 = arith.addf %286, %287 : vector<8x64xf32>
    %289 = arith.negf %288 : vector<8x64xf32>
    %290 = math.exp %289 : vector<8x64xf32>
    %cst_61 = arith.constant 1.000000e+00 : f32
    %291 = vector.broadcast %cst_61 : f32 to vector<8x64xf32>
    %292 = arith.addf %291, %290 : vector<8x64xf32>
    %293 = arith.divf %291, %292 : vector<8x64xf32>
    %294 = vector.extract_strided_slice %293 {offsets = [0, 0], sizes = [8, 32], strides = [1, 1]} : vector<8x64xf32> to vector<8x32xf32>
    %295 = vector.extract_strided_slice %293 {offsets = [0, 32], sizes = [8, 32], strides = [1, 1]} : vector<8x64xf32> to vector<8x32xf32>
    %296 = vector.extract_strided_slice %285 {offsets = [0, 64], sizes = [8, 32], strides = [1, 1]} : vector<8x96xf32> to vector<8x32xf32>
    %297 = vector.extract_strided_slice %282 {offsets = [0, 64], sizes = [8, 32], strides = [1, 1]} : vector<8x96xf32> to vector<8x32xf32>
    %298 = arith.addf %297, %280 : vector<8x32xf32>
    %299 = arith.mulf %294, %298 : vector<8x32xf32>
    %300 = arith.addf %296, %299 : vector<8x32xf32>
    %301 = math.tanh %300 : vector<8x32xf32>
    %302 = arith.subf %281, %301 : vector<8x32xf32>
    %303 = arith.mulf %295, %302 : vector<8x32xf32>
    %304 = arith.addf %301, %303 : vector<8x32xf32>
    %305 = vector.extract_strided_slice %22 {offsets = [0, 0], sizes = [8, 32], strides = [1, 1]} : vector<64x32xf32> to vector<8x32xf32>
    %306 = arith.mulf %305, %304 : vector<8x32xf32>
    %cst_62 = arith.constant 0.000000e+00 : f32
    %307 = vector.broadcast %cst_62 : f32 to vector<8x32xf32>
    %308 = arith.cmpf ogt, %305, %307 : vector<8x32xf32>
    %309 = arith.select %308, %304, %281 : vector<8x32xi1>, vector<8x32xf32>
    %cst_63 = arith.constant dense<0.000000e+00> : vector<8x96xf32>
    %310 = tpu.matmul %309, %277, %cst_63 {dimension_numbers = #tpu.dot_dimension_numbers<[1], [0], [0], [1], [0, 0, 1, 1], [], []>} : vector<8x32xf32>, vector<32x96xf32>, vector<8x96xf32> -> vector<8x96xf32>
    %311 = vector.extract_strided_slice %276 {offsets = [8, 0], sizes = [8, 96], strides = [1, 1]} : vector<64x96xf32> to vector<8x96xf32>
    %312 = vector.extract_strided_slice %276 {offsets = [48, 0], sizes = [8, 96], strides = [1, 1]} : vector<64x96xf32> to vector<8x96xf32>
    %313 = arith.select %18, %311, %312 : vector<8x96xi1>, vector<8x96xf32>
    %314 = vector.extract_strided_slice %313 {offsets = [0, 0], sizes = [8, 64], strides = [1, 1]} : vector<8x96xf32> to vector<8x64xf32>
    %315 = vector.extract_strided_slice %310 {offsets = [0, 0], sizes = [8, 64], strides = [1, 1]} : vector<8x96xf32> to vector<8x64xf32>
    %316 = arith.addf %314, %315 : vector<8x64xf32>
    %317 = arith.negf %316 : vector<8x64xf32>
    %318 = math.exp %317 : vector<8x64xf32>
    %cst_64 = arith.constant 1.000000e+00 : f32
    %319 = vector.broadcast %cst_64 : f32 to vector<8x64xf32>
    %320 = arith.addf %319, %318 : vector<8x64xf32>
    %321 = arith.divf %319, %320 : vector<8x64xf32>
    %322 = vector.extract_strided_slice %321 {offsets = [0, 0], sizes = [8, 32], strides = [1, 1]} : vector<8x64xf32> to vector<8x32xf32>
    %323 = vector.extract_strided_slice %321 {offsets = [0, 32], sizes = [8, 32], strides = [1, 1]} : vector<8x64xf32> to vector<8x32xf32>
    %324 = vector.extract_strided_slice %313 {offsets = [0, 64], sizes = [8, 32], strides = [1, 1]} : vector<8x96xf32> to vector<8x32xf32>
    %325 = vector.extract_strided_slice %310 {offsets = [0, 64], sizes = [8, 32], strides = [1, 1]} : vector<8x96xf32> to vector<8x32xf32>
    %326 = arith.addf %325, %280 : vector<8x32xf32>
    %327 = arith.mulf %322, %326 : vector<8x32xf32>
    %328 = arith.addf %324, %327 : vector<8x32xf32>
    %329 = math.tanh %328 : vector<8x32xf32>
    %330 = arith.subf %309, %329 : vector<8x32xf32>
    %331 = arith.mulf %323, %330 : vector<8x32xf32>
    %332 = arith.addf %329, %331 : vector<8x32xf32>
    %333 = vector.extract_strided_slice %22 {offsets = [8, 0], sizes = [8, 32], strides = [1, 1]} : vector<64x32xf32> to vector<8x32xf32>
    %334 = arith.mulf %333, %332 : vector<8x32xf32>
    %cst_65 = arith.constant 0.000000e+00 : f32
    %335 = vector.broadcast %cst_65 : f32 to vector<8x32xf32>
    %336 = arith.cmpf ogt, %333, %335 : vector<8x32xf32>
    %337 = arith.select %336, %332, %309 : vector<8x32xi1>, vector<8x32xf32>
    %cst_66 = arith.constant dense<0.000000e+00> : vector<8x96xf32>
    %338 = tpu.matmul %337, %277, %cst_66 {dimension_numbers = #tpu.dot_dimension_numbers<[1], [0], [0], [1], [0, 0, 1, 1], [], []>} : vector<8x32xf32>, vector<32x96xf32>, vector<8x96xf32> -> vector<8x96xf32>
    %339 = vector.extract_strided_slice %276 {offsets = [16, 0], sizes = [8, 96], strides = [1, 1]} : vector<64x96xf32> to vector<8x96xf32>
    %340 = vector.extract_strided_slice %276 {offsets = [40, 0], sizes = [8, 96], strides = [1, 1]} : vector<64x96xf32> to vector<8x96xf32>
    %341 = arith.select %18, %339, %340 : vector<8x96xi1>, vector<8x96xf32>
    %342 = vector.extract_strided_slice %341 {offsets = [0, 0], sizes = [8, 64], strides = [1, 1]} : vector<8x96xf32> to vector<8x64xf32>
    %343 = vector.extract_strided_slice %338 {offsets = [0, 0], sizes = [8, 64], strides = [1, 1]} : vector<8x96xf32> to vector<8x64xf32>
    %344 = arith.addf %342, %343 : vector<8x64xf32>
    %345 = arith.negf %344 : vector<8x64xf32>
    %346 = math.exp %345 : vector<8x64xf32>
    %cst_67 = arith.constant 1.000000e+00 : f32
    %347 = vector.broadcast %cst_67 : f32 to vector<8x64xf32>
    %348 = arith.addf %347, %346 : vector<8x64xf32>
    %349 = arith.divf %347, %348 : vector<8x64xf32>
    %350 = vector.extract_strided_slice %349 {offsets = [0, 0], sizes = [8, 32], strides = [1, 1]} : vector<8x64xf32> to vector<8x32xf32>
    %351 = vector.extract_strided_slice %349 {offsets = [0, 32], sizes = [8, 32], strides = [1, 1]} : vector<8x64xf32> to vector<8x32xf32>
    %352 = vector.extract_strided_slice %341 {offsets = [0, 64], sizes = [8, 32], strides = [1, 1]} : vector<8x96xf32> to vector<8x32xf32>
    %353 = vector.extract_strided_slice %338 {offsets = [0, 64], sizes = [8, 32], strides = [1, 1]} : vector<8x96xf32> to vector<8x32xf32>
    %354 = arith.addf %353, %280 : vector<8x32xf32>
    %355 = arith.mulf %350, %354 : vector<8x32xf32>
    %356 = arith.addf %352, %355 : vector<8x32xf32>
    %357 = math.tanh %356 : vector<8x32xf32>
    %358 = arith.subf %337, %357 : vector<8x32xf32>
    %359 = arith.mulf %351, %358 : vector<8x32xf32>
    %360 = arith.addf %357, %359 : vector<8x32xf32>
    %361 = vector.extract_strided_slice %22 {offsets = [16, 0], sizes = [8, 32], strides = [1, 1]} : vector<64x32xf32> to vector<8x32xf32>
    %362 = arith.mulf %361, %360 : vector<8x32xf32>
    %cst_68 = arith.constant 0.000000e+00 : f32
    %363 = vector.broadcast %cst_68 : f32 to vector<8x32xf32>
    %364 = arith.cmpf ogt, %361, %363 : vector<8x32xf32>
    %365 = arith.select %364, %360, %337 : vector<8x32xi1>, vector<8x32xf32>
    %cst_69 = arith.constant dense<0.000000e+00> : vector<8x96xf32>
    %366 = tpu.matmul %365, %277, %cst_69 {dimension_numbers = #tpu.dot_dimension_numbers<[1], [0], [0], [1], [0, 0, 1, 1], [], []>} : vector<8x32xf32>, vector<32x96xf32>, vector<8x96xf32> -> vector<8x96xf32>
    %367 = vector.extract_strided_slice %276 {offsets = [24, 0], sizes = [8, 96], strides = [1, 1]} : vector<64x96xf32> to vector<8x96xf32>
    %368 = vector.extract_strided_slice %276 {offsets = [32, 0], sizes = [8, 96], strides = [1, 1]} : vector<64x96xf32> to vector<8x96xf32>
    %369 = arith.select %18, %367, %368 : vector<8x96xi1>, vector<8x96xf32>
    %370 = vector.extract_strided_slice %369 {offsets = [0, 0], sizes = [8, 64], strides = [1, 1]} : vector<8x96xf32> to vector<8x64xf32>
    %371 = vector.extract_strided_slice %366 {offsets = [0, 0], sizes = [8, 64], strides = [1, 1]} : vector<8x96xf32> to vector<8x64xf32>
    %372 = arith.addf %370, %371 : vector<8x64xf32>
    %373 = arith.negf %372 : vector<8x64xf32>
    %374 = math.exp %373 : vector<8x64xf32>
    %cst_70 = arith.constant 1.000000e+00 : f32
    %375 = vector.broadcast %cst_70 : f32 to vector<8x64xf32>
    %376 = arith.addf %375, %374 : vector<8x64xf32>
    %377 = arith.divf %375, %376 : vector<8x64xf32>
    %378 = vector.extract_strided_slice %377 {offsets = [0, 0], sizes = [8, 32], strides = [1, 1]} : vector<8x64xf32> to vector<8x32xf32>
    %379 = vector.extract_strided_slice %377 {offsets = [0, 32], sizes = [8, 32], strides = [1, 1]} : vector<8x64xf32> to vector<8x32xf32>
    %380 = vector.extract_strided_slice %369 {offsets = [0, 64], sizes = [8, 32], strides = [1, 1]} : vector<8x96xf32> to vector<8x32xf32>
    %381 = vector.extract_strided_slice %366 {offsets = [0, 64], sizes = [8, 32], strides = [1, 1]} : vector<8x96xf32> to vector<8x32xf32>
    %382 = arith.addf %381, %280 : vector<8x32xf32>
    %383 = arith.mulf %378, %382 : vector<8x32xf32>
    %384 = arith.addf %380, %383 : vector<8x32xf32>
    %385 = math.tanh %384 : vector<8x32xf32>
    %386 = arith.subf %365, %385 : vector<8x32xf32>
    %387 = arith.mulf %379, %386 : vector<8x32xf32>
    %388 = arith.addf %385, %387 : vector<8x32xf32>
    %389 = vector.extract_strided_slice %22 {offsets = [24, 0], sizes = [8, 32], strides = [1, 1]} : vector<64x32xf32> to vector<8x32xf32>
    %390 = arith.mulf %389, %388 : vector<8x32xf32>
    %cst_71 = arith.constant 0.000000e+00 : f32
    %391 = vector.broadcast %cst_71 : f32 to vector<8x32xf32>
    %392 = arith.cmpf ogt, %389, %391 : vector<8x32xf32>
    %393 = arith.select %392, %388, %365 : vector<8x32xi1>, vector<8x32xf32>
    %cst_72 = arith.constant dense<0.000000e+00> : vector<8x96xf32>
    %394 = tpu.matmul %393, %277, %cst_72 {dimension_numbers = #tpu.dot_dimension_numbers<[1], [0], [0], [1], [0, 0, 1, 1], [], []>} : vector<8x32xf32>, vector<32x96xf32>, vector<8x96xf32> -> vector<8x96xf32>
    %395 = vector.extract_strided_slice %276 {offsets = [32, 0], sizes = [8, 96], strides = [1, 1]} : vector<64x96xf32> to vector<8x96xf32>
    %396 = vector.extract_strided_slice %276 {offsets = [24, 0], sizes = [8, 96], strides = [1, 1]} : vector<64x96xf32> to vector<8x96xf32>
    %397 = arith.select %18, %395, %396 : vector<8x96xi1>, vector<8x96xf32>
    %398 = vector.extract_strided_slice %397 {offsets = [0, 0], sizes = [8, 64], strides = [1, 1]} : vector<8x96xf32> to vector<8x64xf32>
    %399 = vector.extract_strided_slice %394 {offsets = [0, 0], sizes = [8, 64], strides = [1, 1]} : vector<8x96xf32> to vector<8x64xf32>
    %400 = arith.addf %398, %399 : vector<8x64xf32>
    %401 = arith.negf %400 : vector<8x64xf32>
    %402 = math.exp %401 : vector<8x64xf32>
    %cst_73 = arith.constant 1.000000e+00 : f32
    %403 = vector.broadcast %cst_73 : f32 to vector<8x64xf32>
    %404 = arith.addf %403, %402 : vector<8x64xf32>
    %405 = arith.divf %403, %404 : vector<8x64xf32>
    %406 = vector.extract_strided_slice %405 {offsets = [0, 0], sizes = [8, 32], strides = [1, 1]} : vector<8x64xf32> to vector<8x32xf32>
    %407 = vector.extract_strided_slice %405 {offsets = [0, 32], sizes = [8, 32], strides = [1, 1]} : vector<8x64xf32> to vector<8x32xf32>
    %408 = vector.extract_strided_slice %397 {offsets = [0, 64], sizes = [8, 32], strides = [1, 1]} : vector<8x96xf32> to vector<8x32xf32>
    %409 = vector.extract_strided_slice %394 {offsets = [0, 64], sizes = [8, 32], strides = [1, 1]} : vector<8x96xf32> to vector<8x32xf32>
    %410 = arith.addf %409, %280 : vector<8x32xf32>
    %411 = arith.mulf %406, %410 : vector<8x32xf32>
    %412 = arith.addf %408, %411 : vector<8x32xf32>
    %413 = math.tanh %412 : vector<8x32xf32>
    %414 = arith.subf %393, %413 : vector<8x32xf32>
    %415 = arith.mulf %407, %414 : vector<8x32xf32>
    %416 = arith.addf %413, %415 : vector<8x32xf32>
    %417 = vector.extract_strided_slice %22 {offsets = [32, 0], sizes = [8, 32], strides = [1, 1]} : vector<64x32xf32> to vector<8x32xf32>
    %418 = arith.mulf %417, %416 : vector<8x32xf32>
    %cst_74 = arith.constant 0.000000e+00 : f32
    %419 = vector.broadcast %cst_74 : f32 to vector<8x32xf32>
    %420 = arith.cmpf ogt, %417, %419 : vector<8x32xf32>
    %421 = arith.select %420, %416, %393 : vector<8x32xi1>, vector<8x32xf32>
    %cst_75 = arith.constant dense<0.000000e+00> : vector<8x96xf32>
    %422 = tpu.matmul %421, %277, %cst_75 {dimension_numbers = #tpu.dot_dimension_numbers<[1], [0], [0], [1], [0, 0, 1, 1], [], []>} : vector<8x32xf32>, vector<32x96xf32>, vector<8x96xf32> -> vector<8x96xf32>
    %423 = vector.extract_strided_slice %276 {offsets = [40, 0], sizes = [8, 96], strides = [1, 1]} : vector<64x96xf32> to vector<8x96xf32>
    %424 = vector.extract_strided_slice %276 {offsets = [16, 0], sizes = [8, 96], strides = [1, 1]} : vector<64x96xf32> to vector<8x96xf32>
    %425 = arith.select %18, %423, %424 : vector<8x96xi1>, vector<8x96xf32>
    %426 = vector.extract_strided_slice %425 {offsets = [0, 0], sizes = [8, 64], strides = [1, 1]} : vector<8x96xf32> to vector<8x64xf32>
    %427 = vector.extract_strided_slice %422 {offsets = [0, 0], sizes = [8, 64], strides = [1, 1]} : vector<8x96xf32> to vector<8x64xf32>
    %428 = arith.addf %426, %427 : vector<8x64xf32>
    %429 = arith.negf %428 : vector<8x64xf32>
    %430 = math.exp %429 : vector<8x64xf32>
    %cst_76 = arith.constant 1.000000e+00 : f32
    %431 = vector.broadcast %cst_76 : f32 to vector<8x64xf32>
    %432 = arith.addf %431, %430 : vector<8x64xf32>
    %433 = arith.divf %431, %432 : vector<8x64xf32>
    %434 = vector.extract_strided_slice %433 {offsets = [0, 0], sizes = [8, 32], strides = [1, 1]} : vector<8x64xf32> to vector<8x32xf32>
    %435 = vector.extract_strided_slice %433 {offsets = [0, 32], sizes = [8, 32], strides = [1, 1]} : vector<8x64xf32> to vector<8x32xf32>
    %436 = vector.extract_strided_slice %425 {offsets = [0, 64], sizes = [8, 32], strides = [1, 1]} : vector<8x96xf32> to vector<8x32xf32>
    %437 = vector.extract_strided_slice %422 {offsets = [0, 64], sizes = [8, 32], strides = [1, 1]} : vector<8x96xf32> to vector<8x32xf32>
    %438 = arith.addf %437, %280 : vector<8x32xf32>
    %439 = arith.mulf %434, %438 : vector<8x32xf32>
    %440 = arith.addf %436, %439 : vector<8x32xf32>
    %441 = math.tanh %440 : vector<8x32xf32>
    %442 = arith.subf %421, %441 : vector<8x32xf32>
    %443 = arith.mulf %435, %442 : vector<8x32xf32>
    %444 = arith.addf %441, %443 : vector<8x32xf32>
    %445 = vector.extract_strided_slice %22 {offsets = [40, 0], sizes = [8, 32], strides = [1, 1]} : vector<64x32xf32> to vector<8x32xf32>
    %446 = arith.mulf %445, %444 : vector<8x32xf32>
    %cst_77 = arith.constant 0.000000e+00 : f32
    %447 = vector.broadcast %cst_77 : f32 to vector<8x32xf32>
    %448 = arith.cmpf ogt, %445, %447 : vector<8x32xf32>
    %449 = arith.select %448, %444, %421 : vector<8x32xi1>, vector<8x32xf32>
    %cst_78 = arith.constant dense<0.000000e+00> : vector<8x96xf32>
    %450 = tpu.matmul %449, %277, %cst_78 {dimension_numbers = #tpu.dot_dimension_numbers<[1], [0], [0], [1], [0, 0, 1, 1], [], []>} : vector<8x32xf32>, vector<32x96xf32>, vector<8x96xf32> -> vector<8x96xf32>
    %451 = vector.extract_strided_slice %276 {offsets = [48, 0], sizes = [8, 96], strides = [1, 1]} : vector<64x96xf32> to vector<8x96xf32>
    %452 = vector.extract_strided_slice %276 {offsets = [8, 0], sizes = [8, 96], strides = [1, 1]} : vector<64x96xf32> to vector<8x96xf32>
    %453 = arith.select %18, %451, %452 : vector<8x96xi1>, vector<8x96xf32>
    %454 = vector.extract_strided_slice %453 {offsets = [0, 0], sizes = [8, 64], strides = [1, 1]} : vector<8x96xf32> to vector<8x64xf32>
    %455 = vector.extract_strided_slice %450 {offsets = [0, 0], sizes = [8, 64], strides = [1, 1]} : vector<8x96xf32> to vector<8x64xf32>
    %456 = arith.addf %454, %455 : vector<8x64xf32>
    %457 = arith.negf %456 : vector<8x64xf32>
    %458 = math.exp %457 : vector<8x64xf32>
    %cst_79 = arith.constant 1.000000e+00 : f32
    %459 = vector.broadcast %cst_79 : f32 to vector<8x64xf32>
    %460 = arith.addf %459, %458 : vector<8x64xf32>
    %461 = arith.divf %459, %460 : vector<8x64xf32>
    %462 = vector.extract_strided_slice %461 {offsets = [0, 0], sizes = [8, 32], strides = [1, 1]} : vector<8x64xf32> to vector<8x32xf32>
    %463 = vector.extract_strided_slice %461 {offsets = [0, 32], sizes = [8, 32], strides = [1, 1]} : vector<8x64xf32> to vector<8x32xf32>
    %464 = vector.extract_strided_slice %453 {offsets = [0, 64], sizes = [8, 32], strides = [1, 1]} : vector<8x96xf32> to vector<8x32xf32>
    %465 = vector.extract_strided_slice %450 {offsets = [0, 64], sizes = [8, 32], strides = [1, 1]} : vector<8x96xf32> to vector<8x32xf32>
    %466 = arith.addf %465, %280 : vector<8x32xf32>
    %467 = arith.mulf %462, %466 : vector<8x32xf32>
    %468 = arith.addf %464, %467 : vector<8x32xf32>
    %469 = math.tanh %468 : vector<8x32xf32>
    %470 = arith.subf %449, %469 : vector<8x32xf32>
    %471 = arith.mulf %463, %470 : vector<8x32xf32>
    %472 = arith.addf %469, %471 : vector<8x32xf32>
    %473 = vector.extract_strided_slice %22 {offsets = [48, 0], sizes = [8, 32], strides = [1, 1]} : vector<64x32xf32> to vector<8x32xf32>
    %474 = arith.mulf %473, %472 : vector<8x32xf32>
    %cst_80 = arith.constant 0.000000e+00 : f32
    %475 = vector.broadcast %cst_80 : f32 to vector<8x32xf32>
    %476 = arith.cmpf ogt, %473, %475 : vector<8x32xf32>
    %477 = arith.select %476, %472, %449 : vector<8x32xi1>, vector<8x32xf32>
    %cst_81 = arith.constant dense<0.000000e+00> : vector<8x96xf32>
    %478 = tpu.matmul %477, %277, %cst_81 {dimension_numbers = #tpu.dot_dimension_numbers<[1], [0], [0], [1], [0, 0, 1, 1], [], []>} : vector<8x32xf32>, vector<32x96xf32>, vector<8x96xf32> -> vector<8x96xf32>
    %479 = vector.extract_strided_slice %276 {offsets = [56, 0], sizes = [8, 96], strides = [1, 1]} : vector<64x96xf32> to vector<8x96xf32>
    %480 = vector.extract_strided_slice %276 {offsets = [0, 0], sizes = [8, 96], strides = [1, 1]} : vector<64x96xf32> to vector<8x96xf32>
    %481 = arith.select %18, %479, %480 : vector<8x96xi1>, vector<8x96xf32>
    %482 = vector.extract_strided_slice %481 {offsets = [0, 0], sizes = [8, 64], strides = [1, 1]} : vector<8x96xf32> to vector<8x64xf32>
    %483 = vector.extract_strided_slice %478 {offsets = [0, 0], sizes = [8, 64], strides = [1, 1]} : vector<8x96xf32> to vector<8x64xf32>
    %484 = arith.addf %482, %483 : vector<8x64xf32>
    %485 = arith.negf %484 : vector<8x64xf32>
    %486 = math.exp %485 : vector<8x64xf32>
    %cst_82 = arith.constant 1.000000e+00 : f32
    %487 = vector.broadcast %cst_82 : f32 to vector<8x64xf32>
    %488 = arith.addf %487, %486 : vector<8x64xf32>
    %489 = arith.divf %487, %488 : vector<8x64xf32>
    %490 = vector.extract_strided_slice %489 {offsets = [0, 0], sizes = [8, 32], strides = [1, 1]} : vector<8x64xf32> to vector<8x32xf32>
    %491 = vector.extract_strided_slice %489 {offsets = [0, 32], sizes = [8, 32], strides = [1, 1]} : vector<8x64xf32> to vector<8x32xf32>
    %492 = vector.extract_strided_slice %481 {offsets = [0, 64], sizes = [8, 32], strides = [1, 1]} : vector<8x96xf32> to vector<8x32xf32>
    %493 = vector.extract_strided_slice %478 {offsets = [0, 64], sizes = [8, 32], strides = [1, 1]} : vector<8x96xf32> to vector<8x32xf32>
    %494 = arith.addf %493, %280 : vector<8x32xf32>
    %495 = arith.mulf %490, %494 : vector<8x32xf32>
    %496 = arith.addf %492, %495 : vector<8x32xf32>
    %497 = math.tanh %496 : vector<8x32xf32>
    %498 = arith.subf %477, %497 : vector<8x32xf32>
    %499 = arith.mulf %491, %498 : vector<8x32xf32>
    %500 = arith.addf %497, %499 : vector<8x32xf32>
    %501 = vector.extract_strided_slice %22 {offsets = [56, 0], sizes = [8, 32], strides = [1, 1]} : vector<64x32xf32> to vector<8x32xf32>
    %502 = arith.mulf %501, %500 : vector<8x32xf32>
    %503 = arith.select %21, %306, %502 : vector<8x32xi1>, vector<8x32xf32>
    %c0_83 = arith.constant 0 : index
    %c0_84 = arith.constant 0 : index
    %504 = vector.load %arg13[%c0_83, %c0_84] : memref<64x32xf32, #tpu.memory_space<vmem>>, vector<8x32xf32>
    tpu.vector_store %arg13[%c0_83, %c0_84], %503 {strides = array<i32>} : memref<64x32xf32, #tpu.memory_space<vmem>>, vector<8x32xf32>,
    %505 = arith.select %21, %334, %474 : vector<8x32xi1>, vector<8x32xf32>
    %c8_85 = arith.constant 8 : index
    %c0_86 = arith.constant 0 : index
    %506 = vector.load %arg13[%c8_85, %c0_86] : memref<64x32xf32, #tpu.memory_space<vmem>>, vector<8x32xf32>
    tpu.vector_store %arg13[%c8_85, %c0_86], %505 {strides = array<i32>} : memref<64x32xf32, #tpu.memory_space<vmem>>, vector<8x32xf32>,
    %507 = arith.select %21, %362, %446 : vector<8x32xi1>, vector<8x32xf32>
    %c16_87 = arith.constant 16 : index
    %c0_88 = arith.constant 0 : index
    %508 = vector.load %arg13[%c16_87, %c0_88] : memref<64x32xf32, #tpu.memory_space<vmem>>, vector<8x32xf32>
    tpu.vector_store %arg13[%c16_87, %c0_88], %507 {strides = array<i32>} : memref<64x32xf32, #tpu.memory_space<vmem>>, vector<8x32xf32>,
    %509 = arith.select %21, %390, %418 : vector<8x32xi1>, vector<8x32xf32>
    %c24_89 = arith.constant 24 : index
    %c0_90 = arith.constant 0 : index
    %510 = vector.load %arg13[%c24_89, %c0_90] : memref<64x32xf32, #tpu.memory_space<vmem>>, vector<8x32xf32>
    tpu.vector_store %arg13[%c24_89, %c0_90], %509 {strides = array<i32>} : memref<64x32xf32, #tpu.memory_space<vmem>>, vector<8x32xf32>,
    %511 = arith.select %21, %418, %390 : vector<8x32xi1>, vector<8x32xf32>
    %c32_91 = arith.constant 32 : index
    %c0_92 = arith.constant 0 : index
    %512 = vector.load %arg13[%c32_91, %c0_92] : memref<64x32xf32, #tpu.memory_space<vmem>>, vector<8x32xf32>
    tpu.vector_store %arg13[%c32_91, %c0_92], %511 {strides = array<i32>} : memref<64x32xf32, #tpu.memory_space<vmem>>, vector<8x32xf32>,
    %513 = arith.select %21, %446, %362 : vector<8x32xi1>, vector<8x32xf32>
    %c40_93 = arith.constant 40 : index
    %c0_94 = arith.constant 0 : index
    %514 = vector.load %arg13[%c40_93, %c0_94] : memref<64x32xf32, #tpu.memory_space<vmem>>, vector<8x32xf32>
    tpu.vector_store %arg13[%c40_93, %c0_94], %513 {strides = array<i32>} : memref<64x32xf32, #tpu.memory_space<vmem>>, vector<8x32xf32>,
    %515 = arith.select %21, %474, %334 : vector<8x32xi1>, vector<8x32xf32>
    %c48_95 = arith.constant 48 : index
    %c0_96 = arith.constant 0 : index
    %516 = vector.load %arg13[%c48_95, %c0_96] : memref<64x32xf32, #tpu.memory_space<vmem>>, vector<8x32xf32>
    tpu.vector_store %arg13[%c48_95, %c0_96], %515 {strides = array<i32>} : memref<64x32xf32, #tpu.memory_space<vmem>>, vector<8x32xf32>,
    %517 = arith.select %21, %502, %306 : vector<8x32xi1>, vector<8x32xf32>
    %c56_97 = arith.constant 56 : index
    %c0_98 = arith.constant 0 : index
    %518 = vector.load %arg13[%c56_97, %c0_98] : memref<64x32xf32, #tpu.memory_space<vmem>>, vector<8x32xf32>
    tpu.vector_store %arg13[%c56_97, %c0_98], %517 {strides = array<i32>} : memref<64x32xf32, #tpu.memory_space<vmem>>, vector<8x32xf32>,
    %c0_99 = arith.constant 0 : index
    %c0_100 = arith.constant 0 : index
    %519 = vector.load %arg13[%c0_99, %c0_100] : memref<64x32xf32, #tpu.memory_space<vmem>>, vector<64x32xf32>
    %c0_101 = arith.constant 0 : index
    %c0_102 = arith.constant 0 : index
    %520 = vector.load %arg10[%c0_101, %c0_102] : memref<32x128xf32, #tpu.memory_space<vmem>>, vector<32x128xf32>
    %cst_103 = arith.constant dense<0.000000e+00> : vector<64x128xf32>
    %521 = tpu.matmul %519, %520, %cst_103 {dimension_numbers = #tpu.dot_dimension_numbers<[1], [0], [0], [1], [0, 0, 1, 1], [], []>} : vector<64x32xf32>, vector<32x128xf32>, vector<64x128xf32> -> vector<64x128xf32>
    %c0_104 = arith.constant 0 : index
    %c0_105 = arith.constant 0 : index
    %522 = vector.load %arg11[%c0_104, %c0_105] : memref<1x128xf32, #tpu.memory_space<vmem>>, vector<1x128xf32>
    %523 = vector.broadcast %522 : vector<1x128xf32> to vector<64x128xf32>
    %524 = arith.addf %521, %523 : vector<64x128xf32>
    %c0_106 = arith.constant 0 : index
    %c0_107 = arith.constant 0 : index
    %525 = vector.load %arg12[%c0_106, %c0_107] : memref<64x128xf32, #tpu.memory_space<vmem>>, vector<64x128xf32>
    tpu.vector_store %arg12[%c0_106, %c0_107], %524 {strides = array<i32>} : memref<64x128xf32, #tpu.memory_space<vmem>>, vector<64x128xf32>,
    return
  }
}

</mosaic_0001>

<llo_original>
// kernel: tpu_custom_call.1
$region0: #{tpu_custom_call.1}
  #allocation0 [shape = 'u32[]', space=smem, size = 0x4, offset = 0x4, fixed_abs, tag = 'smem constant byte address 0x4 - core index']
  #allocation1 [shape = 'u32[144,128]{1,0:T(1,128)}', space=vmem, size = 0x12000, scoped, tag = 'internal scratch']
  #allocation2 [shape = 'f32[64,32]{1,0:T(8,128)}', space=vmem, size = 0x8000, scoped, tag = 'scratch operand']
  %s0 = inlined_call_operand.vmem [shape: f32[64,32], index: 0, kind: input, shape index: {}]
  %s1 = inlined_call_operand.vmem [shape: f32[64,32], index: 1, kind: input, shape index: {}]
  %s2 = inlined_call_operand.vmem [shape: f32[32,96], index: 2, kind: input, shape index: {}]
  %s3 = inlined_call_operand.vmem [shape: f32[1,96], index: 3, kind: input, shape index: {}]
  %s4 = inlined_call_operand.vmem [shape: f32[32,96], index: 4, kind: input, shape index: {}]
  %s5 = inlined_call_operand.vmem [shape: f32[1,32], index: 5, kind: input, shape index: {}]
  %s6 = inlined_call_operand.vmem [shape: f32[32,96], index: 6, kind: input, shape index: {}]
  %s7 = inlined_call_operand.vmem [shape: f32[1,96], index: 7, kind: input, shape index: {}]
  %s8 = inlined_call_operand.vmem [shape: f32[32,96], index: 8, kind: input, shape index: {}]
  %s9 = inlined_call_operand.vmem [shape: f32[1,32], index: 9, kind: input, shape index: {}]
  %s10 = inlined_call_operand.vmem [shape: f32[32,128], index: 10, kind: input, shape index: {}]
  %s11 = inlined_call_operand.vmem [shape: f32[1,128], index: 11, kind: input, shape index: {}]
  %s12 = inlined_call_operand.hbm [shape: f32[64,128], index: 12, kind: output, shape index: {}]
  %s13 = sld [smem:[#allocation0]]
  $region58: #{tpu_custom_call.1} parent=0
    _
  %s15 = ssub.s32 1, %s13
  %s16 = scalar_select 0, %s15, %s13
  $region1: #{tpu_custom_call.1} parent=0
    #allocation3 [shape = 'u8[32768]{0}', space=vmem, size = 0x8000, scoped, tag = 'output window, operand 0, single buffered']
    #allocation4 [shape = 's32[1]{0}', space=sflag, size = 0x4, scoped, tag = 'scoped memory for tpu_custom_call.1']
    %17 = vsyncpa [#allocation4], 0
    // Predicated region
    $region2: #{tpu_custom_call.1} parent=1 // pred_check
      _
    $region3: #{tpu_custom_call.1} parent=1 // pred_check_branch
      %19 = sbr.rel (0) target = $region5
    $region4: #{tpu_custom_call.1} parent=1 // pred_region
      _
    $region5: #{tpu_custom_call.1} parent=1 // pred_fallthru
      _
    // Predicated region
    $region6: #{tpu_custom_call.1} parent=1 // pred_check
      _
    $region7: #{tpu_custom_call.1} parent=1 // pred_check_branch
      %21 = sbr.rel (0) target = $region9
    $region8: #{tpu_custom_call.1} parent=1 // pred_region
      _
    $region9: #{tpu_custom_call.1} parent=1 // pred_fallthru
      _
    // Predicated region
    $region10: #{tpu_custom_call.1} parent=1 // pred_check
      _
    $region11: #{tpu_custom_call.1} parent=1 // pred_check_branch
      %23 = sbr.rel (0) target = $region13
    $region12: #{tpu_custom_call.1} parent=1 // pred_region
      _
    $region13: #{tpu_custom_call.1} parent=1 // pred_fallthru
      _
    // Predicated region
    $region14: #{tpu_custom_call.1} parent=1 // pred_check
      _
    $region15: #{tpu_custom_call.1} parent=1 // pred_check_branch
      %25 = sbr.rel (0) target = $region17
    $region16: #{tpu_custom_call.1} parent=1 // pred_region
      _
    $region17: #{tpu_custom_call.1} parent=1 // pred_fallthru
      _
    // Predicated region
    $region18: #{tpu_custom_call.1} parent=1 // pred_check
      _
    $region19: #{tpu_custom_call.1} parent=1 // pred_check_branch
      %27 = sbr.rel (0) target = $region21
    $region20: #{tpu_custom_call.1} parent=1 // pred_region
      _
    $region21: #{tpu_custom_call.1} parent=1 // pred_fallthru
      _
    // Predicated region
    $region22: #{tpu_custom_call.1} parent=1 // pred_check
      _
    $region23: #{tpu_custom_call.1} parent=1 // pred_check_branch
      %29 = sbr.rel (0) target = $region25
    $region24: #{tpu_custom_call.1} parent=1 // pred_region
      _
    $region25: #{tpu_custom_call.1} parent=1 // pred_fallthru
      _
    // Predicated region
    $region26: #{tpu_custom_call.1} parent=1 // pred_check
      _
    $region27: #{tpu_custom_call.1} parent=1 // pred_check_branch
      %31 = sbr.rel (0) target = $region29
    $region28: #{tpu_custom_call.1} parent=1 // pred_region
      _
    $region29: #{tpu_custom_call.1} parent=1 // pred_fallthru
      _
    // Predicated region
    $region30: #{tpu_custom_call.1} parent=1 // pred_check
      _
    $region31: #{tpu_custom_call.1} parent=1 // pred_check_branch
      %33 = sbr.rel (0) target = $region33
    $region32: #{tpu_custom_call.1} parent=1 // pred_region
      _
    $region33: #{tpu_custom_call.1} parent=1 // pred_fallthru
      _
    // Predicated region
    $region34: #{tpu_custom_call.1} parent=1 // pred_check
      _
    $region35: #{tpu_custom_call.1} parent=1 // pred_check_branch
      %35 = sbr.rel (0) target = $region37
    $region36: #{tpu_custom_call.1} parent=1 // pred_region
      _
    $region37: #{tpu_custom_call.1} parent=1 // pred_fallthru
      _
    // Predicated region
    $region38: #{tpu_custom_call.1} parent=1 // pred_check
      _
    $region39: #{tpu_custom_call.1} parent=1 // pred_check_branch
      %37 = sbr.rel (0) target = $region41
    $region40: #{tpu_custom_call.1} parent=1 // pred_region
      _
    $region41: #{tpu_custom_call.1} parent=1 // pred_fallthru
      _
    // Predicated region
    $region42: #{tpu_custom_call.1} parent=1 // pred_check
      _
    $region43: #{tpu_custom_call.1} parent=1 // pred_check_branch
      %39 = sbr.rel (0) target = $region45
    $region44: #{tpu_custom_call.1} parent=1 // pred_region
      _
    $region45: #{tpu_custom_call.1} parent=1 // pred_fallthru
      _
    // Predicated region
    $region46: #{tpu_custom_call.1} parent=1 // pred_check
      _
    $region47: #{tpu_custom_call.1} parent=1 // pred_check_branch
      %41 = sbr.rel (0) target = $region49
    $region48: #{tpu_custom_call.1} parent=1 // pred_region
      _
    $region49: #{tpu_custom_call.1} parent=1 // pred_fallthru
      _
    %v42 = vlaneseq
    %v43 = vand.u32 %v42, 127
    %vm44 = vcmp.lt.s32.totalorder %v43, 0
    %v45 = vsub.s32 0, %v43
    %v46 = vsel %vm44, %v45, %v43
    %v47 = vshrl.u32 %v46, 5
    %v48 = vand.u32 %v46, 31
    %v49 = vsub.s32 0, %v48
    %v50 = vsel %vm44, %v49, %v48
    %vm51 = vcmp.ne.s32.totalorder %v50, 0
    %vm52 = vcmp.lt.s32.totalorder %v50, 0
    %vm53 = vmand %vm52, %vm51
    %v54 = vadd.s32 %v50, 32
    %v55 = vsel %vm53, %v54, %v50
    %vm56 = vcmp.lt.s32.totalorder %v55, 16
    %vm57 = vcmp.lt.s32.totalorder %v43, 16
    %v58 = vld [vmem:[%s1] sm:$0xff]
    %v59 = vld [vmem:[%s1 + $0x8] sm:$0xff]
    %v60 = vld [vmem:[%s1 + $0x10] sm:$0xff]
    %v61 = vld [vmem:[%s1 + $0x18] sm:$0xff]
    %v62 = vld [vmem:[%s1 + $0x20] sm:$0xff]
    %v63 = vld [vmem:[%s1 + $0x28] sm:$0xff]
    %v64 = vld [vmem:[%s1 + $0x30] sm:$0xff]
    %v65 = vld [vmem:[%s1 + $0x38] sm:$0xff]
    %v66 = vld [vmem:[%s0] sm:$0xff]
    %v67 = vld [vmem:[%s0 + $0x8] sm:$0xff]
    %v68 = vld [vmem:[%s0 + $0x10] sm:$0xff]
    %v69 = vld [vmem:[%s0 + $0x18] sm:$0xff]
    %v70 = vld [vmem:[%s0 + $0x20] sm:$0xff]
    %v71 = vld [vmem:[%s0 + $0x28] sm:$0xff]
    %v72 = vld [vmem:[%s0 + $0x30] sm:$0xff]
    %v73 = vld [vmem:[%s0 + $0x38] sm:$0xff]
    %v74 = vld [vmem:[%s2] sm:$0xff]
    %v75 = vld [vmem:[%s2 + $0x8] sm:$0xff]
    %v76 = vld [vmem:[%s2 + $0x10] sm:$0xff]
    %v77 = vld [vmem:[%s2 + $0x18] sm:$0xff]
    %v78 = vld [vmem:[%s3] sm:$0x1]
    %v80 = vlaneseq
    %v81 = vshrl.u32 %v80, 7
    %v82 = vsub.s32 0, %v81
    %v83 = vrot.slane %v78, %v82
    %vm85 = vcmask 261120
    %v87 = vsel %vm85, %v66, 0
    %v90 = vsel %vm85, %v67, 0
    %v93 = vsel %vm85, %v68, 0
    %v96 = vsel %vm85, %v69, 0
    %v99 = vsel %vm85, %v70, 0
    %v102 = vsel %vm85, %v71, 0
    %v105 = vsel %vm85, %v72, 0
    %v108 = vsel %vm85, %v73, 0
    %110 = vmatprep.subr.mxu0 0.0
    %111 = vmatpush1.msra.mxu0 %v74
    %112 = vmatprep.subr.mxu0 0.0
    %113 = vmatpush1.msra.mxu0 %v75
    %114 = vmatprep.subr.mxu0 0.0
    %115 = vmatpush1.msra.mxu0 %v76
    %116 = vmatprep.subr.mxu0 0.0
    %117 = vmatpush1.msra.mxu0 %v77
    %118 = vmatprep.subr.mxu0 0.0
    %119 = vmatpush1.msra.mxu0 0.0
    %120 = vmatprep.subr.mxu0 0.0
    %121 = vmatpush1.msra.mxu0 0.0
    %122 = vmatprep.subr.mxu0 0.0
    %123 = vmatpush1.msra.mxu0 0.0
    %124 = vmatprep.subr.mxu0 0.0
    %125 = vmatpush1.msra.mxu0 0.0
    %126 = vmatprep.subr.mxu0 0.0
    %127 = vmatpush1.msra.mxu0 0.0
    %128 = vmatprep.subr.mxu0 0.0
    %129 = vmatpush1.msra.mxu0 0.0
    %130 = vmatprep.subr.mxu0 0.0
    %131 = vmatpush1.msra.mxu0 0.0
    %132 = vmatprep.subr.mxu0 0.0
    %133 = vmatpush1.msra.mxu0 0.0
    %134 = vmatprep.subr.mxu0 0.0
    %135 = vmatpush1.msra.mxu0 0.0
    %136 = vmatprep.subr.mxu0 0.0
    %137 = vmatpush1.msra.mxu0 0.0
    %138 = vmatprep.subr.mxu0 0.0
    %139 = vmatpush1.msra.mxu0 0.0
    %140 = vmatprep.subr.mxu0 0.0
    %141 = vmatpush1.msra.mxu0 0.0
    %142 = vmatprep.subr.mxu0 0.0
    %143 = vmatpush1.msra.mxu0 0.0
    %144 = vmatprep.subr.mxu0 0.0
    %145 = vmatpush1.msra.mxu0 0.0
    %146 = vmatprep.subr.mxu0 0.0
    %147 = vmatpush1.msra.mxu0 0.0
    %148 = vmatprep.subr.mxu0 0.0
    %149 = vmatpush1.msra.mxu0 0.0
    %150 = vmatprep.subr.mxu0 0.0
    %151 = vmatpush1.msra.mxu0 0.0
    %152 = vmatprep.subr.mxu0 0.0
    %153 = vmatpush1.msra.mxu0 0.0
    %154 = vmatprep.subr.mxu0 0.0
    %155 = vmatpush1.msra.mxu0 0.0
    %156 = vmatprep.subr.mxu0 0.0
    %157 = vmatpush1.msra.mxu0 0.0
    %158 = vmatprep.subr.mxu0 0.0
    %159 = vmatpush1.msra.mxu0 0.0
    %160 = vmatprep.subr.mxu0 0.0
    %161 = vmatpush1.msra.mxu0 0.0
    %162 = vmatprep.subr.mxu0 0.0
    %163 = vmatpush1.msra.mxu0 0.0
    %164 = vmatprep.subr.mxu0 0.0
    %165 = vmatpush1.msra.mxu0 0.0
    %166 = vmatprep.subr.mxu0 0.0
    %167 = vmatpush1.msra.mxu0 0.0
    %168 = vmatprep.subr.mxu0 0.0
    %169 = vmatpush1.msra.mxu0 0.0
    %170 = vmatprep.subr.mxu0 0.0
    %171 = vmatpush1.msra.mxu0 0.0
    %172 = vmatprep.subr.mxu0 0.0
    %173 = vmatpush1.msra.mxu0 0.0
    %174 = vmatprep.mubr.f32.mxu0 0.0
    %175 = vmatmul.mubr.f32.gmra.mrb[0].mxu0 %v87
    %v176 = vpop.f32.mrb[0].mxu0
    %v177 = vadd.f32 %v83, %v176
    %v178 = vpop.f32.mrb[0].mxu0
    %179 = vmatprep.mubr.f32.mxu0 0.0
    %180 = vmatmul.mubr.f32.gmra.mrb[0].mxu0 %v90
    %v181 = vpop.f32.mrb[0].mxu0
    %v182 = vadd.f32 %v83, %v181
    %v183 = vpop.f32.mrb[0].mxu0
    %184 = vmatprep.mubr.f32.mxu0 0.0
    %185 = vmatmul.mubr.f32.gmra.mrb[0].mxu0 %v93
    %v186 = vpop.f32.mrb[0].mxu0
    %v187 = vadd.f32 %v83, %v186
    %v188 = vpop.f32.mrb[0].mxu0
    %189 = vmatprep.mubr.f32.mxu0 0.0
    %190 = vmatmul.mubr.f32.gmra.mrb[0].mxu0 %v96
    %v191 = vpop.f32.mrb[0].mxu0
    %v192 = vadd.f32 %v83, %v191
    %v193 = vpop.f32.mrb[0].mxu0
    %194 = vmatprep.mubr.f32.mxu0 0.0
    %195 = vmatmul.mubr.f32.gmra.mrb[0].mxu0 %v99
    %v196 = vpop.f32.mrb[0].mxu0
    %v197 = vadd.f32 %v83, %v196
    %v198 = vpop.f32.mrb[0].mxu0
    %199 = vmatprep.mubr.f32.mxu0 0.0
    %200 = vmatmul.mubr.f32.gmra.mrb[0].mxu0 %v102
    %v201 = vpop.f32.mrb[0].mxu0
    %v202 = vadd.f32 %v83, %v201
    %v203 = vpop.f32.mrb[0].mxu0
    %204 = vmatprep.mubr.f32.mxu0 0.0
    %205 = vmatmul.mubr.f32.gmra.mrb[0].mxu0 %v105
    %v206 = vpop.f32.mrb[0].mxu0
    %v207 = vadd.f32 %v83, %v206
    %v208 = vpop.f32.mrb[0].mxu0
    %209 = vmatprep.mubr.f32.mxu0 0.0
    %210 = vmatmul.mubr.f32.gmra.mrb[0].mxu0 %v108
    %v211 = vpop.f32.mrb[0].mxu0
    %v212 = vadd.f32 %v83, %v211
    %v213 = vpop.f32.mrb[0].mxu0
    %214 = vdwg.mxu0
    %v215 = vld [vmem:[%s4] sm:$0xff]
    %v216 = vld [vmem:[%s4 + $0x8] sm:$0xff]
    %v217 = vld [vmem:[%s4 + $0x10] sm:$0xff]
    %v218 = vld [vmem:[%s4 + $0x18] sm:$0xff]
    %v219 = vld [vmem:[%s5] sm:$0x1]
    %v221 = vlaneseq
    %v222 = vshrl.u32 %v221, 7
    %v223 = vsub.s32 0, %v222
    %v224 = vrot.slane %v219, %v223
    %v226 = vsel %vm85, 0.0, 0
    %228 = vmatprep.subr.mxu0 0.0
    %229 = vmatpush1.msra.mxu0 %v215
    %230 = vmatprep.subr.mxu0 0.0
    %231 = vmatpush1.msra.mxu0 %v216
    %232 = vmatprep.subr.mxu0 0.0
    %233 = vmatpush1.msra.mxu0 %v217
    %234 = vmatprep.subr.mxu0 0.0
    %235 = vmatpush1.msra.mxu0 %v218
    %236 = vmatprep.subr.mxu0 0.0
    %237 = vmatpush1.msra.mxu0 0.0
    %238 = vmatprep.subr.mxu0 0.0
    %239 = vmatpush1.msra.mxu0 0.0
    %240 = vmatprep.subr.mxu0 0.0
    %241 = vmatpush1.msra.mxu0 0.0
    %242 = vmatprep.subr.mxu0 0.0
    %243 = vmatpush1.msra.mxu0 0.0
    %244 = vmatprep.subr.mxu0 0.0
    %245 = vmatpush1.msra.mxu0 0.0
    %246 = vmatprep.subr.mxu0 0.0
    %247 = vmatpush1.msra.mxu0 0.0
    %248 = vmatprep.subr.mxu0 0.0
    %249 = vmatpush1.msra.mxu0 0.0
    %250 = vmatprep.subr.mxu0 0.0
    %251 = vmatpush1.msra.mxu0 0.0
    %252 = vmatprep.subr.mxu0 0.0
    %253 = vmatpush1.msra.mxu0 0.0
    %254 = vmatprep.subr.mxu0 0.0
    %255 = vmatpush1.msra.mxu0 0.0
    %256 = vmatprep.subr.mxu0 0.0
    %257 = vmatpush1.msra.mxu0 0.0
    %258 = vmatprep.subr.mxu0 0.0
    %259 = vmatpush1.msra.mxu0 0.0
    %260 = vmatprep.subr.mxu0 0.0
    %261 = vmatpush1.msra.mxu0 0.0
    %262 = vmatprep.subr.mxu0 0.0
    %263 = vmatpush1.msra.mxu0 0.0
    %264 = vmatprep.subr.mxu0 0.0
    %265 = vmatpush1.msra.mxu0 0.0
    %266 = vmatprep.subr.mxu0 0.0
    %267 = vmatpush1.msra.mxu0 0.0
    %268 = vmatprep.subr.mxu0 0.0
    %269 = vmatpush1.msra.mxu0 0.0
    %270 = vmatprep.subr.mxu0 0.0
    %271 = vmatpush1.msra.mxu0 0.0
    %272 = vmatprep.subr.mxu0 0.0
    %273 = vmatpush1.msra.mxu0 0.0
    %274 = vmatprep.subr.mxu0 0.0
    %275 = vmatpush1.msra.mxu0 0.0
    %276 = vmatprep.subr.mxu0 0.0
    %277 = vmatpush1.msra.mxu0 0.0
    %278 = vmatprep.subr.mxu0 0.0
    %279 = vmatpush1.msra.mxu0 0.0
    %280 = vmatprep.subr.mxu0 0.0
    %281 = vmatpush1.msra.mxu0 0.0
    %282 = vmatprep.subr.mxu0 0.0
    %283 = vmatpush1.msra.mxu0 0.0
    %284 = vmatprep.subr.mxu0 0.0
    %285 = vmatpush1.msra.mxu0 0.0
    %286 = vmatprep.subr.mxu0 0.0
    %287 = vmatpush1.msra.mxu0 0.0
    %288 = vmatprep.subr.mxu0 0.0
    %289 = vmatpush1.msra.mxu0 0.0
    %290 = vmatprep.subr.mxu0 0.0
    %291 = vmatpush1.msra.mxu0 0.0
    %292 = vmatprep.mubr.f32.mxu0 0.0
    %293 = vmatmul.mubr.f32.gmra.mrb[0].mxu0 %v226
    %v294 = vpop.f32.mrb[0].mxu0
    %v295 = vadd.f32 0.0, %v294
    %v296 = vpop.f32.mrb[0].mxu0
    %297 = vdwg.mxu0
    %v298 = vsel %vm56, %v177, %v212
    %v299 = vadd.f32 %v298, %v295
    %v300 = vxor.u32 %v299, 2147483648
    %v301 = vmul.f32 %v300, 1.442695
    %v302 = vpow.pop %v301
    %v303 = vadd.f32 %v302, 1.0
    %v304 = vrcp.pop %v303
    %v305 = vmul.f32 1.0, %v304
    %306 = vrot.lane.b32.xlu0 %v224, 64
    %v307 = vpop.permute.xlu0 %306
    %v309 = vadd.f32 %v295, %v307
    %311 = vrot.lane.b32.xlu0 %v309, 64
    %v312 = vpop.permute.xlu0 %311
    %v314 = vmul.f32 %v305, %v312
    %316 = vrot.lane.b32.xlu0 %v314, 64
    %v317 = vpop.permute.xlu0 %316
    %v319 = vadd.f32 %v298, %v317
    %v320 = vtanh.pop %v319
    %v321 = vsub.f32 0.0, %v320
    %323 = vrot.lane.b32.xlu0 %v321, 96
    %v324 = vpop.permute.xlu0 %323
    %v326 = vmul.f32 %v305, %v324
    %328 = vrot.lane.b32.xlu0 %v326, 32
    %v329 = vpop.permute.xlu0 %328
    %v331 = vadd.f32 %v320, %v329
    %333 = vrot.lane.b32.xlu0 %v331, 64
    %v334 = vpop.permute.xlu0 %333
    %v336 = vmul.f32 %v58, %v334
    %vm337 = vcmp.gt.f32.partialorder %v58, 0.0
    %v338 = vsel %vm337, %v334, 0.0
    %v340 = vsel %vm85, %v338, 0
    %342 = vmatprep.subr.mxu0 0.0
    %343 = vmatpush1.msra.mxu0 %v215
    %344 = vmatprep.subr.mxu0 0.0
    %345 = vmatpush1.msra.mxu0 %v216
    %346 = vmatprep.subr.mxu0 0.0
    %347 = vmatpush1.msra.mxu0 %v217
    %348 = vmatprep.subr.mxu0 0.0
    %349 = vmatpush1.msra.mxu0 %v218
    %350 = vmatprep.subr.mxu0 0.0
    %351 = vmatpush1.msra.mxu0 0.0
    %352 = vmatprep.subr.mxu0 0.0
    %353 = vmatpush1.msra.mxu0 0.0
    %354 = vmatprep.subr.mxu0 0.0
    %355 = vmatpush1.msra.mxu0 0.0
    %356 = vmatprep.subr.mxu0 0.0
    %357 = vmatpush1.msra.mxu0 0.0
    %358 = vmatprep.subr.mxu0 0.0
    %359 = vmatpush1.msra.mxu0 0.0
    %360 = vmatprep.subr.mxu0 0.0
    %361 = vmatpush1.msra.mxu0 0.0
    %362 = vmatprep.subr.mxu0 0.0
    %363 = vmatpush1.msra.mxu0 0.0
    %364 = vmatprep.subr.mxu0 0.0
    %365 = vmatpush1.msra.mxu0 0.0
    %366 = vmatprep.subr.mxu0 0.0
    %367 = vmatpush1.msra.mxu0 0.0
    %368 = vmatprep.subr.mxu0 0.0
    %369 = vmatpush1.msra.mxu0 0.0
    %370 = vmatprep.subr.mxu0 0.0
    %371 = vmatpush1.msra.mxu0 0.0
    %372 = vmatprep.subr.mxu0 0.0
    %373 = vmatpush1.msra.mxu0 0.0
    %374 = vmatprep.subr.mxu0 0.0
    %375 = vmatpush1.msra.mxu0 0.0
    %376 = vmatprep.subr.mxu0 0.0
    %377 = vmatpush1.msra.mxu0 0.0
    %378 = vmatprep.subr.mxu0 0.0
    %379 = vmatpush1.msra.mxu0 0.0
    %380 = vmatprep.subr.mxu0 0.0
    %381 = vmatpush1.msra.mxu0 0.0
    %382 = vmatprep.subr.mxu0 0.0
    %383 = vmatpush1.msra.mxu0 0.0
    %384 = vmatprep.subr.mxu0 0.0
    %385 = vmatpush1.msra.mxu0 0.0
    %386 = vmatprep.subr.mxu0 0.0
    %387 = vmatpush1.msra.mxu0 0.0
    %388 = vmatprep.subr.mxu0 0.0
    %389 = vmatpush1.msra.mxu0 0.0
    %390 = vmatprep.subr.mxu0 0.0
    %391 = vmatpush1.msra.mxu0 0.0
    %392 = vmatprep.subr.mxu0 0.0
    %393 = vmatpush1.msra.mxu0 0.0
    %394 = vmatprep.subr.mxu0 0.0
    %395 = vmatpush1.msra.mxu0 0.0
    %396 = vmatprep.subr.mxu0 0.0
    %397 = vmatpush1.msra.mxu0 0.0
    %398 = vmatprep.subr.mxu0 0.0
    %399 = vmatpush1.msra.mxu0 0.0
    %400 = vmatprep.subr.mxu0 0.0
    %401 = vmatpush1.msra.mxu0 0.0
    %402 = vmatprep.subr.mxu0 0.0
    %403 = vmatpush1.msra.mxu0 0.0
    %404 = vmatprep.subr.mxu0 0.0
    %405 = vmatpush1.msra.mxu0 0.0
    %406 = vmatprep.mubr.f32.mxu0 0.0
    %407 = vmatmul.mubr.f32.gmra.mrb[0].mxu0 %v340
    %v408 = vpop.f32.mrb[0].mxu0
    %v409 = vadd.f32 0.0, %v408
    %v410 = vpop.f32.mrb[0].mxu0
    %411 = vdwg.mxu0
    %v412 = vsel %vm56, %v182, %v207
    %v413 = vadd.f32 %v412, %v409
    %v414 = vxor.u32 %v413, 2147483648
    %v415 = vmul.f32 %v414, 1.442695
    %v416 = vpow.pop %v415
    %v417 = vadd.f32 %v416, 1.0
    %v418 = vrcp.pop %v417
    %v419 = vmul.f32 1.0, %v418
    %v420 = vadd.f32 %v409, %v307
    %422 = vrot.lane.b32.xlu0 %v420, 64
    %v423 = vpop.permute.xlu0 %422
    %v425 = vmul.f32 %v419, %v423
    %427 = vrot.lane.b32.xlu0 %v425, 64
    %v428 = vpop.permute.xlu0 %427
    %v430 = vadd.f32 %v412, %v428
    %v431 = vtanh.pop %v430
    %433 = vrot.lane.b32.xlu0 %v431, 64
    %v434 = vpop.permute.xlu0 %433
    %v436 = vsub.f32 %v338, %v434
    %438 = vrot.lane.b32.xlu0 %v436, 32
    %v439 = vpop.permute.xlu0 %438
    %v441 = vmul.f32 %v419, %v439
    %443 = vrot.lane.b32.xlu0 %v441, 32
    %v444 = vpop.permute.xlu0 %443
    %v446 = vadd.f32 %v431, %v444
    %448 = vrot.lane.b32.xlu0 %v446, 64
    %v449 = vpop.permute.xlu0 %448
    %v451 = vmul.f32 %v59, %v449
    %vm452 = vcmp.gt.f32.partialorder %v59, 0.0
    %v453 = vsel %vm452, %v449, %v338
    %v455 = vsel %vm85, %v453, 0
    %457 = vmatprep.subr.mxu0 0.0
    %458 = vmatpush1.msra.mxu0 %v215
    %459 = vmatprep.subr.mxu0 0.0
    %460 = vmatpush1.msra.mxu0 %v216
    %461 = vmatprep.subr.mxu0 0.0
    %462 = vmatpush1.msra.mxu0 %v217
    %463 = vmatprep.subr.mxu0 0.0
    %464 = vmatpush1.msra.mxu0 %v218
    %465 = vmatprep.subr.mxu0 0.0
    %466 = vmatpush1.msra.mxu0 0.0
    %467 = vmatprep.subr.mxu0 0.0
    %468 = vmatpush1.msra.mxu0 0.0
    %469 = vmatprep.subr.mxu0 0.0
    %470 = vmatpush1.msra.mxu0 0.0
    %471 = vmatprep.subr.mxu0 0.0
    %472 = vmatpush1.msra.mxu0 0.0
    %473 = vmatprep.subr.mxu0 0.0
    %474 = vmatpush1.msra.mxu0 0.0
    %475 = vmatprep.subr.mxu0 0.0
    %476 = vmatpush1.msra.mxu0 0.0
    %477 = vmatprep.subr.mxu0 0.0
    %478 = vmatpush1.msra.mxu0 0.0
    %479 = vmatprep.subr.mxu0 0.0
    %480 = vmatpush1.msra.mxu0 0.0
    %481 = vmatprep.subr.mxu0 0.0
    %482 = vmatpush1.msra.mxu0 0.0
    %483 = vmatprep.subr.mxu0 0.0
    %484 = vmatpush1.msra.mxu0 0.0
    %485 = vmatprep.subr.mxu0 0.0
    %486 = vmatpush1.msra.mxu0 0.0
    %487 = vmatprep.subr.mxu0 0.0
    %488 = vmatpush1.msra.mxu0 0.0
    %489 = vmatprep.subr.mxu0 0.0
    %490 = vmatpush1.msra.mxu0 0.0
    %491 = vmatprep.subr.mxu0 0.0
    %492 = vmatpush1.msra.mxu0 0.0
    %493 = vmatprep.subr.mxu0 0.0
    %494 = vmatpush1.msra.mxu0 0.0
    %495 = vmatprep.subr.mxu0 0.0
    %496 = vmatpush1.msra.mxu0 0.0
    %497 = vmatprep.subr.mxu0 0.0
    %498 = vmatpush1.msra.mxu0 0.0
    %499 = vmatprep.subr.mxu0 0.0
    %500 = vmatpush1.msra.mxu0 0.0
    %501 = vmatprep.subr.mxu0 0.0
    %502 = vmatpush1.msra.mxu0 0.0
    %503 = vmatprep.subr.mxu0 0.0
    %504 = vmatpush1.msra.mxu0 0.0
    %505 = vmatprep.subr.mxu0 0.0
    %506 = vmatpush1.msra.mxu0 0.0
    %507 = vmatprep.subr.mxu0 0.0
    %508 = vmatpush1.msra.mxu0 0.0
    %509 = vmatprep.subr.mxu0 0.0
    %510 = vmatpush1.msra.mxu0 0.0
    %511 = vmatprep.subr.mxu0 0.0
    %512 = vmatpush1.msra.mxu0 0.0
    %513 = vmatprep.subr.mxu0 0.0
    %514 = vmatpush1.msra.mxu0 0.0
    %515 = vmatprep.subr.mxu0 0.0
    %516 = vmatpush1.msra.mxu0 0.0
    %517 = vmatprep.subr.mxu0 0.0
    %518 = vmatpush1.msra.mxu0 0.0
    %519 = vmatprep.subr.mxu0 0.0
    %520 = vmatpush1.msra.mxu0 0.0
    %521 = vmatprep.mubr.f32.mxu0 0.0
    %522 = vmatmul.mubr.f32.gmra.mrb[0].mxu0 %v455
    %v523 = vpop.f32.mrb[0].mxu0
    %v524 = vadd.f32 0.0, %v523
    %v525 = vpop.f32.mrb[0].mxu0
    %526 = vdwg.mxu0
    %v527 = vsel %vm56, %v187, %v202
    %v528 = vadd.f32 %v527, %v524
    %v529 = vxor.u32 %v528, 2147483648
    %v530 = vmul.f32 %v529, 1.442695
    %v531 = vpow.pop %v530
    %v532 = vadd.f32 %v531, 1.0
    %v533 = vrcp.pop %v532
    %v534 = vmul.f32 1.0, %v533
    %v535 = vadd.f32 %v524, %v307
    %537 = vrot.lane.b32.xlu0 %v535, 64
    %v538 = vpop.permute.xlu0 %537
    %v540 = vmul.f32 %v534, %v538
    %542 = vrot.lane.b32.xlu0 %v540, 64
    %v543 = vpop.permute.xlu0 %542
    %v545 = vadd.f32 %v527, %v543
    %v546 = vtanh.pop %v545
    %548 = vrot.lane.b32.xlu0 %v546, 64
    %v549 = vpop.permute.xlu0 %548
    %v551 = vsub.f32 %v453, %v549
    %553 = vrot.lane.b32.xlu0 %v551, 32
    %v554 = vpop.permute.xlu0 %553
    %v556 = vmul.f32 %v534, %v554
    %558 = vrot.lane.b32.xlu0 %v556, 32
    %v559 = vpop.permute.xlu0 %558
    %v561 = vadd.f32 %v546, %v559
    %563 = vrot.lane.b32.xlu0 %v561, 64
    %v564 = vpop.permute.xlu0 %563
    %v566 = vmul.f32 %v60, %v564
    %vm567 = vcmp.gt.f32.partialorder %v60, 0.0
    %v568 = vsel %vm567, %v564, %v453
    %v570 = vsel %vm85, %v568, 0
    %572 = vmatprep.subr.mxu0 0.0
    %573 = vmatpush1.msra.mxu0 %v215
    %574 = vmatprep.subr.mxu0 0.0
    %575 = vmatpush1.msra.mxu0 %v216
    %576 = vmatprep.subr.mxu0 0.0
    %577 = vmatpush1.msra.mxu0 %v217
    %578 = vmatprep.subr.mxu0 0.0
    %579 = vmatpush1.msra.mxu0 %v218
    %580 = vmatprep.subr.mxu0 0.0
    %581 = vmatpush1.msra.mxu0 0.0
    %582 = vmatprep.subr.mxu0 0.0
    %583 = vmatpush1.msra.mxu0 0.0
    %584 = vmatprep.subr.mxu0 0.0
    %585 = vmatpush1.msra.mxu0 0.0
    %586 = vmatprep.subr.mxu0 0.0
    %587 = vmatpush1.msra.mxu0 0.0
    %588 = vmatprep.subr.mxu0 0.0
    %589 = vmatpush1.msra.mxu0 0.0
    %590 = vmatprep.subr.mxu0 0.0
    %591 = vmatpush1.msra.mxu0 0.0
    %592 = vmatprep.subr.mxu0 0.0
    %593 = vmatpush1.msra.mxu0 0.0
    %594 = vmatprep.subr.mxu0 0.0
    %595 = vmatpush1.msra.mxu0 0.0
    %596 = vmatprep.subr.mxu0 0.0
    %597 = vmatpush1.msra.mxu0 0.0
    %598 = vmatprep.subr.mxu0 0.0
    %599 = vmatpush1.msra.mxu0 0.0
    %600 = vmatprep.subr.mxu0 0.0
    %601 = vmatpush1.msra.mxu0 0.0
    %602 = vmatprep.subr.mxu0 0.0
    %603 = vmatpush1.msra.mxu0 0.0
    %604 = vmatprep.subr.mxu0 0.0
    %605 = vmatpush1.msra.mxu0 0.0
    %606 = vmatprep.subr.mxu0 0.0
    %607 = vmatpush1.msra.mxu0 0.0
    %608 = vmatprep.subr.mxu0 0.0
    %609 = vmatpush1.msra.mxu0 0.0
    %610 = vmatprep.subr.mxu0 0.0
    %611 = vmatpush1.msra.mxu0 0.0
    %612 = vmatprep.subr.mxu0 0.0
    %613 = vmatpush1.msra.mxu0 0.0
    %614 = vmatprep.subr.mxu0 0.0
    %615 = vmatpush1.msra.mxu0 0.0
    %616 = vmatprep.subr.mxu0 0.0
    %617 = vmatpush1.msra.mxu0 0.0
    %618 = vmatprep.subr.mxu0 0.0
    %619 = vmatpush1.msra.mxu0 0.0
    %620 = vmatprep.subr.mxu0 0.0
    %621 = vmatpush1.msra.mxu0 0.0
    %622 = vmatprep.subr.mxu0 0.0
    %623 = vmatpush1.msra.mxu0 0.0
    %624 = vmatprep.subr.mxu0 0.0
    %625 = vmatpush1.msra.mxu0 0.0
    %626 = vmatprep.subr.mxu0 0.0
    %627 = vmatpush1.msra.mxu0 0.0
    %628 = vmatprep.subr.mxu0 0.0
    %629 = vmatpush1.msra.mxu0 0.0
    %630 = vmatprep.subr.mxu0 0.0
    %631 = vmatpush1.msra.mxu0 0.0
    %632 = vmatprep.subr.mxu0 0.0
    %633 = vmatpush1.msra.mxu0 0.0
    %634 = vmatprep.subr.mxu0 0.0
    %635 = vmatpush1.msra.mxu0 0.0
    %636 = vmatprep.mubr.f32.mxu0 0.0
    %637 = vmatmul.mubr.f32.gmra.mrb[0].mxu0 %v570
    %v638 = vpop.f32.mrb[0].mxu0
    %v639 = vadd.f32 0.0, %v638
    %v640 = vpop.f32.mrb[0].mxu0
    %641 = vdwg.mxu0
    %v642 = vsel %vm56, %v192, %v197
    %v643 = vadd.f32 %v642, %v639
    %v644 = vxor.u32 %v643, 2147483648
    %v645 = vmul.f32 %v644, 1.442695
    %v646 = vpow.pop %v645
    %v647 = vadd.f32 %v646, 1.0
    %v648 = vrcp.pop %v647
    %v649 = vmul.f32 1.0, %v648
    %v650 = vadd.f32 %v639, %v307
    %652 = vrot.lane.b32.xlu0 %v650, 64
    %v653 = vpop.permute.xlu0 %652
    %v655 = vmul.f32 %v649, %v653
    %657 = vrot.lane.b32.xlu0 %v655, 64
    %v658 = vpop.permute.xlu0 %657
    %v660 = vadd.f32 %v642, %v658
    %v661 = vtanh.pop %v660
    %663 = vrot.lane.b32.xlu0 %v661, 64
    %v664 = vpop.permute.xlu0 %663
    %v666 = vsub.f32 %v568, %v664
    %668 = vrot.lane.b32.xlu0 %v666, 32
    %v669 = vpop.permute.xlu0 %668
    %v671 = vmul.f32 %v649, %v669
    %673 = vrot.lane.b32.xlu0 %v671, 32
    %v674 = vpop.permute.xlu0 %673
    %v676 = vadd.f32 %v661, %v674
    %678 = vrot.lane.b32.xlu0 %v676, 64
    %v679 = vpop.permute.xlu0 %678
    %v681 = vmul.f32 %v61, %v679
    %vm682 = vcmp.gt.f32.partialorder %v61, 0.0
    %v683 = vsel %vm682, %v679, %v568
    %v685 = vsel %vm85, %v683, 0
    %687 = vmatprep.subr.mxu0 0.0
    %688 = vmatpush1.msra.mxu0 %v215
    %689 = vmatprep.subr.mxu0 0.0
    %690 = vmatpush1.msra.mxu0 %v216
    %691 = vmatprep.subr.mxu0 0.0
    %692 = vmatpush1.msra.mxu0 %v217
    %693 = vmatprep.subr.mxu0 0.0
    %694 = vmatpush1.msra.mxu0 %v218
    %695 = vmatprep.subr.mxu0 0.0
    %696 = vmatpush1.msra.mxu0 0.0
    %697 = vmatprep.subr.mxu0 0.0
    %698 = vmatpush1.msra.mxu0 0.0
    %699 = vmatprep.subr.mxu0 0.0
    %700 = vmatpush1.msra.mxu0 0.0
    %701 = vmatprep.subr.mxu0 0.0
    %702 = vmatpush1.msra.mxu0 0.0
    %703 = vmatprep.subr.mxu0 0.0
    %704 = vmatpush1.msra.mxu0 0.0
    %705 = vmatprep.subr.mxu0 0.0
    %706 = vmatpush1.msra.mxu0 0.0
    %707 = vmatprep.subr.mxu0 0.0
    %708 = vmatpush1.msra.mxu0 0.0
    %709 = vmatprep.subr.mxu0 0.0
    %710 = vmatpush1.msra.mxu0 0.0
    %711 = vmatprep.subr.mxu0 0.0
    %712 = vmatpush1.msra.mxu0 0.0
    %713 = vmatprep.subr.mxu0 0.0
    %714 = vmatpush1.msra.mxu0 0.0
    %715 = vmatprep.subr.mxu0 0.0
    %716 = vmatpush1.msra.mxu0 0.0
    %717 = vmatprep.subr.mxu0 0.0
    %718 = vmatpush1.msra.mxu0 0.0
    %719 = vmatprep.subr.mxu0 0.0
    %720 = vmatpush1.msra.mxu0 0.0
    %721 = vmatprep.subr.mxu0 0.0
    %722 = vmatpush1.msra.mxu0 0.0
    %723 = vmatprep.subr.mxu0 0.0
    %724 = vmatpush1.msra.mxu0 0.0
    %725 = vmatprep.subr.mxu0 0.0
    %726 = vmatpush1.msra.mxu0 0.0
    %727 = vmatprep.subr.mxu0 0.0
    %728 = vmatpush1.msra.mxu0 0.0
    %729 = vmatprep.subr.mxu0 0.0
    %730 = vmatpush1.msra.mxu0 0.0
    %731 = vmatprep.subr.mxu0 0.0
    %732 = vmatpush1.msra.mxu0 0.0
    %733 = vmatprep.subr.mxu0 0.0
    %734 = vmatpush1.msra.mxu0 0.0
    %735 = vmatprep.subr.mxu0 0.0
    %736 = vmatpush1.msra.mxu0 0.0
    %737 = vmatprep.subr.mxu0 0.0
    %738 = vmatpush1.msra.mxu0 0.0
    %739 = vmatprep.subr.mxu0 0.0
    %740 = vmatpush1.msra.mxu0 0.0
    %741 = vmatprep.subr.mxu0 0.0
    %742 = vmatpush1.msra.mxu0 0.0
    %743 = vmatprep.subr.mxu0 0.0
    %744 = vmatpush1.msra.mxu0 0.0
    %745 = vmatprep.subr.mxu0 0.0
    %746 = vmatpush1.msra.mxu0 0.0
    %747 = vmatprep.subr.mxu0 0.0
    %748 = vmatpush1.msra.mxu0 0.0
    %749 = vmatprep.subr.mxu0 0.0
    %750 = vmatpush1.msra.mxu0 0.0
    %751 = vmatprep.mubr.f32.mxu0 0.0
    %752 = vmatmul.mubr.f32.gmra.mrb[0].mxu0 %v685
    %v753 = vpop.f32.mrb[0].mxu0
    %v754 = vadd.f32 0.0, %v753
    %v755 = vpop.f32.mrb[0].mxu0
    %756 = vdwg.mxu0
    %v757 = vsel %vm56, %v197, %v192
    %v758 = vadd.f32 %v757, %v754
    %v759 = vxor.u32 %v758, 2147483648
    %v760 = vmul.f32 %v759, 1.442695
    %v761 = vpow.pop %v760
    %v762 = vadd.f32 %v761, 1.0
    %v763 = vrcp.pop %v762
    %v764 = vmul.f32 1.0, %v763
    %v765 = vadd.f32 %v754, %v307
    %767 = vrot.lane.b32.xlu0 %v765, 64
    %v768 = vpop.permute.xlu0 %767
    %v770 = vmul.f32 %v764, %v768
    %772 = vrot.lane.b32.xlu0 %v770, 64
    %v773 = vpop.permute.xlu0 %772
    %v775 = vadd.f32 %v757, %v773
    %v776 = vtanh.pop %v775
    %778 = vrot.lane.b32.xlu0 %v776, 64
    %v779 = vpop.permute.xlu0 %778
    %v781 = vsub.f32 %v683, %v779
    %783 = vrot.lane.b32.xlu0 %v781, 32
    %v784 = vpop.permute.xlu0 %783
    %v786 = vmul.f32 %v764, %v784
    %788 = vrot.lane.b32.xlu0 %v786, 32
    %v789 = vpop.permute.xlu0 %788
    %v791 = vadd.f32 %v776, %v789
    %793 = vrot.lane.b32.xlu0 %v791, 64
    %v794 = vpop.permute.xlu0 %793
    %v796 = vmul.f32 %v62, %v794
    %vm797 = vcmp.gt.f32.partialorder %v62, 0.0
    %v798 = vsel %vm797, %v794, %v683
    %v800 = vsel %vm85, %v798, 0
    %802 = vmatprep.subr.mxu0 0.0
    %803 = vmatpush1.msra.mxu0 %v215
    %804 = vmatprep.subr.mxu0 0.0
    %805 = vmatpush1.msra.mxu0 %v216
    %806 = vmatprep.subr.mxu0 0.0
    %807 = vmatpush1.msra.mxu0 %v217
    %808 = vmatprep.subr.mxu0 0.0
    %809 = vmatpush1.msra.mxu0 %v218
    %810 = vmatprep.subr.mxu0 0.0
    %811 = vmatpush1.msra.mxu0 0.0
    %812 = vmatprep.subr.mxu0 0.0
    %813 = vmatpush1.msra.mxu0 0.0
    %814 = vmatprep.subr.mxu0 0.0
    %815 = vmatpush1.msra.mxu0 0.0
    %816 = vmatprep.subr.mxu0 0.0
    %817 = vmatpush1.msra.mxu0 0.0
    %818 = vmatprep.subr.mxu0 0.0
    %819 = vmatpush1.msra.mxu0 0.0
    %820 = vmatprep.subr.mxu0 0.0
    %821 = vmatpush1.msra.mxu0 0.0
    %822 = vmatprep.subr.mxu0 0.0
    %823 = vmatpush1.msra.mxu0 0.0
    %824 = vmatprep.subr.mxu0 0.0
    %825 = vmatpush1.msra.mxu0 0.0
    %826 = vmatprep.subr.mxu0 0.0
    %827 = vmatpush1.msra.mxu0 0.0
    %828 = vmatprep.subr.mxu0 0.0
    %829 = vmatpush1.msra.mxu0 0.0
    %830 = vmatprep.subr.mxu0 0.0
    %831 = vmatpush1.msra.mxu0 0.0
    %832 = vmatprep.subr.mxu0 0.0
    %833 = vmatpush1.msra.mxu0 0.0
    %834 = vmatprep.subr.mxu0 0.0
    %835 = vmatpush1.msra.mxu0 0.0
    %836 = vmatprep.subr.mxu0 0.0
    %837 = vmatpush1.msra.mxu0 0.0
    %838 = vmatprep.subr.mxu0 0.0
    %839 = vmatpush1.msra.mxu0 0.0
    %840 = vmatprep.subr.mxu0 0.0
    %841 = vmatpush1.msra.mxu0 0.0
    %842 = vmatprep.subr.mxu0 0.0
    %843 = vmatpush1.msra.mxu0 0.0
    %844 = vmatprep.subr.mxu0 0.0
    %845 = vmatpush1.msra.mxu0 0.0
    %846 = vmatprep.subr.mxu0 0.0
    %847 = vmatpush1.msra.mxu0 0.0
    %848 = vmatprep.subr.mxu0 0.0
    %849 = vmatpush1.msra.mxu0 0.0
    %850 = vmatprep.subr.mxu0 0.0
    %851 = vmatpush1.msra.mxu0 0.0
    %852 = vmatprep.subr.mxu0 0.0
    %853 = vmatpush1.msra.mxu0 0.0
    %854 = vmatprep.subr.mxu0 0.0
    %855 = vmatpush1.msra.mxu0 0.0
    %856 = vmatprep.subr.mxu0 0.0
    %857 = vmatpush1.msra.mxu0 0.0
    %858 = vmatprep.subr.mxu0 0.0
    %859 = vmatpush1.msra.mxu0 0.0
    %860 = vmatprep.subr.mxu0 0.0
    %861 = vmatpush1.msra.mxu0 0.0
    %862 = vmatprep.subr.mxu0 0.0
    %863 = vmatpush1.msra.mxu0 0.0
    %864 = vmatprep.subr.mxu0 0.0
    %865 = vmatpush1.msra.mxu0 0.0
    %866 = vmatprep.mubr.f32.mxu0 0.0
    %867 = vmatmul.mubr.f32.gmra.mrb[0].mxu0 %v800
    %v868 = vpop.f32.mrb[0].mxu0
    %v869 = vadd.f32 0.0, %v868
    %v870 = vpop.f32.mrb[0].mxu0
    %871 = vdwg.mxu0
    %v872 = vsel %vm56, %v202, %v187
    %v873 = vadd.f32 %v872, %v869
    %v874 = vxor.u32 %v873, 2147483648
    %v875 = vmul.f32 %v874, 1.442695
    %v876 = vpow.pop %v875
    %v877 = vadd.f32 %v876, 1.0
    %v878 = vrcp.pop %v877
    %v879 = vmul.f32 1.0, %v878
    %v880 = vadd.f32 %v869, %v307
    %882 = vrot.lane.b32.xlu0 %v880, 64
    %v883 = vpop.permute.xlu0 %882
    %v885 = vmul.f32 %v879, %v883
    %887 = vrot.lane.b32.xlu0 %v885, 64
    %v888 = vpop.permute.xlu0 %887
    %v890 = vadd.f32 %v872, %v888
    %v891 = vtanh.pop %v890
    %893 = vrot.lane.b32.xlu0 %v891, 64
    %v894 = vpop.permute.xlu0 %893
    %v896 = vsub.f32 %v798, %v894
    %898 = vrot.lane.b32.xlu0 %v896, 32
    %v899 = vpop.permute.xlu0 %898
    %v901 = vmul.f32 %v879, %v899
    %903 = vrot.lane.b32.xlu0 %v901, 32
    %v904 = vpop.permute.xlu0 %903
    %v906 = vadd.f32 %v891, %v904
    %908 = vrot.lane.b32.xlu0 %v906, 64
    %v909 = vpop.permute.xlu0 %908
    %v911 = vmul.f32 %v63, %v909
    %vm912 = vcmp.gt.f32.partialorder %v63, 0.0
    %v913 = vsel %vm912, %v909, %v798
    %v915 = vsel %vm85, %v913, 0
    %917 = vmatprep.subr.mxu0 0.0
    %918 = vmatpush1.msra.mxu0 %v215
    %919 = vmatprep.subr.mxu0 0.0
    %920 = vmatpush1.msra.mxu0 %v216
    %921 = vmatprep.subr.mxu0 0.0
    %922 = vmatpush1.msra.mxu0 %v217
    %923 = vmatprep.subr.mxu0 0.0
    %924 = vmatpush1.msra.mxu0 %v218
    %925 = vmatprep.subr.mxu0 0.0
    %926 = vmatpush1.msra.mxu0 0.0
    %927 = vmatprep.subr.mxu0 0.0
    %928 = vmatpush1.msra.mxu0 0.0
    %929 = vmatprep.subr.mxu0 0.0
    %930 = vmatpush1.msra.mxu0 0.0
    %931 = vmatprep.subr.mxu0 0.0
    %932 = vmatpush1.msra.mxu0 0.0
    %933 = vmatprep.subr.mxu0 0.0
    %934 = vmatpush1.msra.mxu0 0.0
    %935 = vmatprep.subr.mxu0 0.0
    %936 = vmatpush1.msra.mxu0 0.0
    %937 = vmatprep.subr.mxu0 0.0
    %938 = vmatpush1.msra.mxu0 0.0
    %939 = vmatprep.subr.mxu0 0.0
    %940 = vmatpush1.msra.mxu0 0.0
    %941 = vmatprep.subr.mxu0 0.0
    %942 = vmatpush1.msra.mxu0 0.0
    %943 = vmatprep.subr.mxu0 0.0
    %944 = vmatpush1.msra.mxu0 0.0
    %945 = vmatprep.subr.mxu0 0.0
    %946 = vmatpush1.msra.mxu0 0.0
    %947 = vmatprep.subr.mxu0 0.0
    %948 = vmatpush1.msra.mxu0 0.0
    %949 = vmatprep.subr.mxu0 0.0
    %950 = vmatpush1.msra.mxu0 0.0
    %951 = vmatprep.subr.mxu0 0.0
    %952 = vmatpush1.msra.mxu0 0.0
    %953 = vmatprep.subr.mxu0 0.0
    %954 = vmatpush1.msra.mxu0 0.0
    %955 = vmatprep.subr.mxu0 0.0
    %956 = vmatpush1.msra.mxu0 0.0
    %957 = vmatprep.subr.mxu0 0.0
    %958 = vmatpush1.msra.mxu0 0.0
    %959 = vmatprep.subr.mxu0 0.0
    %960 = vmatpush1.msra.mxu0 0.0
    %961 = vmatprep.subr.mxu0 0.0
    %962 = vmatpush1.msra.mxu0 0.0
    %963 = vmatprep.subr.mxu0 0.0
    %964 = vmatpush1.msra.mxu0 0.0
    %965 = vmatprep.subr.mxu0 0.0
    %966 = vmatpush1.msra.mxu0 0.0
    %967 = vmatprep.subr.mxu0 0.0
    %968 = vmatpush1.msra.mxu0 0.0
    %969 = vmatprep.subr.mxu0 0.0
    %970 = vmatpush1.msra.mxu0 0.0
    %971 = vmatprep.subr.mxu0 0.0
    %972 = vmatpush1.msra.mxu0 0.0
    %973 = vmatprep.subr.mxu0 0.0
    %974 = vmatpush1.msra.mxu0 0.0
    %975 = vmatprep.subr.mxu0 0.0
    %976 = vmatpush1.msra.mxu0 0.0
    %977 = vmatprep.subr.mxu0 0.0
    %978 = vmatpush1.msra.mxu0 0.0
    %979 = vmatprep.subr.mxu0 0.0
    %980 = vmatpush1.msra.mxu0 0.0
    %981 = vmatprep.mubr.f32.mxu0 0.0
    %982 = vmatmul.mubr.f32.gmra.mrb[0].mxu0 %v915
    %v983 = vpop.f32.mrb[0].mxu0
    %v984 = vadd.f32 0.0, %v983
    %v985 = vpop.f32.mrb[0].mxu0
    %986 = vdwg.mxu0
    %v987 = vsel %vm56, %v207, %v182
    %v988 = vadd.f32 %v987, %v984
    %v989 = vxor.u32 %v988, 2147483648
    %v990 = vmul.f32 %v989, 1.442695
    %v991 = vpow.pop %v990
    %v992 = vadd.f32 %v991, 1.0
    %v993 = vrcp.pop %v992
    %v994 = vmul.f32 1.0, %v993
    %v995 = vadd.f32 %v984, %v307
    %997 = vrot.lane.b32.xlu0 %v995, 64
    %v998 = vpop.permute.xlu0 %997
    %v1000 = vmul.f32 %v994, %v998
    %1002 = vrot.lane.b32.xlu0 %v1000, 64
    %v1003 = vpop.permute.xlu0 %1002
    %v1005 = vadd.f32 %v987, %v1003
    %v1006 = vtanh.pop %v1005
    %1008 = vrot.lane.b32.xlu0 %v1006, 64
    %v1009 = vpop.permute.xlu0 %1008
    %v1011 = vsub.f32 %v913, %v1009
    %1013 = vrot.lane.b32.xlu0 %v1011, 32
    %v1014 = vpop.permute.xlu0 %1013
    %v1016 = vmul.f32 %v994, %v1014
    %1018 = vrot.lane.b32.xlu0 %v1016, 32
    %v1019 = vpop.permute.xlu0 %1018
    %v1021 = vadd.f32 %v1006, %v1019
    %1023 = vrot.lane.b32.xlu0 %v1021, 64
    %v1024 = vpop.permute.xlu0 %1023
    %v1026 = vmul.f32 %v64, %v1024
    %vm1027 = vcmp.gt.f32.partialorder %v64, 0.0
    %v1028 = vsel %vm1027, %v1024, %v913
    %v1030 = vsel %vm85, %v1028, 0
    %1032 = vmatprep.subr.mxu0 0.0
    %1033 = vmatpush1.msra.mxu0 %v215
    %1034 = vmatprep.subr.mxu0 0.0
    %1035 = vmatpush1.msra.mxu0 %v216
    %1036 = vmatprep.subr.mxu0 0.0
    %1037 = vmatpush1.msra.mxu0 %v217
    %1038 = vmatprep.subr.mxu0 0.0
    %1039 = vmatpush1.msra.mxu0 %v218
    %1040 = vmatprep.subr.mxu0 0.0
    %1041 = vmatpush1.msra.mxu0 0.0
    %1042 = vmatprep.subr.mxu0 0.0
    %1043 = vmatpush1.msra.mxu0 0.0
    %1044 = vmatprep.subr.mxu0 0.0
    %1045 = vmatpush1.msra.mxu0 0.0
    %1046 = vmatprep.subr.mxu0 0.0
    %1047 = vmatpush1.msra.mxu0 0.0
    %1048 = vmatprep.subr.mxu0 0.0
    %1049 = vmatpush1.msra.mxu0 0.0
    %1050 = vmatprep.subr.mxu0 0.0
    %1051 = vmatpush1.msra.mxu0 0.0
    %1052 = vmatprep.subr.mxu0 0.0
    %1053 = vmatpush1.msra.mxu0 0.0
    %1054 = vmatprep.subr.mxu0 0.0
    %1055 = vmatpush1.msra.mxu0 0.0
    %1056 = vmatprep.subr.mxu0 0.0
    %1057 = vmatpush1.msra.mxu0 0.0
    %1058 = vmatprep.subr.mxu0 0.0
    %1059 = vmatpush1.msra.mxu0 0.0
    %1060 = vmatprep.subr.mxu0 0.0
    %1061 = vmatpush1.msra.mxu0 0.0
    %1062 = vmatprep.subr.mxu0 0.0
    %1063 = vmatpush1.msra.mxu0 0.0
    %1064 = vmatprep.subr.mxu0 0.0
    %1065 = vmatpush1.msra.mxu0 0.0
    %1066 = vmatprep.subr.mxu0 0.0
    %1067 = vmatpush1.msra.mxu0 0.0
    %1068 = vmatprep.subr.mxu0 0.0
    %1069 = vmatpush1.msra.mxu0 0.0
    %1070 = vmatprep.subr.mxu0 0.0
    %1071 = vmatpush1.msra.mxu0 0.0
    %1072 = vmatprep.subr.mxu0 0.0
    %1073 = vmatpush1.msra.mxu0 0.0
    %1074 = vmatprep.subr.mxu0 0.0
    %1075 = vmatpush1.msra.mxu0 0.0
    %1076 = vmatprep.subr.mxu0 0.0
    %1077 = vmatpush1.msra.mxu0 0.0
    %1078 = vmatprep.subr.mxu0 0.0
    %1079 = vmatpush1.msra.mxu0 0.0
    %1080 = vmatprep.subr.mxu0 0.0
    %1081 = vmatpush1.msra.mxu0 0.0
    %1082 = vmatprep.subr.mxu0 0.0
    %1083 = vmatpush1.msra.mxu0 0.0
    %1084 = vmatprep.subr.mxu0 0.0
    %1085 = vmatpush1.msra.mxu0 0.0
    %1086 = vmatprep.subr.mxu0 0.0
    %1087 = vmatpush1.msra.mxu0 0.0
    %1088 = vmatprep.subr.mxu0 0.0
    %1089 = vmatpush1.msra.mxu0 0.0
    %1090 = vmatprep.subr.mxu0 0.0
    %1091 = vmatpush1.msra.mxu0 0.0
    %1092 = vmatprep.subr.mxu0 0.0
    %1093 = vmatpush1.msra.mxu0 0.0
    %1094 = vmatprep.subr.mxu0 0.0
    %1095 = vmatpush1.msra.mxu0 0.0
    %1096 = vmatprep.mubr.f32.mxu0 0.0
    %1097 = vmatmul.mubr.f32.gmra.mrb[0].mxu0 %v1030
    %v1098 = vpop.f32.mrb[0].mxu0
    %v1099 = vadd.f32 0.0, %v1098
    %v1100 = vpop.f32.mrb[0].mxu0
    %1101 = vdwg.mxu0
    %v1102 = vsel %vm56, %v212, %v177
    %v1103 = vadd.f32 %v1102, %v1099
    %v1104 = vxor.u32 %v1103, 2147483648
    %v1105 = vmul.f32 %v1104, 1.442695
    %v1106 = vpow.pop %v1105
    %v1107 = vadd.f32 %v1106, 1.0
    %v1108 = vrcp.pop %v1107
    %v1109 = vmul.f32 1.0, %v1108
    %v1110 = vadd.f32 %v1099, %v307
    %1112 = vrot.lane.b32.xlu0 %v1110, 64
    %v1113 = vpop.permute.xlu0 %1112
    %v1115 = vmul.f32 %v1109, %v1113
    %1117 = vrot.lane.b32.xlu0 %v1115, 64
    %v1118 = vpop.permute.xlu0 %1117
    %v1120 = vadd.f32 %v1102, %v1118
    %v1121 = vtanh.pop %v1120
    %1123 = vrot.lane.b32.xlu0 %v1121, 64
    %v1124 = vpop.permute.xlu0 %1123
    %v1126 = vsub.f32 %v1028, %v1124
    %1128 = vrot.lane.b32.xlu0 %v1126, 32
    %v1129 = vpop.permute.xlu0 %1128
    %v1131 = vmul.f32 %v1109, %v1129
    %1133 = vrot.lane.b32.xlu0 %v1131, 32
    %v1134 = vpop.permute.xlu0 %1133
    %v1136 = vadd.f32 %v1121, %v1134
    %1138 = vrot.lane.b32.xlu0 %v1136, 64
    %v1139 = vpop.permute.xlu0 %1138
    %v1141 = vmul.f32 %v65, %v1139
    %v1142 = vsel %vm57, %v336, %v1141
    %1143 = vst.msk [vmem:[#allocation2] sm:$0xff] %vm85, %v1142
    %v1144 = vsel %vm57, %v451, %v1026
    %1145 = vst.msk [vmem:[#allocation2 + $0x8] sm:$0xff] %vm85, %v1144
    %v1146 = vsel %vm57, %v566, %v911
    %1147 = vst.msk [vmem:[#allocation2 + $0x10] sm:$0xff] %vm85, %v1146
    %v1148 = vsel %vm57, %v681, %v796
    %1149 = vst.msk [vmem:[#allocation2 + $0x18] sm:$0xff] %vm85, %v1148
    %v1150 = vsel %vm57, %v796, %v681
    %1151 = vst.msk [vmem:[#allocation2 + $0x20] sm:$0xff] %vm85, %v1150
    %v1152 = vsel %vm57, %v911, %v566
    %1153 = vst.msk [vmem:[#allocation2 + $0x28] sm:$0xff] %vm85, %v1152
    %v1154 = vsel %vm57, %v1026, %v451
    %1155 = vst.msk [vmem:[#allocation2 + $0x30] sm:$0xff] %vm85, %v1154
    %v1156 = vsel %vm57, %v1141, %v336
    %1157 = vst.msk [vmem:[#allocation2 + $0x38] sm:$0xff] %vm85, %v1156
    %v1158 = vld [vmem:[#allocation2] sm:$0xff]
    %v1159 = vld [vmem:[#allocation2 + $0x8] sm:$0xff]
    %v1160 = vld [vmem:[#allocation2 + $0x10] sm:$0xff]
    %v1161 = vld [vmem:[#allocation2 + $0x18] sm:$0xff]
    %v1162 = vld [vmem:[#allocation2 + $0x20] sm:$0xff]
    %v1163 = vld [vmem:[#allocation2 + $0x28] sm:$0xff]
    %v1164 = vld [vmem:[#allocation2 + $0x30] sm:$0xff]
    %v1165 = vld [vmem:[#allocation2 + $0x38] sm:$0xff]
    %v1166 = vld [vmem:[%s6] sm:$0xff]
    %v1167 = vld [vmem:[%s6 + $0x8] sm:$0xff]
    %v1168 = vld [vmem:[%s6 + $0x10] sm:$0xff]
    %v1169 = vld [vmem:[%s6 + $0x18] sm:$0xff]
    %v1170 = vld [vmem:[%s7] sm:$0x1]
    %v1172 = vlaneseq
    %v1173 = vshrl.u32 %v1172, 7
    %v1174 = vsub.s32 0, %v1173
    %v1175 = vrot.slane %v1170, %v1174
    %v1178 = vsel %vm85, %v1158, 0
    %v1181 = vsel %vm85, %v1159, 0
    %v1184 = vsel %vm85, %v1160, 0
    %v1187 = vsel %vm85, %v1161, 0
    %v1190 = vsel %vm85, %v1162, 0
    %v1193 = vsel %vm85, %v1163, 0
    %v1196 = vsel %vm85, %v1164, 0
    %v1199 = vsel %vm85, %v1165, 0
    %1201 = vmatprep.subr.mxu0 0.0
    %1202 = vmatpush1.msra.mxu0 %v1166
    %1203 = vmatprep.subr.mxu0 0.0
    %1204 = vmatpush1.msra.mxu0 %v1167
    %1205 = vmatprep.subr.mxu0 0.0
    %1206 = vmatpush1.msra.mxu0 %v1168
    %1207 = vmatprep.subr.mxu0 0.0
    %1208 = vmatpush1.msra.mxu0 %v1169
    %1209 = vmatprep.subr.mxu0 0.0
    %1210 = vmatpush1.msra.mxu0 0.0
    %1211 = vmatprep.subr.mxu0 0.0
    %1212 = vmatpush1.msra.mxu0 0.0
    %1213 = vmatprep.subr.mxu0 0.0
    %1214 = vmatpush1.msra.mxu0 0.0
    %1215 = vmatprep.subr.mxu0 0.0
    %1216 = vmatpush1.msra.mxu0 0.0
    %1217 = vmatprep.subr.mxu0 0.0
    %1218 = vmatpush1.msra.mxu0 0.0
    %1219 = vmatprep.subr.mxu0 0.0
    %1220 = vmatpush1.msra.mxu0 0.0
    %1221 = vmatprep.subr.mxu0 0.0
    %1222 = vmatpush1.msra.mxu0 0.0
    %1223 = vmatprep.subr.mxu0 0.0
    %1224 = vmatpush1.msra.mxu0 0.0
    %1225 = vmatprep.subr.mxu0 0.0
    %1226 = vmatpush1.msra.mxu0 0.0
    %1227 = vmatprep.subr.mxu0 0.0
    %1228 = vmatpush1.msra.mxu0 0.0
    %1229 = vmatprep.subr.mxu0 0.0
    %1230 = vmatpush1.msra.mxu0 0.0
    %1231 = vmatprep.subr.mxu0 0.0
    %1232 = vmatpush1.msra.mxu0 0.0
    %1233 = vmatprep.subr.mxu0 0.0
    %1234 = vmatpush1.msra.mxu0 0.0
    %1235 = vmatprep.subr.mxu0 0.0
    %1236 = vmatpush1.msra.mxu0 0.0
    %1237 = vmatprep.subr.mxu0 0.0
    %1238 = vmatpush1.msra.mxu0 0.0
    %1239 = vmatprep.subr.mxu0 0.0
    %1240 = vmatpush1.msra.mxu0 0.0
    %1241 = vmatprep.subr.mxu0 0.0
    %1242 = vmatpush1.msra.mxu0 0.0
    %1243 = vmatprep.subr.mxu0 0.0
    %1244 = vmatpush1.msra.mxu0 0.0
    %1245 = vmatprep.subr.mxu0 0.0
    %1246 = vmatpush1.msra.mxu0 0.0
    %1247 = vmatprep.subr.mxu0 0.0
    %1248 = vmatpush1.msra.mxu0 0.0
    %1249 = vmatprep.subr.mxu0 0.0
    %1250 = vmatpush1.msra.mxu0 0.0
    %1251 = vmatprep.subr.mxu0 0.0
    %1252 = vmatpush1.msra.mxu0 0.0
    %1253 = vmatprep.subr.mxu0 0.0
    %1254 = vmatpush1.msra.mxu0 0.0
    %1255 = vmatprep.subr.mxu0 0.0
    %1256 = vmatpush1.msra.mxu0 0.0
    %1257 = vmatprep.subr.mxu0 0.0
    %1258 = vmatpush1.msra.mxu0 0.0
    %1259 = vmatprep.subr.mxu0 0.0
    %1260 = vmatpush1.msra.mxu0 0.0
    %1261 = vmatprep.subr.mxu0 0.0
    %1262 = vmatpush1.msra.mxu0 0.0
    %1263 = vmatprep.subr.mxu0 0.0
    %1264 = vmatpush1.msra.mxu0 0.0
    %1265 = vmatprep.mubr.f32.mxu0 0.0
    %1266 = vmatmul.mubr.f32.gmra.mrb[0].mxu0 %v1178
    %v1267 = vpop.f32.mrb[0].mxu0
    %v1268 = vadd.f32 %v1175, %v1267
    %v1269 = vpop.f32.mrb[0].mxu0
    %1270 = vmatprep.mubr.f32.mxu0 0.0
    %1271 = vmatmul.mubr.f32.gmra.mrb[0].mxu0 %v1181
    %v1272 = vpop.f32.mrb[0].mxu0
    %v1273 = vadd.f32 %v1175, %v1272
    %v1274 = vpop.f32.mrb[0].mxu0
    %1275 = vmatprep.mubr.f32.mxu0 0.0
    %1276 = vmatmul.mubr.f32.gmra.mrb[0].mxu0 %v1184
    %v1277 = vpop.f32.mrb[0].mxu0
    %v1278 = vadd.f32 %v1175, %v1277
    %v1279 = vpop.f32.mrb[0].mxu0
    %1280 = vmatprep.mubr.f32.mxu0 0.0
    %1281 = vmatmul.mubr.f32.gmra.mrb[0].mxu0 %v1187
    %v1282 = vpop.f32.mrb[0].mxu0
    %v1283 = vadd.f32 %v1175, %v1282
    %v1284 = vpop.f32.mrb[0].mxu0
    %1285 = vmatprep.mubr.f32.mxu0 0.0
    %1286 = vmatmul.mubr.f32.gmra.mrb[0].mxu0 %v1190
    %v1287 = vpop.f32.mrb[0].mxu0
    %v1288 = vadd.f32 %v1175, %v1287
    %v1289 = vpop.f32.mrb[0].mxu0
    %1290 = vmatprep.mubr.f32.mxu0 0.0
    %1291 = vmatmul.mubr.f32.gmra.mrb[0].mxu0 %v1193
    %v1292 = vpop.f32.mrb[0].mxu0
    %v1293 = vadd.f32 %v1175, %v1292
    %v1294 = vpop.f32.mrb[0].mxu0
    %1295 = vmatprep.mubr.f32.mxu0 0.0
    %1296 = vmatmul.mubr.f32.gmra.mrb[0].mxu0 %v1196
    %v1297 = vpop.f32.mrb[0].mxu0
    %v1298 = vadd.f32 %v1175, %v1297
    %v1299 = vpop.f32.mrb[0].mxu0
    %1300 = vmatprep.mubr.f32.mxu0 0.0
    %1301 = vmatmul.mubr.f32.gmra.mrb[0].mxu0 %v1199
    %v1302 = vpop.f32.mrb[0].mxu0
    %v1303 = vadd.f32 %v1175, %v1302
    %v1304 = vpop.f32.mrb[0].mxu0
    %1305 = vdwg.mxu0
    %v1306 = vld [vmem:[%s8] sm:$0xff]
    %v1307 = vld [vmem:[%s8 + $0x8] sm:$0xff]
    %v1308 = vld [vmem:[%s8 + $0x10] sm:$0xff]
    %v1309 = vld [vmem:[%s8 + $0x18] sm:$0xff]
    %v1310 = vld [vmem:[%s9] sm:$0x1]
    %v1312 = vlaneseq
    %v1313 = vshrl.u32 %v1312, 7
    %v1314 = vsub.s32 0, %v1313
    %v1315 = vrot.slane %v1310, %v1314
    %1316 = vmatprep.subr.mxu0 0.0
    %1317 = vmatpush1.msra.mxu0 %v1306
    %1318 = vmatprep.subr.mxu0 0.0
    %1319 = vmatpush1.msra.mxu0 %v1307
    %1320 = vmatprep.subr.mxu0 0.0
    %1321 = vmatpush1.msra.mxu0 %v1308
    %1322 = vmatprep.subr.mxu0 0.0
    %1323 = vmatpush1.msra.mxu0 %v1309
    %1324 = vmatprep.subr.mxu0 0.0
    %1325 = vmatpush1.msra.mxu0 0.0
    %1326 = vmatprep.subr.mxu0 0.0
    %1327 = vmatpush1.msra.mxu0 0.0
    %1328 = vmatprep.subr.mxu0 0.0
    %1329 = vmatpush1.msra.mxu0 0.0
    %1330 = vmatprep.subr.mxu0 0.0
    %1331 = vmatpush1.msra.mxu0 0.0
    %1332 = vmatprep.subr.mxu0 0.0
    %1333 = vmatpush1.msra.mxu0 0.0
    %1334 = vmatprep.subr.mxu0 0.0
    %1335 = vmatpush1.msra.mxu0 0.0
    %1336 = vmatprep.subr.mxu0 0.0
    %1337 = vmatpush1.msra.mxu0 0.0
    %1338 = vmatprep.subr.mxu0 0.0
    %1339 = vmatpush1.msra.mxu0 0.0
    %1340 = vmatprep.subr.mxu0 0.0
    %1341 = vmatpush1.msra.mxu0 0.0
    %1342 = vmatprep.subr.mxu0 0.0
    %1343 = vmatpush1.msra.mxu0 0.0
    %1344 = vmatprep.subr.mxu0 0.0
    %1345 = vmatpush1.msra.mxu0 0.0
    %1346 = vmatprep.subr.mxu0 0.0
    %1347 = vmatpush1.msra.mxu0 0.0
    %1348 = vmatprep.subr.mxu0 0.0
    %1349 = vmatpush1.msra.mxu0 0.0
    %1350 = vmatprep.subr.mxu0 0.0
    %1351 = vmatpush1.msra.mxu0 0.0
    %1352 = vmatprep.subr.mxu0 0.0
    %1353 = vmatpush1.msra.mxu0 0.0
    %1354 = vmatprep.subr.mxu0 0.0
    %1355 = vmatpush1.msra.mxu0 0.0
    %1356 = vmatprep.subr.mxu0 0.0
    %1357 = vmatpush1.msra.mxu0 0.0
    %1358 = vmatprep.subr.mxu0 0.0
    %1359 = vmatpush1.msra.mxu0 0.0
    %1360 = vmatprep.subr.mxu0 0.0
    %1361 = vmatpush1.msra.mxu0 0.0
    %1362 = vmatprep.subr.mxu0 0.0
    %1363 = vmatpush1.msra.mxu0 0.0
    %1364 = vmatprep.subr.mxu0 0.0
    %1365 = vmatpush1.msra.mxu0 0.0
    %1366 = vmatprep.subr.mxu0 0.0
    %1367 = vmatpush1.msra.mxu0 0.0
    %1368 = vmatprep.subr.mxu0 0.0
    %1369 = vmatpush1.msra.mxu0 0.0
    %1370 = vmatprep.subr.mxu0 0.0
    %1371 = vmatpush1.msra.mxu0 0.0
    %1372 = vmatprep.subr.mxu0 0.0
    %1373 = vmatpush1.msra.mxu0 0.0
    %1374 = vmatprep.subr.mxu0 0.0
    %1375 = vmatpush1.msra.mxu0 0.0
    %1376 = vmatprep.subr.mxu0 0.0
    %1377 = vmatpush1.msra.mxu0 0.0
    %1378 = vmatprep.subr.mxu0 0.0
    %1379 = vmatpush1.msra.mxu0 0.0
    %1380 = vmatprep.mubr.f32.mxu0 0.0
    %1381 = vmatmul.mubr.f32.gmra.mrb[0].mxu0 %v226
    %v1382 = vpop.f32.mrb[0].mxu0
    %v1383 = vadd.f32 0.0, %v1382
    %v1384 = vpop.f32.mrb[0].mxu0
    %1385 = vdwg.mxu0
    %v1386 = vsel %vm56, %v1268, %v1303
    %v1387 = vadd.f32 %v1386, %v1383
    %v1388 = vxor.u32 %v1387, 2147483648
    %v1389 = vmul.f32 %v1388, 1.442695
    %v1390 = vpow.pop %v1389
    %v1391 = vadd.f32 %v1390, 1.0
    %v1392 = vrcp.pop %v1391
    %v1393 = vmul.f32 1.0, %v1392
    %1394 = vrot.lane.b32.xlu0 %v1315, 64
    %v1395 = vpop.permute.xlu0 %1394
    %v1397 = vadd.f32 %v1383, %v1395
    %1399 = vrot.lane.b32.xlu0 %v1397, 64
    %v1400 = vpop.permute.xlu0 %1399
    %v1402 = vmul.f32 %v1393, %v1400
    %1404 = vrot.lane.b32.xlu0 %v1402, 64
    %v1405 = vpop.permute.xlu0 %1404
    %v1407 = vadd.f32 %v1386, %v1405
    %v1408 = vtanh.pop %v1407
    %v1409 = vsub.f32 0.0, %v1408
    %1411 = vrot.lane.b32.xlu0 %v1409, 96
    %v1412 = vpop.permute.xlu0 %1411
    %v1414 = vmul.f32 %v1393, %v1412
    %1416 = vrot.lane.b32.xlu0 %v1414, 32
    %v1417 = vpop.permute.xlu0 %1416
    %v1419 = vadd.f32 %v1408, %v1417
    %1421 = vrot.lane.b32.xlu0 %v1419, 64
    %v1422 = vpop.permute.xlu0 %1421
    %v1424 = vmul.f32 %v58, %v1422
    %v1425 = vsel %vm337, %v1422, 0.0
    %v1427 = vsel %vm85, %v1425, 0
    %1429 = vmatprep.subr.mxu0 0.0
    %1430 = vmatpush1.msra.mxu0 %v1306
    %1431 = vmatprep.subr.mxu0 0.0
    %1432 = vmatpush1.msra.mxu0 %v1307
    %1433 = vmatprep.subr.mxu0 0.0
    %1434 = vmatpush1.msra.mxu0 %v1308
    %1435 = vmatprep.subr.mxu0 0.0
    %1436 = vmatpush1.msra.mxu0 %v1309
    %1437 = vmatprep.subr.mxu0 0.0
    %1438 = vmatpush1.msra.mxu0 0.0
    %1439 = vmatprep.subr.mxu0 0.0
    %1440 = vmatpush1.msra.mxu0 0.0
    %1441 = vmatprep.subr.mxu0 0.0
    %1442 = vmatpush1.msra.mxu0 0.0
    %1443 = vmatprep.subr.mxu0 0.0
    %1444 = vmatpush1.msra.mxu0 0.0
    %1445 = vmatprep.subr.mxu0 0.0
    %1446 = vmatpush1.msra.mxu0 0.0
    %1447 = vmatprep.subr.mxu0 0.0
    %1448 = vmatpush1.msra.mxu0 0.0
    %1449 = vmatprep.subr.mxu0 0.0
    %1450 = vmatpush1.msra.mxu0 0.0
    %1451 = vmatprep.subr.mxu0 0.0
    %1452 = vmatpush1.msra.mxu0 0.0
    %1453 = vmatprep.subr.mxu0 0.0
    %1454 = vmatpush1.msra.mxu0 0.0
    %1455 = vmatprep.subr.mxu0 0.0
    %1456 = vmatpush1.msra.mxu0 0.0
    %1457 = vmatprep.subr.mxu0 0.0
    %1458 = vmatpush1.msra.mxu0 0.0
    %1459 = vmatprep.subr.mxu0 0.0
    %1460 = vmatpush1.msra.mxu0 0.0
    %1461 = vmatprep.subr.mxu0 0.0
    %1462 = vmatpush1.msra.mxu0 0.0
    %1463 = vmatprep.subr.mxu0 0.0
    %1464 = vmatpush1.msra.mxu0 0.0
    %1465 = vmatprep.subr.mxu0 0.0
    %1466 = vmatpush1.msra.mxu0 0.0
    %1467 = vmatprep.subr.mxu0 0.0
    %1468 = vmatpush1.msra.mxu0 0.0
    %1469 = vmatprep.subr.mxu0 0.0
    %1470 = vmatpush1.msra.mxu0 0.0
    %1471 = vmatprep.subr.mxu0 0.0
    %1472 = vmatpush1.msra.mxu0 0.0
    %1473 = vmatprep.subr.mxu0 0.0
    %1474 = vmatpush1.msra.mxu0 0.0
    %1475 = vmatprep.subr.mxu0 0.0
    %1476 = vmatpush1.msra.mxu0 0.0
    %1477 = vmatprep.subr.mxu0 0.0
    %1478 = vmatpush1.msra.mxu0 0.0
    %1479 = vmatprep.subr.mxu0 0.0
    %1480 = vmatpush1.msra.mxu0 0.0
    %1481 = vmatprep.subr.mxu0 0.0
    %1482 = vmatpush1.msra.mxu0 0.0
    %1483 = vmatprep.subr.mxu0 0.0
    %1484 = vmatpush1.msra.mxu0 0.0
    %1485 = vmatprep.subr.mxu0 0.0
    %1486 = vmatpush1.msra.mxu0 0.0
    %1487 = vmatprep.subr.mxu0 0.0
    %1488 = vmatpush1.msra.mxu0 0.0
    %1489 = vmatprep.subr.mxu0 0.0
    %1490 = vmatpush1.msra.mxu0 0.0
    %1491 = vmatprep.subr.mxu0 0.0
    %1492 = vmatpush1.msra.mxu0 0.0
    %1493 = vmatprep.mubr.f32.mxu0 0.0
    %1494 = vmatmul.mubr.f32.gmra.mrb[0].mxu0 %v1427
    %v1495 = vpop.f32.mrb[0].mxu0
    %v1496 = vadd.f32 0.0, %v1495
    %v1497 = vpop.f32.mrb[0].mxu0
    %1498 = vdwg.mxu0
    %v1499 = vsel %vm56, %v1273, %v1298
    %v1500 = vadd.f32 %v1499, %v1496
    %v1501 = vxor.u32 %v1500, 2147483648
    %v1502 = vmul.f32 %v1501, 1.442695
    %v1503 = vpow.pop %v1502
    %v1504 = vadd.f32 %v1503, 1.0
    %v1505 = vrcp.pop %v1504
    %v1506 = vmul.f32 1.0, %v1505
    %v1507 = vadd.f32 %v1496, %v1395
    %1509 = vrot.lane.b32.xlu0 %v1507, 64
    %v1510 = vpop.permute.xlu0 %1509
    %v1512 = vmul.f32 %v1506, %v1510
    %1514 = vrot.lane.b32.xlu0 %v1512, 64
    %v1515 = vpop.permute.xlu0 %1514
    %v1517 = vadd.f32 %v1499, %v1515
    %v1518 = vtanh.pop %v1517
    %1520 = vrot.lane.b32.xlu0 %v1518, 64
    %v1521 = vpop.permute.xlu0 %1520
    %v1523 = vsub.f32 %v1425, %v1521
    %1525 = vrot.lane.b32.xlu0 %v1523, 32
    %v1526 = vpop.permute.xlu0 %1525
    %v1528 = vmul.f32 %v1506, %v1526
    %1530 = vrot.lane.b32.xlu0 %v1528, 32
    %v1531 = vpop.permute.xlu0 %1530
    %v1533 = vadd.f32 %v1518, %v1531
    %1535 = vrot.lane.b32.xlu0 %v1533, 64
    %v1536 = vpop.permute.xlu0 %1535
    %v1538 = vmul.f32 %v59, %v1536
    %v1539 = vsel %vm452, %v1536, %v1425
    %v1541 = vsel %vm85, %v1539, 0
    %1543 = vmatprep.subr.mxu0 0.0
    %1544 = vmatpush1.msra.mxu0 %v1306
    %1545 = vmatprep.subr.mxu0 0.0
    %1546 = vmatpush1.msra.mxu0 %v1307
    %1547 = vmatprep.subr.mxu0 0.0
    %1548 = vmatpush1.msra.mxu0 %v1308
    %1549 = vmatprep.subr.mxu0 0.0
    %1550 = vmatpush1.msra.mxu0 %v1309
    %1551 = vmatprep.subr.mxu0 0.0
    %1552 = vmatpush1.msra.mxu0 0.0
    %1553 = vmatprep.subr.mxu0 0.0
    %1554 = vmatpush1.msra.mxu0 0.0
    %1555 = vmatprep.subr.mxu0 0.0
    %1556 = vmatpush1.msra.mxu0 0.0
    %1557 = vmatprep.subr.mxu0 0.0
    %1558 = vmatpush1.msra.mxu0 0.0
    %1559 = vmatprep.subr.mxu0 0.0
    %1560 = vmatpush1.msra.mxu0 0.0
    %1561 = vmatprep.subr.mxu0 0.0
    %1562 = vmatpush1.msra.mxu0 0.0
    %1563 = vmatprep.subr.mxu0 0.0
    %1564 = vmatpush1.msra.mxu0 0.0
    %1565 = vmatprep.subr.mxu0 0.0
    %1566 = vmatpush1.msra.mxu0 0.0
    %1567 = vmatprep.subr.mxu0 0.0
    %1568 = vmatpush1.msra.mxu0 0.0
    %1569 = vmatprep.subr.mxu0 0.0
    %1570 = vmatpush1.msra.mxu0 0.0
    %1571 = vmatprep.subr.mxu0 0.0
    %1572 = vmatpush1.msra.mxu0 0.0
    %1573 = vmatprep.subr.mxu0 0.0
    %1574 = vmatpush1.msra.mxu0 0.0
    %1575 = vmatprep.subr.mxu0 0.0
    %1576 = vmatpush1.msra.mxu0 0.0
    %1577 = vmatprep.subr.mxu0 0.0
    %1578 = vmatpush1.msra.mxu0 0.0
    %1579 = vmatprep.subr.mxu0 0.0
    %1580 = vmatpush1.msra.mxu0 0.0
    %1581 = vmatprep.subr.mxu0 0.0
    %1582 = vmatpush1.msra.mxu0 0.0
    %1583 = vmatprep.subr.mxu0 0.0
    %1584 = vmatpush1.msra.mxu0 0.0
    %1585 = vmatprep.subr.mxu0 0.0
    %1586 = vmatpush1.msra.mxu0 0.0
    %1587 = vmatprep.subr.mxu0 0.0
    %1588 = vmatpush1.msra.mxu0 0.0
    %1589 = vmatprep.subr.mxu0 0.0
    %1590 = vmatpush1.msra.mxu0 0.0
    %1591 = vmatprep.subr.mxu0 0.0
    %1592 = vmatpush1.msra.mxu0 0.0
    %1593 = vmatprep.subr.mxu0 0.0
    %1594 = vmatpush1.msra.mxu0 0.0
    %1595 = vmatprep.subr.mxu0 0.0
    %1596 = vmatpush1.msra.mxu0 0.0
    %1597 = vmatprep.subr.mxu0 0.0
    %1598 = vmatpush1.msra.mxu0 0.0
    %1599 = vmatprep.subr.mxu0 0.0
    %1600 = vmatpush1.msra.mxu0 0.0
    %1601 = vmatprep.subr.mxu0 0.0
    %1602 = vmatpush1.msra.mxu0 0.0
    %1603 = vmatprep.subr.mxu0 0.0
    %1604 = vmatpush1.msra.mxu0 0.0
    %1605 = vmatprep.subr.mxu0 0.0
    %1606 = vmatpush1.msra.mxu0 0.0
    %1607 = vmatprep.mubr.f32.mxu0 0.0
    %1608 = vmatmul.mubr.f32.gmra.mrb[0].mxu0 %v1541
    %v1609 = vpop.f32.mrb[0].mxu0
    %v1610 = vadd.f32 0.0, %v1609
    %v1611 = vpop.f32.mrb[0].mxu0
    %1612 = vdwg.mxu0
    %v1613 = vsel %vm56, %v1278, %v1293
    %v1614 = vadd.f32 %v1613, %v1610
    %v1615 = vxor.u32 %v1614, 2147483648
    %v1616 = vmul.f32 %v1615, 1.442695
    %v1617 = vpow.pop %v1616
    %v1618 = vadd.f32 %v1617, 1.0
    %v1619 = vrcp.pop %v1618
    %v1620 = vmul.f32 1.0, %v1619
    %v1621 = vadd.f32 %v1610, %v1395
    %1623 = vrot.lane.b32.xlu0 %v1621, 64
    %v1624 = vpop.permute.xlu0 %1623
    %v1626 = vmul.f32 %v1620, %v1624
    %1628 = vrot.lane.b32.xlu0 %v1626, 64
    %v1629 = vpop.permute.xlu0 %1628
    %v1631 = vadd.f32 %v1613, %v1629
    %v1632 = vtanh.pop %v1631
    %1634 = vrot.lane.b32.xlu0 %v1632, 64
    %v1635 = vpop.permute.xlu0 %1634
    %v1637 = vsub.f32 %v1539, %v1635
    %1639 = vrot.lane.b32.xlu0 %v1637, 32
    %v1640 = vpop.permute.xlu0 %1639
    %v1642 = vmul.f32 %v1620, %v1640
    %1644 = vrot.lane.b32.xlu0 %v1642, 32
    %v1645 = vpop.permute.xlu0 %1644
    %v1647 = vadd.f32 %v1632, %v1645
    %1649 = vrot.lane.b32.xlu0 %v1647, 64
    %v1650 = vpop.permute.xlu0 %1649
    %v1652 = vmul.f32 %v60, %v1650
    %v1653 = vsel %vm567, %v1650, %v1539
    %v1655 = vsel %vm85, %v1653, 0
    %1657 = vmatprep.subr.mxu0 0.0
    %1658 = vmatpush1.msra.mxu0 %v1306
    %1659 = vmatprep.subr.mxu0 0.0
    %1660 = vmatpush1.msra.mxu0 %v1307
    %1661 = vmatprep.subr.mxu0 0.0
    %1662 = vmatpush1.msra.mxu0 %v1308
    %1663 = vmatprep.subr.mxu0 0.0
    %1664 = vmatpush1.msra.mxu0 %v1309
    %1665 = vmatprep.subr.mxu0 0.0
    %1666 = vmatpush1.msra.mxu0 0.0
    %1667 = vmatprep.subr.mxu0 0.0
    %1668 = vmatpush1.msra.mxu0 0.0
    %1669 = vmatprep.subr.mxu0 0.0
    %1670 = vmatpush1.msra.mxu0 0.0
    %1671 = vmatprep.subr.mxu0 0.0
    %1672 = vmatpush1.msra.mxu0 0.0
    %1673 = vmatprep.subr.mxu0 0.0
    %1674 = vmatpush1.msra.mxu0 0.0
    %1675 = vmatprep.subr.mxu0 0.0
    %1676 = vmatpush1.msra.mxu0 0.0
    %1677 = vmatprep.subr.mxu0 0.0
    %1678 = vmatpush1.msra.mxu0 0.0
    %1679 = vmatprep.subr.mxu0 0.0
    %1680 = vmatpush1.msra.mxu0 0.0
    %1681 = vmatprep.subr.mxu0 0.0
    %1682 = vmatpush1.msra.mxu0 0.0
    %1683 = vmatprep.subr.mxu0 0.0
    %1684 = vmatpush1.msra.mxu0 0.0
    %1685 = vmatprep.subr.mxu0 0.0
    %1686 = vmatpush1.msra.mxu0 0.0
    %1687 = vmatprep.subr.mxu0 0.0
    %1688 = vmatpush1.msra.mxu0 0.0
    %1689 = vmatprep.subr.mxu0 0.0
    %1690 = vmatpush1.msra.mxu0 0.0
    %1691 = vmatprep.subr.mxu0 0.0
    %1692 = vmatpush1.msra.mxu0 0.0
    %1693 = vmatprep.subr.mxu0 0.0
    %1694 = vmatpush1.msra.mxu0 0.0
    %1695 = vmatprep.subr.mxu0 0.0
    %1696 = vmatpush1.msra.mxu0 0.0
    %1697 = vmatprep.subr.mxu0 0.0
    %1698 = vmatpush1.msra.mxu0 0.0
    %1699 = vmatprep.subr.mxu0 0.0
    %1700 = vmatpush1.msra.mxu0 0.0
    %1701 = vmatprep.subr.mxu0 0.0
    %1702 = vmatpush1.msra.mxu0 0.0
    %1703 = vmatprep.subr.mxu0 0.0
    %1704 = vmatpush1.msra.mxu0 0.0
    %1705 = vmatprep.subr.mxu0 0.0
    %1706 = vmatpush1.msra.mxu0 0.0
    %1707 = vmatprep.subr.mxu0 0.0
    %1708 = vmatpush1.msra.mxu0 0.0
    %1709 = vmatprep.subr.mxu0 0.0
    %1710 = vmatpush1.msra.mxu0 0.0
    %1711 = vmatprep.subr.mxu0 0.0
    %1712 = vmatpush1.msra.mxu0 0.0
    %1713 = vmatprep.subr.mxu0 0.0
    %1714 = vmatpush1.msra.mxu0 0.0
    %1715 = vmatprep.subr.mxu0 0.0
    %1716 = vmatpush1.msra.mxu0 0.0
    %1717 = vmatprep.subr.mxu0 0.0
    %1718 = vmatpush1.msra.mxu0 0.0
    %1719 = vmatprep.subr.mxu0 0.0
    %1720 = vmatpush1.msra.mxu0 0.0
    %1721 = vmatprep.mubr.f32.mxu0 0.0
    %1722 = vmatmul.mubr.f32.gmra.mrb[0].mxu0 %v1655
    %v1723 = vpop.f32.mrb[0].mxu0
    %v1724 = vadd.f32 0.0, %v1723
    %v1725 = vpop.f32.mrb[0].mxu0
    %1726 = vdwg.mxu0
    %v1727 = vsel %vm56, %v1283, %v1288
    %v1728 = vadd.f32 %v1727, %v1724
    %v1729 = vxor.u32 %v1728, 2147483648
    %v1730 = vmul.f32 %v1729, 1.442695
    %v1731 = vpow.pop %v1730
    %v1732 = vadd.f32 %v1731, 1.0
    %v1733 = vrcp.pop %v1732
    %v1734 = vmul.f32 1.0, %v1733
    %v1735 = vadd.f32 %v1724, %v1395
    %1737 = vrot.lane.b32.xlu0 %v1735, 64
    %v1738 = vpop.permute.xlu0 %1737
    %v1740 = vmul.f32 %v1734, %v1738
    %1742 = vrot.lane.b32.xlu0 %v1740, 64
    %v1743 = vpop.permute.xlu0 %1742
    %v1745 = vadd.f32 %v1727, %v1743
    %v1746 = vtanh.pop %v1745
    %1748 = vrot.lane.b32.xlu0 %v1746, 64
    %v1749 = vpop.permute.xlu0 %1748
    %v1751 = vsub.f32 %v1653, %v1749
    %1753 = vrot.lane.b32.xlu0 %v1751, 32
    %v1754 = vpop.permute.xlu0 %1753
    %v1756 = vmul.f32 %v1734, %v1754
    %1758 = vrot.lane.b32.xlu0 %v1756, 32
    %v1759 = vpop.permute.xlu0 %1758
    %v1761 = vadd.f32 %v1746, %v1759
    %1763 = vrot.lane.b32.xlu0 %v1761, 64
    %v1764 = vpop.permute.xlu0 %1763
    %v1766 = vmul.f32 %v61, %v1764
    %v1767 = vsel %vm682, %v1764, %v1653
    %v1769 = vsel %vm85, %v1767, 0
    %1771 = vmatprep.subr.mxu0 0.0
    %1772 = vmatpush1.msra.mxu0 %v1306
    %1773 = vmatprep.subr.mxu0 0.0
    %1774 = vmatpush1.msra.mxu0 %v1307
    %1775 = vmatprep.subr.mxu0 0.0
    %1776 = vmatpush1.msra.mxu0 %v1308
    %1777 = vmatprep.subr.mxu0 0.0
    %1778 = vmatpush1.msra.mxu0 %v1309
    %1779 = vmatprep.subr.mxu0 0.0
    %1780 = vmatpush1.msra.mxu0 0.0
    %1781 = vmatprep.subr.mxu0 0.0
    %1782 = vmatpush1.msra.mxu0 0.0
    %1783 = vmatprep.subr.mxu0 0.0
    %1784 = vmatpush1.msra.mxu0 0.0
    %1785 = vmatprep.subr.mxu0 0.0
    %1786 = vmatpush1.msra.mxu0 0.0
    %1787 = vmatprep.subr.mxu0 0.0
    %1788 = vmatpush1.msra.mxu0 0.0
    %1789 = vmatprep.subr.mxu0 0.0
    %1790 = vmatpush1.msra.mxu0 0.0
    %1791 = vmatprep.subr.mxu0 0.0
    %1792 = vmatpush1.msra.mxu0 0.0
    %1793 = vmatprep.subr.mxu0 0.0
    %1794 = vmatpush1.msra.mxu0 0.0
    %1795 = vmatprep.subr.mxu0 0.0
    %1796 = vmatpush1.msra.mxu0 0.0
    %1797 = vmatprep.subr.mxu0 0.0
    %1798 = vmatpush1.msra.mxu0 0.0
    %1799 = vmatprep.subr.mxu0 0.0
    %1800 = vmatpush1.msra.mxu0 0.0
    %1801 = vmatprep.subr.mxu0 0.0
    %1802 = vmatpush1.msra.mxu0 0.0
    %1803 = vmatprep.subr.mxu0 0.0
    %1804 = vmatpush1.msra.mxu0 0.0
    %1805 = vmatprep.subr.mxu0 0.0
    %1806 = vmatpush1.msra.mxu0 0.0
    %1807 = vmatprep.subr.mxu0 0.0
    %1808 = vmatpush1.msra.mxu0 0.0
    %1809 = vmatprep.subr.mxu0 0.0
    %1810 = vmatpush1.msra.mxu0 0.0
    %1811 = vmatprep.subr.mxu0 0.0
    %1812 = vmatpush1.msra.mxu0 0.0
    %1813 = vmatprep.subr.mxu0 0.0
    %1814 = vmatpush1.msra.mxu0 0.0
    %1815 = vmatprep.subr.mxu0 0.0
    %1816 = vmatpush1.msra.mxu0 0.0
    %1817 = vmatprep.subr.mxu0 0.0
    %1818 = vmatpush1.msra.mxu0 0.0
    %1819 = vmatprep.subr.mxu0 0.0
    %1820 = vmatpush1.msra.mxu0 0.0
    %1821 = vmatprep.subr.mxu0 0.0
    %1822 = vmatpush1.msra.mxu0 0.0
    %1823 = vmatprep.subr.mxu0 0.0
    %1824 = vmatpush1.msra.mxu0 0.0
    %1825 = vmatprep.subr.mxu0 0.0
    %1826 = vmatpush1.msra.mxu0 0.0
    %1827 = vmatprep.subr.mxu0 0.0
    %1828 = vmatpush1.msra.mxu0 0.0
    %1829 = vmatprep.subr.mxu0 0.0
    %1830 = vmatpush1.msra.mxu0 0.0
    %1831 = vmatprep.subr.mxu0 0.0
    %1832 = vmatpush1.msra.mxu0 0.0
    %1833 = vmatprep.subr.mxu0 0.0
    %1834 = vmatpush1.msra.mxu0 0.0
    %1835 = vmatprep.mubr.f32.mxu0 0.0
    %1836 = vmatmul.mubr.f32.gmra.mrb[0].mxu0 %v1769
    %v1837 = vpop.f32.mrb[0].mxu0
    %v1838 = vadd.f32 0.0, %v1837
    %v1839 = vpop.f32.mrb[0].mxu0
    %1840 = vdwg.mxu0
    %v1841 = vsel %vm56, %v1288, %v1283
    %v1842 = vadd.f32 %v1841, %v1838
    %v1843 = vxor.u32 %v1842, 2147483648
    %v1844 = vmul.f32 %v1843, 1.442695
    %v1845 = vpow.pop %v1844
    %v1846 = vadd.f32 %v1845, 1.0
    %v1847 = vrcp.pop %v1846
    %v1848 = vmul.f32 1.0, %v1847
    %v1849 = vadd.f32 %v1838, %v1395
    %1851 = vrot.lane.b32.xlu0 %v1849, 64
    %v1852 = vpop.permute.xlu0 %1851
    %v1854 = vmul.f32 %v1848, %v1852
    %1856 = vrot.lane.b32.xlu0 %v1854, 64
    %v1857 = vpop.permute.xlu0 %1856
    %v1859 = vadd.f32 %v1841, %v1857
    %v1860 = vtanh.pop %v1859
    %1862 = vrot.lane.b32.xlu0 %v1860, 64
    %v1863 = vpop.permute.xlu0 %1862
    %v1865 = vsub.f32 %v1767, %v1863
    %1867 = vrot.lane.b32.xlu0 %v1865, 32
    %v1868 = vpop.permute.xlu0 %1867
    %v1870 = vmul.f32 %v1848, %v1868
    %1872 = vrot.lane.b32.xlu0 %v1870, 32
    %v1873 = vpop.permute.xlu0 %1872
    %v1875 = vadd.f32 %v1860, %v1873
    %1877 = vrot.lane.b32.xlu0 %v1875, 64
    %v1878 = vpop.permute.xlu0 %1877
    %v1880 = vmul.f32 %v62, %v1878
    %v1881 = vsel %vm797, %v1878, %v1767
    %v1883 = vsel %vm85, %v1881, 0
    %1885 = vmatprep.subr.mxu0 0.0
    %1886 = vmatpush1.msra.mxu0 %v1306
    %1887 = vmatprep.subr.mxu0 0.0
    %1888 = vmatpush1.msra.mxu0 %v1307
    %1889 = vmatprep.subr.mxu0 0.0
    %1890 = vmatpush1.msra.mxu0 %v1308
    %1891 = vmatprep.subr.mxu0 0.0
    %1892 = vmatpush1.msra.mxu0 %v1309
    %1893 = vmatprep.subr.mxu0 0.0
    %1894 = vmatpush1.msra.mxu0 0.0
    %1895 = vmatprep.subr.mxu0 0.0
    %1896 = vmatpush1.msra.mxu0 0.0
    %1897 = vmatprep.subr.mxu0 0.0
    %1898 = vmatpush1.msra.mxu0 0.0
    %1899 = vmatprep.subr.mxu0 0.0
    %1900 = vmatpush1.msra.mxu0 0.0
    %1901 = vmatprep.subr.mxu0 0.0
    %1902 = vmatpush1.msra.mxu0 0.0
    %1903 = vmatprep.subr.mxu0 0.0
    %1904 = vmatpush1.msra.mxu0 0.0
    %1905 = vmatprep.subr.mxu0 0.0
    %1906 = vmatpush1.msra.mxu0 0.0
    %1907 = vmatprep.subr.mxu0 0.0
    %1908 = vmatpush1.msra.mxu0 0.0
    %1909 = vmatprep.subr.mxu0 0.0
    %1910 = vmatpush1.msra.mxu0 0.0
    %1911 = vmatprep.subr.mxu0 0.0
    %1912 = vmatpush1.msra.mxu0 0.0
    %1913 = vmatprep.subr.mxu0 0.0
    %1914 = vmatpush1.msra.mxu0 0.0
    %1915 = vmatprep.subr.mxu0 0.0
    %1916 = vmatpush1.msra.mxu0 0.0
    %1917 = vmatprep.subr.mxu0 0.0
    %1918 = vmatpush1.msra.mxu0 0.0
    %1919 = vmatprep.subr.mxu0 0.0
    %1920 = vmatpush1.msra.mxu0 0.0
    %1921 = vmatprep.subr.mxu0 0.0
    %1922 = vmatpush1.msra.mxu0 0.0
    %1923 = vmatprep.subr.mxu0 0.0
    %1924 = vmatpush1.msra.mxu0 0.0
    %1925 = vmatprep.subr.mxu0 0.0
    %1926 = vmatpush1.msra.mxu0 0.0
    %1927 = vmatprep.subr.mxu0 0.0
    %1928 = vmatpush1.msra.mxu0 0.0
    %1929 = vmatprep.subr.mxu0 0.0
    %1930 = vmatpush1.msra.mxu0 0.0
    %1931 = vmatprep.subr.mxu0 0.0
    %1932 = vmatpush1.msra.mxu0 0.0
    %1933 = vmatprep.subr.mxu0 0.0
    %1934 = vmatpush1.msra.mxu0 0.0
    %1935 = vmatprep.subr.mxu0 0.0
    %1936 = vmatpush1.msra.mxu0 0.0
    %1937 = vmatprep.subr.mxu0 0.0
    %1938 = vmatpush1.msra.mxu0 0.0
    %1939 = vmatprep.subr.mxu0 0.0
    %1940 = vmatpush1.msra.mxu0 0.0
    %1941 = vmatprep.subr.mxu0 0.0
    %1942 = vmatpush1.msra.mxu0 0.0
    %1943 = vmatprep.subr.mxu0 0.0
    %1944 = vmatpush1.msra.mxu0 0.0
    %1945 = vmatprep.subr.mxu0 0.0
    %1946 = vmatpush1.msra.mxu0 0.0
    %1947 = vmatprep.subr.mxu0 0.0
    %1948 = vmatpush1.msra.mxu0 0.0
    %1949 = vmatprep.mubr.f32.mxu0 0.0
    %1950 = vmatmul.mubr.f32.gmra.mrb[0].mxu0 %v1883
    %v1951 = vpop.f32.mrb[0].mxu0
    %v1952 = vadd.f32 0.0, %v1951
    %v1953 = vpop.f32.mrb[0].mxu0
    %1954 = vdwg.mxu0
    %v1955 = vsel %vm56, %v1293, %v1278
    %v1956 = vadd.f32 %v1955, %v1952
    %v1957 = vxor.u32 %v1956, 2147483648
    %v1958 = vmul.f32 %v1957, 1.442695
    %v1959 = vpow.pop %v1958
    %v1960 = vadd.f32 %v1959, 1.0
    %v1961 = vrcp.pop %v1960
    %v1962 = vmul.f32 1.0, %v1961
    %v1963 = vadd.f32 %v1952, %v1395
    %1965 = vrot.lane.b32.xlu0 %v1963, 64
    %v1966 = vpop.permute.xlu0 %1965
    %v1968 = vmul.f32 %v1962, %v1966
    %1970 = vrot.lane.b32.xlu0 %v1968, 64
    %v1971 = vpop.permute.xlu0 %1970
    %v1973 = vadd.f32 %v1955, %v1971
    %v1974 = vtanh.pop %v1973
    %1976 = vrot.lane.b32.xlu0 %v1974, 64
    %v1977 = vpop.permute.xlu0 %1976
    %v1979 = vsub.f32 %v1881, %v1977
    %1981 = vrot.lane.b32.xlu0 %v1979, 32
    %v1982 = vpop.permute.xlu0 %1981
    %v1984 = vmul.f32 %v1962, %v1982
    %1986 = vrot.lane.b32.xlu0 %v1984, 32
    %v1987 = vpop.permute.xlu0 %1986
    %v1989 = vadd.f32 %v1974, %v1987
    %1991 = vrot.lane.b32.xlu0 %v1989, 64
    %v1992 = vpop.permute.xlu0 %1991
    %v1994 = vmul.f32 %v63, %v1992
    %v1995 = vsel %vm912, %v1992, %v1881
    %v1997 = vsel %vm85, %v1995, 0
    %1999 = vmatprep.subr.mxu0 0.0
    %2000 = vmatpush1.msra.mxu0 %v1306
    %2001 = vmatprep.subr.mxu0 0.0
    %2002 = vmatpush1.msra.mxu0 %v1307
    %2003 = vmatprep.subr.mxu0 0.0
    %2004 = vmatpush1.msra.mxu0 %v1308
    %2005 = vmatprep.subr.mxu0 0.0
    %2006 = vmatpush1.msra.mxu0 %v1309
    %2007 = vmatprep.subr.mxu0 0.0
    %2008 = vmatpush1.msra.mxu0 0.0
    %2009 = vmatprep.subr.mxu0 0.0
    %2010 = vmatpush1.msra.mxu0 0.0
    %2011 = vmatprep.subr.mxu0 0.0
    %2012 = vmatpush1.msra.mxu0 0.0
    %2013 = vmatprep.subr.mxu0 0.0
    %2014 = vmatpush1.msra.mxu0 0.0
    %2015 = vmatprep.subr.mxu0 0.0
    %2016 = vmatpush1.msra.mxu0 0.0
    %2017 = vmatprep.subr.mxu0 0.0
    %2018 = vmatpush1.msra.mxu0 0.0
    %2019 = vmatprep.subr.mxu0 0.0
    %2020 = vmatpush1.msra.mxu0 0.0
    %2021 = vmatprep.subr.mxu0 0.0
    %2022 = vmatpush1.msra.mxu0 0.0
    %2023 = vmatprep.subr.mxu0 0.0
    %2024 = vmatpush1.msra.mxu0 0.0
    %2025 = vmatprep.subr.mxu0 0.0
    %2026 = vmatpush1.msra.mxu0 0.0
    %2027 = vmatprep.subr.mxu0 0.0
    %2028 = vmatpush1.msra.mxu0 0.0
    %2029 = vmatprep.subr.mxu0 0.0
    %2030 = vmatpush1.msra.mxu0 0.0
    %2031 = vmatprep.subr.mxu0 0.0
    %2032 = vmatpush1.msra.mxu0 0.0
    %2033 = vmatprep.subr.mxu0 0.0
    %2034 = vmatpush1.msra.mxu0 0.0
    %2035 = vmatprep.subr.mxu0 0.0
    %2036 = vmatpush1.msra.mxu0 0.0
    %2037 = vmatprep.subr.mxu0 0.0
    %2038 = vmatpush1.msra.mxu0 0.0
    %2039 = vmatprep.subr.mxu0 0.0
    %2040 = vmatpush1.msra.mxu0 0.0
    %2041 = vmatprep.subr.mxu0 0.0
    %2042 = vmatpush1.msra.mxu0 0.0
    %2043 = vmatprep.subr.mxu0 0.0
    %2044 = vmatpush1.msra.mxu0 0.0
    %2045 = vmatprep.subr.mxu0 0.0
    %2046 = vmatpush1.msra.mxu0 0.0
    %2047 = vmatprep.subr.mxu0 0.0
    %2048 = vmatpush1.msra.mxu0 0.0
    %2049 = vmatprep.subr.mxu0 0.0
    %2050 = vmatpush1.msra.mxu0 0.0
    %2051 = vmatprep.subr.mxu0 0.0
    %2052 = vmatpush1.msra.mxu0 0.0
    %2053 = vmatprep.subr.mxu0 0.0
    %2054 = vmatpush1.msra.mxu0 0.0
    %2055 = vmatprep.subr.mxu0 0.0
    %2056 = vmatpush1.msra.mxu0 0.0
    %2057 = vmatprep.subr.mxu0 0.0
    %2058 = vmatpush1.msra.mxu0 0.0
    %2059 = vmatprep.subr.mxu0 0.0
    %2060 = vmatpush1.msra.mxu0 0.0
    %2061 = vmatprep.subr.mxu0 0.0
    %2062 = vmatpush1.msra.mxu0 0.0
    %2063 = vmatprep.mubr.f32.mxu0 0.0
    %2064 = vmatmul.mubr.f32.gmra.mrb[0].mxu0 %v1997
    %v2065 = vpop.f32.mrb[0].mxu0
    %v2066 = vadd.f32 0.0, %v2065
    %v2067 = vpop.f32.mrb[0].mxu0
    %2068 = vdwg.mxu0
    %v2069 = vsel %vm56, %v1298, %v1273
    %v2070 = vadd.f32 %v2069, %v2066
    %v2071 = vxor.u32 %v2070, 2147483648
    %v2072 = vmul.f32 %v2071, 1.442695
    %v2073 = vpow.pop %v2072
    %v2074 = vadd.f32 %v2073, 1.0
    %v2075 = vrcp.pop %v2074
    %v2076 = vmul.f32 1.0, %v2075
    %v2077 = vadd.f32 %v2066, %v1395
    %2079 = vrot.lane.b32.xlu0 %v2077, 64
    %v2080 = vpop.permute.xlu0 %2079
    %v2082 = vmul.f32 %v2076, %v2080
    %2084 = vrot.lane.b32.xlu0 %v2082, 64
    %v2085 = vpop.permute.xlu0 %2084
    %v2087 = vadd.f32 %v2069, %v2085
    %v2088 = vtanh.pop %v2087
    %2090 = vrot.lane.b32.xlu0 %v2088, 64
    %v2091 = vpop.permute.xlu0 %2090
    %v2093 = vsub.f32 %v1995, %v2091
    %2095 = vrot.lane.b32.xlu0 %v2093, 32
    %v2096 = vpop.permute.xlu0 %2095
    %v2098 = vmul.f32 %v2076, %v2096
    %2100 = vrot.lane.b32.xlu0 %v2098, 32
    %v2101 = vpop.permute.xlu0 %2100
    %v2103 = vadd.f32 %v2088, %v2101
    %2105 = vrot.lane.b32.xlu0 %v2103, 64
    %v2106 = vpop.permute.xlu0 %2105
    %v2108 = vmul.f32 %v64, %v2106
    %v2109 = vsel %vm1027, %v2106, %v1995
    %v2111 = vsel %vm85, %v2109, 0
    %2113 = vmatprep.subr.mxu0 0.0
    %2114 = vmatpush1.msra.mxu0 %v1306
    %2115 = vmatprep.subr.mxu0 0.0
    %2116 = vmatpush1.msra.mxu0 %v1307
    %2117 = vmatprep.subr.mxu0 0.0
    %2118 = vmatpush1.msra.mxu0 %v1308
    %2119 = vmatprep.subr.mxu0 0.0
    %2120 = vmatpush1.msra.mxu0 %v1309
    %2121 = vmatprep.subr.mxu0 0.0
    %2122 = vmatpush1.msra.mxu0 0.0
    %2123 = vmatprep.subr.mxu0 0.0
    %2124 = vmatpush1.msra.mxu0 0.0
    %2125 = vmatprep.subr.mxu0 0.0
    %2126 = vmatpush1.msra.mxu0 0.0
    %2127 = vmatprep.subr.mxu0 0.0
    %2128 = vmatpush1.msra.mxu0 0.0
    %2129 = vmatprep.subr.mxu0 0.0
    %2130 = vmatpush1.msra.mxu0 0.0
    %2131 = vmatprep.subr.mxu0 0.0
    %2132 = vmatpush1.msra.mxu0 0.0
    %2133 = vmatprep.subr.mxu0 0.0
    %2134 = vmatpush1.msra.mxu0 0.0
    %2135 = vmatprep.subr.mxu0 0.0
    %2136 = vmatpush1.msra.mxu0 0.0
    %2137 = vmatprep.subr.mxu0 0.0
    %2138 = vmatpush1.msra.mxu0 0.0
    %2139 = vmatprep.subr.mxu0 0.0
    %2140 = vmatpush1.msra.mxu0 0.0
    %2141 = vmatprep.subr.mxu0 0.0
    %2142 = vmatpush1.msra.mxu0 0.0
    %2143 = vmatprep.subr.mxu0 0.0
    %2144 = vmatpush1.msra.mxu0 0.0
    %2145 = vmatprep.subr.mxu0 0.0
    %2146 = vmatpush1.msra.mxu0 0.0
    %2147 = vmatprep.subr.mxu0 0.0
    %2148 = vmatpush1.msra.mxu0 0.0
    %2149 = vmatprep.subr.mxu0 0.0
    %2150 = vmatpush1.msra.mxu0 0.0
    %2151 = vmatprep.subr.mxu0 0.0
    %2152 = vmatpush1.msra.mxu0 0.0
    %2153 = vmatprep.subr.mxu0 0.0
    %2154 = vmatpush1.msra.mxu0 0.0
    %2155 = vmatprep.subr.mxu0 0.0
    %2156 = vmatpush1.msra.mxu0 0.0
    %2157 = vmatprep.subr.mxu0 0.0
    %2158 = vmatpush1.msra.mxu0 0.0
    %2159 = vmatprep.subr.mxu0 0.0
    %2160 = vmatpush1.msra.mxu0 0.0
    %2161 = vmatprep.subr.mxu0 0.0
    %2162 = vmatpush1.msra.mxu0 0.0
    %2163 = vmatprep.subr.mxu0 0.0
    %2164 = vmatpush1.msra.mxu0 0.0
    %2165 = vmatprep.subr.mxu0 0.0
    %2166 = vmatpush1.msra.mxu0 0.0
    %2167 = vmatprep.subr.mxu0 0.0
    %2168 = vmatpush1.msra.mxu0 0.0
    %2169 = vmatprep.subr.mxu0 0.0
    %2170 = vmatpush1.msra.mxu0 0.0
    %2171 = vmatprep.subr.mxu0 0.0
    %2172 = vmatpush1.msra.mxu0 0.0
    %2173 = vmatprep.subr.mxu0 0.0
    %2174 = vmatpush1.msra.mxu0 0.0
    %2175 = vmatprep.subr.mxu0 0.0
    %2176 = vmatpush1.msra.mxu0 0.0
    %2177 = vmatprep.mubr.f32.mxu0 0.0
    %2178 = vmatmul.mubr.f32.gmra.mrb[0].mxu0 %v2111
    %v2179 = vpop.f32.mrb[0].mxu0
    %v2180 = vadd.f32 0.0, %v2179
    %v2181 = vpop.f32.mrb[0].mxu0
    %2182 = vdwg.mxu0
    %v2183 = vsel %vm56, %v1303, %v1268
    %v2184 = vadd.f32 %v2183, %v2180
    %v2185 = vxor.u32 %v2184, 2147483648
    %v2186 = vmul.f32 %v2185, 1.442695
    %v2187 = vpow.pop %v2186
    %v2188 = vadd.f32 %v2187, 1.0
    %v2189 = vrcp.pop %v2188
    %v2190 = vmul.f32 1.0, %v2189
    %v2191 = vadd.f32 %v2180, %v1395
    %2193 = vrot.lane.b32.xlu0 %v2191, 64
    %v2194 = vpop.permute.xlu0 %2193
    %v2196 = vmul.f32 %v2190, %v2194
    %2198 = vrot.lane.b32.xlu0 %v2196, 64
    %v2199 = vpop.permute.xlu0 %2198
    %v2201 = vadd.f32 %v2183, %v2199
    %v2202 = vtanh.pop %v2201
    %2204 = vrot.lane.b32.xlu0 %v2202, 64
    %v2205 = vpop.permute.xlu0 %2204
    %v2207 = vsub.f32 %v2109, %v2205
    %2209 = vrot.lane.b32.xlu0 %v2207, 32
    %v2210 = vpop.permute.xlu0 %2209
    %v2212 = vmul.f32 %v2190, %v2210
    %2214 = vrot.lane.b32.xlu0 %v2212, 32
    %v2215 = vpop.permute.xlu0 %2214
    %v2217 = vadd.f32 %v2202, %v2215
    %2219 = vrot.lane.b32.xlu0 %v2217, 64
    %v2220 = vpop.permute.xlu0 %2219
    %v2222 = vmul.f32 %v65, %v2220
    %v2223 = vsel %vm57, %v1424, %v2222
    %2224 = vst.msk [vmem:[#allocation2] sm:$0xff] %vm85, %v2223
    %v2225 = vsel %vm57, %v1538, %v2108
    %2226 = vst.msk [vmem:[#allocation2 + $0x8] sm:$0xff] %vm85, %v2225
    %v2227 = vsel %vm57, %v1652, %v1994
    %2228 = vst.msk [vmem:[#allocation2 + $0x10] sm:$0xff] %vm85, %v2227
    %v2229 = vsel %vm57, %v1766, %v1880
    %2230 = vst.msk [vmem:[#allocation2 + $0x18] sm:$0xff] %vm85, %v2229
    %v2231 = vsel %vm57, %v1880, %v1766
    %2232 = vst.msk [vmem:[#allocation2 + $0x20] sm:$0xff] %vm85, %v2231
    %v2233 = vsel %vm57, %v1994, %v1652
    %2234 = vst.msk [vmem:[#allocation2 + $0x28] sm:$0xff] %vm85, %v2233
    %v2235 = vsel %vm57, %v2108, %v1538
    %2236 = vst.msk [vmem:[#allocation2 + $0x30] sm:$0xff] %vm85, %v2235
    %v2237 = vsel %vm57, %v2222, %v1424
    %2238 = vst.msk [vmem:[#allocation2 + $0x38] sm:$0xff] %vm85, %v2237
    %v2239 = vld [vmem:[#allocation2] sm:$0xff]
    %v2240 = vld [vmem:[#allocation2 + $0x8] sm:$0xff]
    %v2241 = vld [vmem:[#allocation2 + $0x10] sm:$0xff]
    %v2242 = vld [vmem:[#allocation2 + $0x18] sm:$0xff]
    %v2243 = vld [vmem:[#allocation2 + $0x20] sm:$0xff]
    %v2244 = vld [vmem:[#allocation2 + $0x28] sm:$0xff]
    %v2245 = vld [vmem:[#allocation2 + $0x30] sm:$0xff]
    %v2246 = vld [vmem:[#allocation2 + $0x38] sm:$0xff]
    %v2247 = vld [vmem:[%s10] sm:$0xff]
    %v2248 = vld [vmem:[%s10 + $0x8] sm:$0xff]
    %v2249 = vld [vmem:[%s10 + $0x10] sm:$0xff]
    %v2250 = vld [vmem:[%s10 + $0x18] sm:$0xff]
    %v2251 = vld [vmem:[%s11] sm:$0x1]
    %v2253 = vlaneseq
    %v2254 = vshrl.u32 %v2253, 7
    %v2255 = vsub.s32 0, %v2254
    %v2256 = vrot.slane %v2251, %v2255
    %v2259 = vsel %vm85, %v2239, 0
    %v2262 = vsel %vm85, %v2240, 0
    %v2265 = vsel %vm85, %v2241, 0
    %v2268 = vsel %vm85, %v2242, 0
    %v2271 = vsel %vm85, %v2243, 0
    %v2274 = vsel %vm85, %v2244, 0
    %v2277 = vsel %vm85, %v2245, 0
    %v2280 = vsel %vm85, %v2246, 0
    %2282 = vmatprep.subr.mxu0 0.0
    %2283 = vmatpush1.msra.mxu0 %v2247
    %2284 = vmatprep.subr.mxu0 0.0
    %2285 = vmatpush1.msra.mxu0 %v2248
    %2286 = vmatprep.subr.mxu0 0.0
    %2287 = vmatpush1.msra.mxu0 %v2249
    %2288 = vmatprep.subr.mxu0 0.0
    %2289 = vmatpush1.msra.mxu0 %v2250
    %2290 = vmatprep.subr.mxu0 0.0
    %2291 = vmatpush1.msra.mxu0 0.0
    %2292 = vmatprep.subr.mxu0 0.0
    %2293 = vmatpush1.msra.mxu0 0.0
    %2294 = vmatprep.subr.mxu0 0.0
    %2295 = vmatpush1.msra.mxu0 0.0
    %2296 = vmatprep.subr.mxu0 0.0
    %2297 = vmatpush1.msra.mxu0 0.0
    %2298 = vmatprep.subr.mxu0 0.0
    %2299 = vmatpush1.msra.mxu0 0.0
    %2300 = vmatprep.subr.mxu0 0.0
    %2301 = vmatpush1.msra.mxu0 0.0
    %2302 = vmatprep.subr.mxu0 0.0
    %2303 = vmatpush1.msra.mxu0 0.0
    %2304 = vmatprep.subr.mxu0 0.0
    %2305 = vmatpush1.msra.mxu0 0.0
    %2306 = vmatprep.subr.mxu0 0.0
    %2307 = vmatpush1.msra.mxu0 0.0
    %2308 = vmatprep.subr.mxu0 0.0
    %2309 = vmatpush1.msra.mxu0 0.0
    %2310 = vmatprep.subr.mxu0 0.0
    %2311 = vmatpush1.msra.mxu0 0.0
    %2312 = vmatprep.subr.mxu0 0.0
    %2313 = vmatpush1.msra.mxu0 0.0
    %2314 = vmatprep.subr.mxu0 0.0
    %2315 = vmatpush1.msra.mxu0 0.0
    %2316 = vmatprep.subr.mxu0 0.0
    %2317 = vmatpush1.msra.mxu0 0.0
    %2318 = vmatprep.subr.mxu0 0.0
    %2319 = vmatpush1.msra.mxu0 0.0
    %2320 = vmatprep.subr.mxu0 0.0
    %2321 = vmatpush1.msra.mxu0 0.0
    %2322 = vmatprep.subr.mxu0 0.0
    %2323 = vmatpush1.msra.mxu0 0.0
    %2324 = vmatprep.subr.mxu0 0.0
    %2325 = vmatpush1.msra.mxu0 0.0
    %2326 = vmatprep.subr.mxu0 0.0
    %2327 = vmatpush1.msra.mxu0 0.0
    %2328 = vmatprep.subr.mxu0 0.0
    %2329 = vmatpush1.msra.mxu0 0.0
    %2330 = vmatprep.subr.mxu0 0.0
    %2331 = vmatpush1.msra.mxu0 0.0
    %2332 = vmatprep.subr.mxu0 0.0
    %2333 = vmatpush1.msra.mxu0 0.0
    %2334 = vmatprep.subr.mxu0 0.0
    %2335 = vmatpush1.msra.mxu0 0.0
    %2336 = vmatprep.subr.mxu0 0.0
    %2337 = vmatpush1.msra.mxu0 0.0
    %2338 = vmatprep.subr.mxu0 0.0
    %2339 = vmatpush1.msra.mxu0 0.0
    %2340 = vmatprep.subr.mxu0 0.0
    %2341 = vmatpush1.msra.mxu0 0.0
    %2342 = vmatprep.subr.mxu0 0.0
    %2343 = vmatpush1.msra.mxu0 0.0
    %2344 = vmatprep.subr.mxu0 0.0
    %2345 = vmatpush1.msra.mxu0 0.0
    %2346 = vmatprep.mubr.f32.mxu0 0.0
    %2347 = vmatmul.mubr.f32.gmra.mrb[0].mxu0 %v2259
    %v2348 = vpop.f32.mrb[0].mxu0
    %v2349 = vadd.f32 %v2256, %v2348
    %v2350 = vpop.f32.mrb[0].mxu0
    %2351 = vmatprep.mubr.f32.mxu0 0.0
    %2352 = vmatmul.mubr.f32.gmra.mrb[0].mxu0 %v2262
    %v2353 = vpop.f32.mrb[0].mxu0
    %v2354 = vadd.f32 %v2256, %v2353
    %v2355 = vpop.f32.mrb[0].mxu0
    %2356 = vmatprep.mubr.f32.mxu0 0.0
    %2357 = vmatmul.mubr.f32.gmra.mrb[0].mxu0 %v2265
    %v2358 = vpop.f32.mrb[0].mxu0
    %v2359 = vadd.f32 %v2256, %v2358
    %v2360 = vpop.f32.mrb[0].mxu0
    %2361 = vmatprep.mubr.f32.mxu0 0.0
    %2362 = vmatmul.mubr.f32.gmra.mrb[0].mxu0 %v2268
    %v2363 = vpop.f32.mrb[0].mxu0
    %v2364 = vadd.f32 %v2256, %v2363
    %v2365 = vpop.f32.mrb[0].mxu0
    %2366 = vmatprep.mubr.f32.mxu0 0.0
    %2367 = vmatmul.mubr.f32.gmra.mrb[0].mxu0 %v2271
    %v2368 = vpop.f32.mrb[0].mxu0
    %v2369 = vadd.f32 %v2256, %v2368
    %v2370 = vpop.f32.mrb[0].mxu0
    %2371 = vmatprep.mubr.f32.mxu0 0.0
    %2372 = vmatmul.mubr.f32.gmra.mrb[0].mxu0 %v2274
    %v2373 = vpop.f32.mrb[0].mxu0
    %v2374 = vadd.f32 %v2256, %v2373
    %v2375 = vpop.f32.mrb[0].mxu0
    %2376 = vmatprep.mubr.f32.mxu0 0.0
    %2377 = vmatmul.mubr.f32.gmra.mrb[0].mxu0 %v2277
    %v2378 = vpop.f32.mrb[0].mxu0
    %v2379 = vadd.f32 %v2256, %v2378
    %v2380 = vpop.f32.mrb[0].mxu0
    %2381 = vmatprep.mubr.f32.mxu0 0.0
    %2382 = vmatmul.mubr.f32.gmra.mrb[0].mxu0 %v2280
    %v2383 = vpop.f32.mrb[0].mxu0
    %v2384 = vadd.f32 %v2256, %v2383
    %v2385 = vpop.f32.mrb[0].mxu0
    %2386 = vdwg.mxu0
    %2387 = vst [vmem:[#allocation3] sm:$0xff] %v2349
    %2388 = vst [vmem:[#allocation3 + $0x8] sm:$0xff] %v2354
    %2389 = vst [vmem:[#allocation3 + $0x10] sm:$0xff] %v2359
    %2390 = vst [vmem:[#allocation3 + $0x18] sm:$0xff] %v2364
    %2391 = vst [vmem:[#allocation3 + $0x20] sm:$0xff] %v2369
    %2392 = vst [vmem:[#allocation3 + $0x28] sm:$0xff] %v2374
    %2393 = vst [vmem:[#allocation3 + $0x30] sm:$0xff] %v2379
    %2394 = vst [vmem:[#allocation3 + $0x38] sm:$0xff] %v2384
    // Predicated region
    $region50: #{tpu_custom_call.1} parent=1 // pred_check
      _
    $region51: #{tpu_custom_call.1} parent=1 // pred_check_branch
      %2396 = sbr.rel (0) target = $region53
    $region52: #{tpu_custom_call.1} parent=1 // pred_region
      %s2398 = ssub.s32 1024, 1024
      %2399 = vsyncadd [#allocation4], %s2398
      %s2400 = sshll.u32 [#allocation3], 4
      %s2401 = int_to_ptr.vmem [resolvable:$true] %s2400
      %2406 = dma.vmem_to_hbm [thread:$0]  %s2401, 1024, %s12, [#allocation4], 128, 128, 8
    $region53: #{tpu_custom_call.1} parent=1 // pred_fallthru
      _
    // Predicated region
    $region54: #{tpu_custom_call.1} parent=1 // pred_check
      _
    $region55: #{tpu_custom_call.1} parent=1 // pred_check_branch
      %2408 = sbr.rel (0) target = $region57
    $region56: #{tpu_custom_call.1} parent=1 // pred_region
      %2409 = dma.done [#allocation4], 1024
    $region57: #{tpu_custom_call.1} parent=1 // pred_fallthru
      _
    %2410 = vsyncpa [#allocation4], 1

</llo_original>
